<compile_context>
chip_gen: v5e
topology: v5e:2x2
jax: 0.10.0
libtpu: 0.0.40
codegen_flags: <defaults>
</compile_context>

<pallas_src>
import functools

import numpy as np
import jax
import jax.numpy as jnp
from jax import lax
from jax.experimental import pallas as pl
from jax.experimental.pallas import tpu as pltpu

# ----------------------------- configuration -------------------------------
N_IMAGES = 16      # graph nodes (batch of images)
C_IN = 3           # RGB
SPATIAL = 32       # small spatial size for the demo
FEAT_DIM = 256     # pretrained_output_dim (2048 in the torch module; shrunk, lane-aligned)
HID_DIM = 256      # gcn_hidden_dim
OUT_DIM = 128      # gcn_output_dim
K_NN = 10
BN_EPS = 1e-5
L2_EPS = 1e-12

VMEM_SPEC = pl.BlockSpec(memory_space=pltpu.MemorySpace.VMEM)


# ------------------------------ fused Pallas kernel -------------------------
def fused_forward_kernel(img_ref, wstem_ref, bias_ref, w_ref, out_ref, *, n_nodes, k):
    """Entire PretrainedGCNKNN forward in one kernel.

    img_ref:   (N, C, H*W) f32 images (NCHW flattened spatially)
    wstem_ref: (C, FEAT_DIM) f32 stem projection
    bias_ref:  (8, FEAT_DIM) f32 packed rows:
               [b_stem, gb1', gb2', gb3'(pad), sb1, sb2, sb3, 0]   (BN folded into gb*)
    w_ref:     (6, FEAT_DIM, FEAT_DIM) bf16 packed (in, out) weights:
               [gw1', gw2', gw3'(zero-pad cols), sw1, sw2, sw3(zero-pad rows)]
    out_ref:   (N, FEAT_DIM) f32 L2-normalized node embeddings
    """
    biases = bias_ref[...]                                              # (8, FEAT)

    # ----- stem: global-average-pool + Linear + L2 normalize -----
    # TODO(synk): torchvision resnet152(IMAGENET1K_V2) backbone cannot be reproduced
    # in-script; replaced by a deterministic global-average-pool + Linear stem.
    pooled = jnp.mean(img_ref[...], axis=-1)                            # (N, C)
    f = jnp.dot(pooled, wstem_ref[...],
                preferred_element_type=jnp.float32) + biases[0:1, :]
    f = f * lax.rsqrt(jnp.maximum(jnp.sum(f * f, axis=-1, keepdims=True),
                                  L2_EPS * L2_EPS))                     # F.normalize(p=2)

    # ----- kNN graph + gcn_norm, built entirely in VMEM -----
    # cosine similarity; dot_general contracting dim 1 of both avoids an explicit .T
    sim = lax.dot_general(f, f, (((1,), (1,)), ((), ())),
                          preferred_element_type=jnp.float32)           # (N, N) symmetric
    rows = lax.broadcasted_iota(jnp.int32, (n_nodes, n_nodes), 0)
    cols = lax.broadcasted_iota(jnp.int32, (n_nodes, n_nodes), 1)
    diag = rows == cols
    rows_f = rows.astype(jnp.float32)
    sentinel = jnp.float32(n_nodes)

    # Diagonal forced below any cosine value so 'self' is never a neighbor
    # (mirrors torch dropping the nearest == self column).
    work = jnp.where(diag, -2.0, sim)
    # Because sim is symmetric, selecting the k largest entries per COLUMN s
    # directly yields E^T[t, s] = [t in knn(s)]: the (target, source) adjacency
    # needed for aggregation — no transpose required.
    et = jnp.zeros((n_nodes, n_nodes), jnp.float32)
    for _ in range(k):
        colmax = jnp.max(work, axis=0, keepdims=True)                   # (1, N)
        first = jnp.min(jnp.where(work >= colmax, rows_f, sentinel),
                        axis=0, keepdims=True)                          # tie-break: smallest idx
        sel = rows_f == first                                           # one pick per column
        et = jnp.where(sel, 1.0, et)
        work = jnp.where(sel, -3.0, work)
    et = jnp.where(diag, 1.0, et)                                       # add_remaining_self_loops
    deg = jnp.sum(et, axis=-1, keepdims=True)                           # (N,1) in-degree at target
    dinv = lax.rsqrt(deg)                                               # deg >= 1 (self loop)
    a_half = et * dinv                                                  # target-side D^{-1/2}

    def gcn(x, wi, bi):
        # GCNConv with BatchNorm(eval) pre-folded into weight/bias.
        xw = jnp.dot(x.astype(jnp.bfloat16), w_ref[wi],
                     preferred_element_type=jnp.float32)                # bf16 MXU, f32 acc
        agg = jnp.dot(a_half, dinv * xw,
                      preferred_element_type=jnp.float32)               # D^-1/2 A^T D^-1/2 (XW)
        return agg + biases[bi:bi + 1, :]

    def lin(x, wi, bi):
        return jnp.dot(x.astype(jnp.bfloat16), w_ref[wi],
                       preferred_element_type=jnp.float32) + biases[bi:bi + 1, :]

    # ----- 3 GCN blocks (dropout = identity: module runs in eval mode) -----
    h1 = jnp.maximum(gcn(f, 0, 1), 0.0)          # relu(bn1(gcn1(f)))
    x1 = lin(h1, 3, 4) + f
    h2 = jnp.maximum(gcn(x1, 1, 2), 0.0)         # relu(bn2(gcn2(x1)))
    x2 = lin(h2, 4, 5) + f
    h3 = gcn(x2, 2, 3)                           # bn3(gcn3(x2)), no relu
    x3 = lin(h3, 5, 6) + f

    out_ref[...] = x3 * lax.rsqrt(
        jnp.maximum(jnp.sum(x3 * x3, axis=-1, keepdims=True), L2_EPS * L2_EPS))


# ------------------------------ JAX wrapper ----------------------------------
@jax.jit
def pretrained_gcn_knn_forward(images, prep):
    n, c, h, w = images.shape
    k = min(K_NN, n - 1)
    img = images.reshape(n, c, h * w)            # free (metadata-only) reshape
    return pl.pallas_call(
        functools.partial(fused_forward_kernel, n_nodes=n, k=k),
        out_shape=jax.ShapeDtypeStruct((n, FEAT_DIM), jnp.float32),
        in_specs=[VMEM_SPEC, VMEM_SPEC, VMEM_SPEC, VMEM_SPEC],
        out_specs=VMEM_SPEC,
    )(img, prep['w_stem'], prep['bias_pack'], prep['w_pack'])


# ------------------------- deterministic parameters --------------------------
def init_params(key):
    """Raw, torch-faithful f32 parameters (weights stored pre-transposed (in, out))."""
    ks = jax.random.split(key, 14)

    def dense(kk, fan_in, fan_out):
        return (jax.random.normal(kk, (fan_in, fan_out), jnp.float32) /
                np.sqrt(fan_in)).astype(jnp.float32)

    def bias(kk, dim):
        return (0.01 * jax.random.normal(kk, (dim,), jnp.float32)).astype(jnp.float32)

    p = {}
    p['w_stem'], p['b_stem'] = dense(ks[0], C_IN, FEAT_DIM), bias(ks[1], FEAT_DIM)
    p['gw1'], p['gb1'] = dense(ks[2], FEAT_DIM, HID_DIM), bias(ks[3], HID_DIM)
    p['gw2'], p['gb2'] = dense(ks[4], HID_DIM, HID_DIM), bias(ks[5], HID_DIM)
    p['gw3'], p['gb3'] = dense(ks[6], HID_DIM, OUT_DIM), bias(ks[7], OUT_DIM)
    p['sw1'], p['sb1'] = dense(ks[8], HID_DIM, FEAT_DIM), bias(ks[9], FEAT_DIM)
    p['sw2'], p['sb2'] = dense(ks[10], HID_DIM, FEAT_DIM), bias(ks[11], FEAT_DIM)
    p['sw3'], p['sb3'] = dense(ks[12], OUT_DIM, FEAT_DIM), bias(ks[13], FEAT_DIM)
    # BatchNorm1d eval params (nn defaults): gamma=1, beta=0, mean=0, var=1
    for name, dim in (('bn1', HID_DIM), ('bn2', HID_DIM), ('bn3', OUT_DIM)):
        p[name + '_gamma'] = jnp.ones((dim,), jnp.float32)
        p[name + '_beta'] = jnp.zeros((dim,), jnp.float32)
        p[name + '_mean'] = jnp.zeros((dim,), jnp.float32)
        p[name + '_var'] = jnp.ones((dim,), jnp.float32)
    return p


def prepare_params(p):
    """Fold BN into GCN weights/biases, pack weights (bf16) and biases (f32)."""
    assert HID_DIM == FEAT_DIM, "uniform weight packing assumes gcn_hidden_dim == feature dim"

    def fold(name):
        sc = p[name + '_gamma'] / jnp.sqrt(p[name + '_var'] + BN_EPS)
        sh = p[name + '_beta'] - p[name + '_mean'] * sc
        return sc, sh

    sc1, sh1 = fold('bn1')
    sc2, sh2 = fold('bn2')
    sc3, sh3 = fold('bn3')
    gw1, gb1 = p['gw1'] * sc1[None, :], p['gb1'] * sc1 + sh1
    gw2, gb2 = p['gw2'] * sc2[None, :], p['gb2'] * sc2 + sh2
    gw3, gb3 = p['gw3'] * sc3[None, :], p['gb3'] * sc3 + sh3

    pad = FEAT_DIM - OUT_DIM
    gw3 = jnp.pad(gw3, ((0, 0), (0, pad)))        # zero output columns: exact
    gb3 = jnp.pad(gb3, ((0, pad),))
    sw3 = jnp.pad(p['sw3'], ((0, pad), (0, 0)))   # zero input rows: exact

    w_pack = jnp.stack([gw1, gw2, gw3, p['sw1'], p['sw2'], sw3]).astype(jnp.bfloat16)
    bias_pack = jnp.stack([p['b_stem'], gb1, gb2, gb3,
                           p['sb1'], p['sb2'], p['sb3'],
                           jnp.zeros((FEAT_DIM,), jnp.float32)])
    return {'w_stem': p['w_stem'], 'bias_pack': bias_pack, 'w_pack': w_pack}


# ----------------------------- pure-JAX reference ----------------------------
def build_gcn_adjacency(negsim, k):
    """custom_knn_graph + PyG gcn_norm, as a dense (target, source) matrix."""
    n = negsim.shape[0]
    order = jnp.argsort(negsim, axis=-1)          # ascending; column 0 == self
    nbrs = order[:, 1:k + 1]
    src = jnp.repeat(jnp.arange(n), k)
    tgt = nbrs.reshape(-1)
    adj = jnp.zeros((n, n), jnp.float32).at[src, tgt].set(1.0)
    adj = adj.at[jnp.arange(n), jnp.arange(n)].set(1.0)
    deg = adj.sum(axis=0)
    dinv = jnp.where(deg > 0, lax.rsqrt(deg), 0.0)
    return (adj * dinv[:, None] * dinv[None, :]).T


def reference_forward(images, p, k):
    n, c, h, w = images.shape
    pooled = images.reshape(n, c, h * w).mean(-1)
    f = pooled @ p['w_stem'] + p['b_stem']
    f = f / jnp.maximum(jnp.linalg.norm(f, axis=1, keepdims=True), L2_EPS)
    negsim = jnp.where(jnp.eye(n, dtype=bool), -2.0, -(f @ f.T))
    adj = build_gcn_adjacency(negsim, k)

    def bn(x, name):
        sc = p[name + '_gamma'] / jnp.sqrt(p[name + '_var'] + BN_EPS)
        sh = p[name + '_beta'] - p[name + '_mean'] * sc
        return x * sc + sh

    def gcn(x, w, b):
        return adj @ (x @ w) + b

    h1 = jnp.maximum(bn(gcn(f, p['gw1'], p['gb1']), 'bn1'), 0.0)
    x1 = h1 @ p['sw1'] + p['sb1'] + f
    h2 = jnp.maximum(bn(gcn(x1, p['gw2'], p['gb2']), 'bn2'), 0.0)
    x2 = h2 @ p['sw2'] + p['sb2'] + f
    h3 = bn(gcn(x2, p['gw3'], p['gb3']), 'bn3')
    x3 = h3 @ p['sw3'] + p['sb3'] + f
    return x3 / jnp.maximum(jnp.linalg.norm(x3, axis=1, keepdims=True), L2_EPS)


# --------------------------------- main --------------------------------------
if __name__ == "__main__":
    key = jax.random.PRNGKey(0)
    pkey, ikey = jax.random.split(key)
    raw_params = init_params(pkey)
    prep = prepare_params(raw_params)
    # images: NCHW, like the torch module's input
    images = jax.random.normal(ikey, (N_IMAGES, C_IN, SPATIAL, SPATIAL), jnp.float32)

    out = jax.block_until_ready(pretrained_gcn_knn_forward(images, prep))
    ref = jax.block_until_ready(
        reference_forward(images, raw_params, min(K_NN, N_IMAGES - 1)))
    np.testing.assert_allclose(np.asarray(out), np.asarray(ref), rtol=2e-2, atol=5e-3)

    print("KERNEL_OK")
</pallas_src>

<mosaic_0001>
module attributes {stable_mosaic.version = 11 : i64} {
  func.func @fused_forward_kernel(%arg0: memref<16x3x1024xf32, #tpu.memory_space<vmem>>, %arg1: memref<3x256xf32, #tpu.memory_space<vmem>>, %arg2: memref<8x256xf32, #tpu.memory_space<vmem>>, %arg3: memref<6x256x256xbf16, #tpu.memory_space<vmem>>, %arg4: memref<16x256xf32, #tpu.memory_space<vmem>>) attributes {dimension_semantics = [], scalar_prefetch = 0 : i64, scratch_operands = 0 : i64, tpu.core_type = #tpu.core_type<tc>} {
    %c0 = arith.constant 0 : index
    %c0_0 = arith.constant 0 : index
    %0 = vector.load %arg2[%c0, %c0_0] : memref<8x256xf32, #tpu.memory_space<vmem>>, vector<8x256xf32>
    %c0_1 = arith.constant 0 : index
    %c0_2 = arith.constant 0 : index
    %c0_3 = arith.constant 0 : index
    %1 = vector.load %arg0[%c0_1, %c0_2, %c0_3] : memref<16x3x1024xf32, #tpu.memory_space<vmem>>, vector<16x3x1024xf32>
    %cst = arith.constant dense<0.000000e+00> : vector<16x3xf32>
    %2 = vector.multi_reduction <add>, %1, %cst [2] : vector<16x3x1024xf32> to vector<16x3xf32>
    %cst_4 = arith.constant 1.024000e+03 : f32
    %3 = vector.broadcast %cst_4 : f32 to vector<16x3xf32>
    %4 = arith.divf %2, %3 : vector<16x3xf32>
    %c0_5 = arith.constant 0 : index
    %c0_6 = arith.constant 0 : index
    %5 = vector.load %arg1[%c0_5, %c0_6] : memref<3x256xf32, #tpu.memory_space<vmem>>, vector<3x256xf32>
    %cst_7 = arith.constant dense<0.000000e+00> : vector<16x256xf32>
    %6 = tpu.matmul %4, %5, %cst_7 {dimension_numbers = #tpu.dot_dimension_numbers<[1], [0], [0], [1], [0, 0, 1, 1], [], []>} : vector<16x3xf32>, vector<3x256xf32>, vector<16x256xf32> -> vector<16x256xf32>
    %7 = vector.extract_strided_slice %0 {offsets = [0, 0], sizes = [1, 256], strides = [1, 1]} : vector<8x256xf32> to vector<1x256xf32>
    %8 = vector.broadcast %7 : vector<1x256xf32> to vector<16x256xf32>
    %9 = arith.addf %6, %8 : vector<16x256xf32>
    %10 = arith.mulf %9, %9 : vector<16x256xf32>
    %cst_8 = arith.constant dense<0.000000e+00> : vector<16xf32>
    %11 = vector.multi_reduction <add>, %10, %cst_8 [1] : vector<16x256xf32> to vector<16xf32>
    %12 = vector.shape_cast %11 : vector<16xf32> to vector<16x1xf32>
    %cst_9 = arith.constant 1.000000e-24 : f32
    %13 = vector.broadcast %cst_9 : f32 to vector<16x1xf32>
    %14 = arith.maximumf %12, %13 : vector<16x1xf32>
    %15 = math.rsqrt %14 : vector<16x1xf32>
    %16 = vector.broadcast %15 : vector<16x1xf32> to vector<16x256xf32>
    %17 = arith.mulf %9, %16 : vector<16x256xf32>
    %cst_10 = arith.constant dense<0.000000e+00> : vector<16x16xf32>
    %18 = tpu.matmul %17, %17, %cst_10 {dimension_numbers = #tpu.dot_dimension_numbers<[1], [1], [0], [0], [0, 0, 1, 0], [], []>} : vector<16x256xf32>, vector<16x256xf32>, vector<16x16xf32> -> vector<16x16xf32>
    %19 = tpu.iota {dimensions = array<i32: 0>} : vector<16x16xi32>
    %20 = tpu.iota {dimensions = array<i32: 1>} : vector<16x16xi32>
    %21 = arith.cmpi eq, %19, %20 : vector<16x16xi32>
    %22 = arith.sitofp %19 : vector<16x16xi32> to vector<16x16xf32>
    %cst_11 = arith.constant -2.000000e+00 : f32
    %23 = vector.broadcast %cst_11 : f32 to vector<16x16xf32>
    %24 = arith.select %21, %23, %18 : vector<16x16xi1>, vector<16x16xf32>
    %cst_12 = arith.constant 0.000000e+00 : f32
    %25 = vector.broadcast %cst_12 : f32 to vector<16x16xf32>
    %cst_13 = arith.constant dense<0xFF800000> : vector<16xf32>
    %26 = vector.multi_reduction <maximumf>, %24, %cst_13 [0] : vector<16x16xf32> to vector<16xf32>
    %27 = vector.shape_cast %26 : vector<16xf32> to vector<1x16xf32>
    %28 = vector.broadcast %27 : vector<1x16xf32> to vector<16x16xf32>
    %29 = arith.cmpf oge, %24, %28 : vector<16x16xf32>
    %cst_14 = arith.constant 1.600000e+01 : f32
    %30 = vector.broadcast %cst_14 : f32 to vector<16x16xf32>
    %31 = arith.select %29, %22, %30 : vector<16x16xi1>, vector<16x16xf32>
    %cst_15 = arith.constant dense<0x7F800000> : vector<16xf32>
    %32 = vector.multi_reduction <minimumf>, %31, %cst_15 [0] : vector<16x16xf32> to vector<16xf32>
    %33 = vector.shape_cast %32 : vector<16xf32> to vector<1x16xf32>
    %34 = vector.broadcast %33 : vector<1x16xf32> to vector<16x16xf32>
    %35 = arith.cmpf oeq, %22, %34 : vector<16x16xf32>
    %cst_16 = arith.constant 1.000000e+00 : f32
    %36 = vector.broadcast %cst_16 : f32 to vector<16x16xf32>
    %37 = arith.select %35, %36, %25 : vector<16x16xi1>, vector<16x16xf32>
    %cst_17 = arith.constant -3.000000e+00 : f32
    %38 = vector.broadcast %cst_17 : f32 to vector<16x16xf32>
    %39 = arith.select %35, %38, %24 : vector<16x16xi1>, vector<16x16xf32>
    %cst_18 = arith.constant dense<0xFF800000> : vector<16xf32>
    %40 = vector.multi_reduction <maximumf>, %39, %cst_18 [0] : vector<16x16xf32> to vector<16xf32>
    %41 = vector.shape_cast %40 : vector<16xf32> to vector<1x16xf32>
    %42 = vector.broadcast %41 : vector<1x16xf32> to vector<16x16xf32>
    %43 = arith.cmpf oge, %39, %42 : vector<16x16xf32>
    %cst_19 = arith.constant 1.600000e+01 : f32
    %44 = vector.broadcast %cst_19 : f32 to vector<16x16xf32>
    %45 = arith.select %43, %22, %44 : vector<16x16xi1>, vector<16x16xf32>
    %cst_20 = arith.constant dense<0x7F800000> : vector<16xf32>
    %46 = vector.multi_reduction <minimumf>, %45, %cst_20 [0] : vector<16x16xf32> to vector<16xf32>
    %47 = vector.shape_cast %46 : vector<16xf32> to vector<1x16xf32>
    %48 = vector.broadcast %47 : vector<1x16xf32> to vector<16x16xf32>
    %49 = arith.cmpf oeq, %22, %48 : vector<16x16xf32>
    %cst_21 = arith.constant 1.000000e+00 : f32
    %50 = vector.broadcast %cst_21 : f32 to vector<16x16xf32>
    %51 = arith.select %49, %50, %37 : vector<16x16xi1>, vector<16x16xf32>
    %cst_22 = arith.constant -3.000000e+00 : f32
    %52 = vector.broadcast %cst_22 : f32 to vector<16x16xf32>
    %53 = arith.select %49, %52, %39 : vector<16x16xi1>, vector<16x16xf32>
    %cst_23 = arith.constant dense<0xFF800000> : vector<16xf32>
    %54 = vector.multi_reduction <maximumf>, %53, %cst_23 [0] : vector<16x16xf32> to vector<16xf32>
    %55 = vector.shape_cast %54 : vector<16xf32> to vector<1x16xf32>
    %56 = vector.broadcast %55 : vector<1x16xf32> to vector<16x16xf32>
    %57 = arith.cmpf oge, %53, %56 : vector<16x16xf32>
    %cst_24 = arith.constant 1.600000e+01 : f32
    %58 = vector.broadcast %cst_24 : f32 to vector<16x16xf32>
    %59 = arith.select %57, %22, %58 : vector<16x16xi1>, vector<16x16xf32>
    %cst_25 = arith.constant dense<0x7F800000> : vector<16xf32>
    %60 = vector.multi_reduction <minimumf>, %59, %cst_25 [0] : vector<16x16xf32> to vector<16xf32>
    %61 = vector.shape_cast %60 : vector<16xf32> to vector<1x16xf32>
    %62 = vector.broadcast %61 : vector<1x16xf32> to vector<16x16xf32>
    %63 = arith.cmpf oeq, %22, %62 : vector<16x16xf32>
    %cst_26 = arith.constant 1.000000e+00 : f32
    %64 = vector.broadcast %cst_26 : f32 to vector<16x16xf32>
    %65 = arith.select %63, %64, %51 : vector<16x16xi1>, vector<16x16xf32>
    %cst_27 = arith.constant -3.000000e+00 : f32
    %66 = vector.broadcast %cst_27 : f32 to vector<16x16xf32>
    %67 = arith.select %63, %66, %53 : vector<16x16xi1>, vector<16x16xf32>
    %cst_28 = arith.constant dense<0xFF800000> : vector<16xf32>
    %68 = vector.multi_reduction <maximumf>, %67, %cst_28 [0] : vector<16x16xf32> to vector<16xf32>
    %69 = vector.shape_cast %68 : vector<16xf32> to vector<1x16xf32>
    %70 = vector.broadcast %69 : vector<1x16xf32> to vector<16x16xf32>
    %71 = arith.cmpf oge, %67, %70 : vector<16x16xf32>
    %cst_29 = arith.constant 1.600000e+01 : f32
    %72 = vector.broadcast %cst_29 : f32 to vector<16x16xf32>
    %73 = arith.select %71, %22, %72 : vector<16x16xi1>, vector<16x16xf32>
    %cst_30 = arith.constant dense<0x7F800000> : vector<16xf32>
    %74 = vector.multi_reduction <minimumf>, %73, %cst_30 [0] : vector<16x16xf32> to vector<16xf32>
    %75 = vector.shape_cast %74 : vector<16xf32> to vector<1x16xf32>
    %76 = vector.broadcast %75 : vector<1x16xf32> to vector<16x16xf32>
    %77 = arith.cmpf oeq, %22, %76 : vector<16x16xf32>
    %cst_31 = arith.constant 1.000000e+00 : f32
    %78 = vector.broadcast %cst_31 : f32 to vector<16x16xf32>
    %79 = arith.select %77, %78, %65 : vector<16x16xi1>, vector<16x16xf32>
    %cst_32 = arith.constant -3.000000e+00 : f32
    %80 = vector.broadcast %cst_32 : f32 to vector<16x16xf32>
    %81 = arith.select %77, %80, %67 : vector<16x16xi1>, vector<16x16xf32>
    %cst_33 = arith.constant dense<0xFF800000> : vector<16xf32>
    %82 = vector.multi_reduction <maximumf>, %81, %cst_33 [0] : vector<16x16xf32> to vector<16xf32>
    %83 = vector.shape_cast %82 : vector<16xf32> to vector<1x16xf32>
    %84 = vector.broadcast %83 : vector<1x16xf32> to vector<16x16xf32>
    %85 = arith.cmpf oge, %81, %84 : vector<16x16xf32>
    %cst_34 = arith.constant 1.600000e+01 : f32
    %86 = vector.broadcast %cst_34 : f32 to vector<16x16xf32>
    %87 = arith.select %85, %22, %86 : vector<16x16xi1>, vector<16x16xf32>
    %cst_35 = arith.constant dense<0x7F800000> : vector<16xf32>
    %88 = vector.multi_reduction <minimumf>, %87, %cst_35 [0] : vector<16x16xf32> to vector<16xf32>
    %89 = vector.shape_cast %88 : vector<16xf32> to vector<1x16xf32>
    %90 = vector.broadcast %89 : vector<1x16xf32> to vector<16x16xf32>
    %91 = arith.cmpf oeq, %22, %90 : vector<16x16xf32>
    %cst_36 = arith.constant 1.000000e+00 : f32
    %92 = vector.broadcast %cst_36 : f32 to vector<16x16xf32>
    %93 = arith.select %91, %92, %79 : vector<16x16xi1>, vector<16x16xf32>
    %cst_37 = arith.constant -3.000000e+00 : f32
    %94 = vector.broadcast %cst_37 : f32 to vector<16x16xf32>
    %95 = arith.select %91, %94, %81 : vector<16x16xi1>, vector<16x16xf32>
    %cst_38 = arith.constant dense<0xFF800000> : vector<16xf32>
    %96 = vector.multi_reduction <maximumf>, %95, %cst_38 [0] : vector<16x16xf32> to vector<16xf32>
    %97 = vector.shape_cast %96 : vector<16xf32> to vector<1x16xf32>
    %98 = vector.broadcast %97 : vector<1x16xf32> to vector<16x16xf32>
    %99 = arith.cmpf oge, %95, %98 : vector<16x16xf32>
    %cst_39 = arith.constant 1.600000e+01 : f32
    %100 = vector.broadcast %cst_39 : f32 to vector<16x16xf32>
    %101 = arith.select %99, %22, %100 : vector<16x16xi1>, vector<16x16xf32>
    %cst_40 = arith.constant dense<0x7F800000> : vector<16xf32>
    %102 = vector.multi_reduction <minimumf>, %101, %cst_40 [0] : vector<16x16xf32> to vector<16xf32>
    %103 = vector.shape_cast %102 : vector<16xf32> to vector<1x16xf32>
    %104 = vector.broadcast %103 : vector<1x16xf32> to vector<16x16xf32>
    %105 = arith.cmpf oeq, %22, %104 : vector<16x16xf32>
    %cst_41 = arith.constant 1.000000e+00 : f32
    %106 = vector.broadcast %cst_41 : f32 to vector<16x16xf32>
    %107 = arith.select %105, %106, %93 : vector<16x16xi1>, vector<16x16xf32>
    %cst_42 = arith.constant -3.000000e+00 : f32
    %108 = vector.broadcast %cst_42 : f32 to vector<16x16xf32>
    %109 = arith.select %105, %108, %95 : vector<16x16xi1>, vector<16x16xf32>
    %cst_43 = arith.constant dense<0xFF800000> : vector<16xf32>
    %110 = vector.multi_reduction <maximumf>, %109, %cst_43 [0] : vector<16x16xf32> to vector<16xf32>
    %111 = vector.shape_cast %110 : vector<16xf32> to vector<1x16xf32>
    %112 = vector.broadcast %111 : vector<1x16xf32> to vector<16x16xf32>
    %113 = arith.cmpf oge, %109, %112 : vector<16x16xf32>
    %cst_44 = arith.constant 1.600000e+01 : f32
    %114 = vector.broadcast %cst_44 : f32 to vector<16x16xf32>
    %115 = arith.select %113, %22, %114 : vector<16x16xi1>, vector<16x16xf32>
    %cst_45 = arith.constant dense<0x7F800000> : vector<16xf32>
    %116 = vector.multi_reduction <minimumf>, %115, %cst_45 [0] : vector<16x16xf32> to vector<16xf32>
    %117 = vector.shape_cast %116 : vector<16xf32> to vector<1x16xf32>
    %118 = vector.broadcast %117 : vector<1x16xf32> to vector<16x16xf32>
    %119 = arith.cmpf oeq, %22, %118 : vector<16x16xf32>
    %cst_46 = arith.constant 1.000000e+00 : f32
    %120 = vector.broadcast %cst_46 : f32 to vector<16x16xf32>
    %121 = arith.select %119, %120, %107 : vector<16x16xi1>, vector<16x16xf32>
    %cst_47 = arith.constant -3.000000e+00 : f32
    %122 = vector.broadcast %cst_47 : f32 to vector<16x16xf32>
    %123 = arith.select %119, %122, %109 : vector<16x16xi1>, vector<16x16xf32>
    %cst_48 = arith.constant dense<0xFF800000> : vector<16xf32>
    %124 = vector.multi_reduction <maximumf>, %123, %cst_48 [0] : vector<16x16xf32> to vector<16xf32>
    %125 = vector.shape_cast %124 : vector<16xf32> to vector<1x16xf32>
    %126 = vector.broadcast %125 : vector<1x16xf32> to vector<16x16xf32>
    %127 = arith.cmpf oge, %123, %126 : vector<16x16xf32>
    %cst_49 = arith.constant 1.600000e+01 : f32
    %128 = vector.broadcast %cst_49 : f32 to vector<16x16xf32>
    %129 = arith.select %127, %22, %128 : vector<16x16xi1>, vector<16x16xf32>
    %cst_50 = arith.constant dense<0x7F800000> : vector<16xf32>
    %130 = vector.multi_reduction <minimumf>, %129, %cst_50 [0] : vector<16x16xf32> to vector<16xf32>
    %131 = vector.shape_cast %130 : vector<16xf32> to vector<1x16xf32>
    %132 = vector.broadcast %131 : vector<1x16xf32> to vector<16x16xf32>
    %133 = arith.cmpf oeq, %22, %132 : vector<16x16xf32>
    %cst_51 = arith.constant 1.000000e+00 : f32
    %134 = vector.broadcast %cst_51 : f32 to vector<16x16xf32>
    %135 = arith.select %133, %134, %121 : vector<16x16xi1>, vector<16x16xf32>
    %cst_52 = arith.constant -3.000000e+00 : f32
    %136 = vector.broadcast %cst_52 : f32 to vector<16x16xf32>
    %137 = arith.select %133, %136, %123 : vector<16x16xi1>, vector<16x16xf32>
    %cst_53 = arith.constant dense<0xFF800000> : vector<16xf32>
    %138 = vector.multi_reduction <maximumf>, %137, %cst_53 [0] : vector<16x16xf32> to vector<16xf32>
    %139 = vector.shape_cast %138 : vector<16xf32> to vector<1x16xf32>
    %140 = vector.broadcast %139 : vector<1x16xf32> to vector<16x16xf32>
    %141 = arith.cmpf oge, %137, %140 : vector<16x16xf32>
    %cst_54 = arith.constant 1.600000e+01 : f32
    %142 = vector.broadcast %cst_54 : f32 to vector<16x16xf32>
    %143 = arith.select %141, %22, %142 : vector<16x16xi1>, vector<16x16xf32>
    %cst_55 = arith.constant dense<0x7F800000> : vector<16xf32>
    %144 = vector.multi_reduction <minimumf>, %143, %cst_55 [0] : vector<16x16xf32> to vector<16xf32>
    %145 = vector.shape_cast %144 : vector<16xf32> to vector<1x16xf32>
    %146 = vector.broadcast %145 : vector<1x16xf32> to vector<16x16xf32>
    %147 = arith.cmpf oeq, %22, %146 : vector<16x16xf32>
    %cst_56 = arith.constant 1.000000e+00 : f32
    %148 = vector.broadcast %cst_56 : f32 to vector<16x16xf32>
    %149 = arith.select %147, %148, %135 : vector<16x16xi1>, vector<16x16xf32>
    %cst_57 = arith.constant -3.000000e+00 : f32
    %150 = vector.broadcast %cst_57 : f32 to vector<16x16xf32>
    %151 = arith.select %147, %150, %137 : vector<16x16xi1>, vector<16x16xf32>
    %cst_58 = arith.constant dense<0xFF800000> : vector<16xf32>
    %152 = vector.multi_reduction <maximumf>, %151, %cst_58 [0] : vector<16x16xf32> to vector<16xf32>
    %153 = vector.shape_cast %152 : vector<16xf32> to vector<1x16xf32>
    %154 = vector.broadcast %153 : vector<1x16xf32> to vector<16x16xf32>
    %155 = arith.cmpf oge, %151, %154 : vector<16x16xf32>
    %cst_59 = arith.constant 1.600000e+01 : f32
    %156 = vector.broadcast %cst_59 : f32 to vector<16x16xf32>
    %157 = arith.select %155, %22, %156 : vector<16x16xi1>, vector<16x16xf32>
    %cst_60 = arith.constant dense<0x7F800000> : vector<16xf32>
    %158 = vector.multi_reduction <minimumf>, %157, %cst_60 [0] : vector<16x16xf32> to vector<16xf32>
    %159 = vector.shape_cast %158 : vector<16xf32> to vector<1x16xf32>
    %160 = vector.broadcast %159 : vector<1x16xf32> to vector<16x16xf32>
    %161 = arith.cmpf oeq, %22, %160 : vector<16x16xf32>
    %cst_61 = arith.constant 1.000000e+00 : f32
    %162 = vector.broadcast %cst_61 : f32 to vector<16x16xf32>
    %163 = arith.select %161, %162, %149 : vector<16x16xi1>, vector<16x16xf32>
    %cst_62 = arith.constant 1.000000e+00 : f32
    %164 = vector.broadcast %cst_62 : f32 to vector<16x16xf32>
    %165 = arith.select %21, %164, %163 : vector<16x16xi1>, vector<16x16xf32>
    %cst_63 = arith.constant dense<0.000000e+00> : vector<16xf32>
    %166 = vector.multi_reduction <add>, %165, %cst_63 [1] : vector<16x16xf32> to vector<16xf32>
    %167 = vector.shape_cast %166 : vector<16xf32> to vector<16x1xf32>
    %168 = math.rsqrt %167 : vector<16x1xf32>
    %169 = vector.broadcast %168 : vector<16x1xf32> to vector<16x16xf32>
    %170 = arith.mulf %165, %169 : vector<16x16xf32>
    %171 = arith.truncf %17 : vector<16x256xf32> to vector<16x256xbf16>
    %c0_64 = arith.constant 0 : index
    %c0_65 = arith.constant 0 : index
    %c0_66 = arith.constant 0 : index
    %172 = vector.load %arg3[%c0_64, %c0_65, %c0_66] : memref<6x256x256xbf16, #tpu.memory_space<vmem>>, vector<1x256x256xbf16>
    %173 = vector.shape_cast %172 : vector<1x256x256xbf16> to vector<256x256xbf16>
    %cst_67 = arith.constant dense<0.000000e+00> : vector<16x256xf32>
    %174 = tpu.matmul %171, %173, %cst_67 {dimension_numbers = #tpu.dot_dimension_numbers<[1], [0], [0], [1], [0, 0, 1, 1], [], []>} : vector<16x256xbf16>, vector<256x256xbf16>, vector<16x256xf32> -> vector<16x256xf32>
    %175 = vector.broadcast %168 : vector<16x1xf32> to vector<16x256xf32>
    %176 = arith.mulf %175, %174 : vector<16x256xf32>
    %cst_68 = arith.constant dense<0.000000e+00> : vector<16x256xf32>
    %177 = tpu.matmul %170, %176, %cst_68 {dimension_numbers = #tpu.dot_dimension_numbers<[1], [0], [0], [1], [0, 0, 1, 1], [], []>} : vector<16x16xf32>, vector<16x256xf32>, vector<16x256xf32> -> vector<16x256xf32>
    %178 = vector.extract_strided_slice %0 {offsets = [1, 0], sizes = [1, 256], strides = [1, 1]} : vector<8x256xf32> to vector<1x256xf32>
    %179 = vector.broadcast %178 : vector<1x256xf32> to vector<16x256xf32>
    %180 = arith.addf %177, %179 : vector<16x256xf32>
    %cst_69 = arith.constant 0.000000e+00 : f32
    %181 = vector.broadcast %cst_69 : f32 to vector<16x256xf32>
    %182 = arith.maximumf %180, %181 : vector<16x256xf32>
    %183 = arith.truncf %182 : vector<16x256xf32> to vector<16x256xbf16>
    %c3 = arith.constant 3 : index
    %c0_70 = arith.constant 0 : index
    %c0_71 = arith.constant 0 : index
    %184 = vector.load %arg3[%c3, %c0_70, %c0_71] : memref<6x256x256xbf16, #tpu.memory_space<vmem>>, vector<1x256x256xbf16>
    %185 = vector.shape_cast %184 : vector<1x256x256xbf16> to vector<256x256xbf16>
    %cst_72 = arith.constant dense<0.000000e+00> : vector<16x256xf32>
    %186 = tpu.matmul %183, %185, %cst_72 {dimension_numbers = #tpu.dot_dimension_numbers<[1], [0], [0], [1], [0, 0, 1, 1], [], []>} : vector<16x256xbf16>, vector<256x256xbf16>, vector<16x256xf32> -> vector<16x256xf32>
    %187 = vector.extract_strided_slice %0 {offsets = [4, 0], sizes = [1, 256], strides = [1, 1]} : vector<8x256xf32> to vector<1x256xf32>
    %188 = vector.broadcast %187 : vector<1x256xf32> to vector<16x256xf32>
    %189 = arith.addf %186, %188 : vector<16x256xf32>
    %190 = arith.addf %189, %17 : vector<16x256xf32>
    %191 = arith.truncf %190 : vector<16x256xf32> to vector<16x256xbf16>
    %c1 = arith.constant 1 : index
    %c0_73 = arith.constant 0 : index
    %c0_74 = arith.constant 0 : index
    %192 = vector.load %arg3[%c1, %c0_73, %c0_74] : memref<6x256x256xbf16, #tpu.memory_space<vmem>>, vector<1x256x256xbf16>
    %193 = vector.shape_cast %192 : vector<1x256x256xbf16> to vector<256x256xbf16>
    %cst_75 = arith.constant dense<0.000000e+00> : vector<16x256xf32>
    %194 = tpu.matmul %191, %193, %cst_75 {dimension_numbers = #tpu.dot_dimension_numbers<[1], [0], [0], [1], [0, 0, 1, 1], [], []>} : vector<16x256xbf16>, vector<256x256xbf16>, vector<16x256xf32> -> vector<16x256xf32>
    %195 = vector.broadcast %168 : vector<16x1xf32> to vector<16x256xf32>
    %196 = arith.mulf %195, %194 : vector<16x256xf32>
    %cst_76 = arith.constant dense<0.000000e+00> : vector<16x256xf32>
    %197 = tpu.matmul %170, %196, %cst_76 {dimension_numbers = #tpu.dot_dimension_numbers<[1], [0], [0], [1], [0, 0, 1, 1], [], []>} : vector<16x16xf32>, vector<16x256xf32>, vector<16x256xf32> -> vector<16x256xf32>
    %198 = vector.extract_strided_slice %0 {offsets = [2, 0], sizes = [1, 256], strides = [1, 1]} : vector<8x256xf32> to vector<1x256xf32>
    %199 = vector.broadcast %198 : vector<1x256xf32> to vector<16x256xf32>
    %200 = arith.addf %197, %199 : vector<16x256xf32>
    %cst_77 = arith.constant 0.000000e+00 : f32
    %201 = vector.broadcast %cst_77 : f32 to vector<16x256xf32>
    %202 = arith.maximumf %200, %201 : vector<16x256xf32>
    %203 = arith.truncf %202 : vector<16x256xf32> to vector<16x256xbf16>
    %c4 = arith.constant 4 : index
    %c0_78 = arith.constant 0 : index
    %c0_79 = arith.constant 0 : index
    %204 = vector.load %arg3[%c4, %c0_78, %c0_79] : memref<6x256x256xbf16, #tpu.memory_space<vmem>>, vector<1x256x256xbf16>
    %205 = vector.shape_cast %204 : vector<1x256x256xbf16> to vector<256x256xbf16>
    %cst_80 = arith.constant dense<0.000000e+00> : vector<16x256xf32>
    %206 = tpu.matmul %203, %205, %cst_80 {dimension_numbers = #tpu.dot_dimension_numbers<[1], [0], [0], [1], [0, 0, 1, 1], [], []>} : vector<16x256xbf16>, vector<256x256xbf16>, vector<16x256xf32> -> vector<16x256xf32>
    %207 = vector.extract_strided_slice %0 {offsets = [5, 0], sizes = [1, 256], strides = [1, 1]} : vector<8x256xf32> to vector<1x256xf32>
    %208 = vector.broadcast %207 : vector<1x256xf32> to vector<16x256xf32>
    %209 = arith.addf %206, %208 : vector<16x256xf32>
    %210 = arith.addf %209, %17 : vector<16x256xf32>
    %211 = arith.truncf %210 : vector<16x256xf32> to vector<16x256xbf16>
    %c2 = arith.constant 2 : index
    %c0_81 = arith.constant 0 : index
    %c0_82 = arith.constant 0 : index
    %212 = vector.load %arg3[%c2, %c0_81, %c0_82] : memref<6x256x256xbf16, #tpu.memory_space<vmem>>, vector<1x256x256xbf16>
    %213 = vector.shape_cast %212 : vector<1x256x256xbf16> to vector<256x256xbf16>
    %cst_83 = arith.constant dense<0.000000e+00> : vector<16x256xf32>
    %214 = tpu.matmul %211, %213, %cst_83 {dimension_numbers = #tpu.dot_dimension_numbers<[1], [0], [0], [1], [0, 0, 1, 1], [], []>} : vector<16x256xbf16>, vector<256x256xbf16>, vector<16x256xf32> -> vector<16x256xf32>
    %215 = vector.broadcast %168 : vector<16x1xf32> to vector<16x256xf32>
    %216 = arith.mulf %215, %214 : vector<16x256xf32>
    %cst_84 = arith.constant dense<0.000000e+00> : vector<16x256xf32>
    %217 = tpu.matmul %170, %216, %cst_84 {dimension_numbers = #tpu.dot_dimension_numbers<[1], [0], [0], [1], [0, 0, 1, 1], [], []>} : vector<16x16xf32>, vector<16x256xf32>, vector<16x256xf32> -> vector<16x256xf32>
    %218 = vector.extract_strided_slice %0 {offsets = [3, 0], sizes = [1, 256], strides = [1, 1]} : vector<8x256xf32> to vector<1x256xf32>
    %219 = vector.broadcast %218 : vector<1x256xf32> to vector<16x256xf32>
    %220 = arith.addf %217, %219 : vector<16x256xf32>
    %221 = arith.truncf %220 : vector<16x256xf32> to vector<16x256xbf16>
    %c5 = arith.constant 5 : index
    %c0_85 = arith.constant 0 : index
    %c0_86 = arith.constant 0 : index
    %222 = vector.load %arg3[%c5, %c0_85, %c0_86] : memref<6x256x256xbf16, #tpu.memory_space<vmem>>, vector<1x256x256xbf16>
    %223 = vector.shape_cast %222 : vector<1x256x256xbf16> to vector<256x256xbf16>
    %cst_87 = arith.constant dense<0.000000e+00> : vector<16x256xf32>
    %224 = tpu.matmul %221, %223, %cst_87 {dimension_numbers = #tpu.dot_dimension_numbers<[1], [0], [0], [1], [0, 0, 1, 1], [], []>} : vector<16x256xbf16>, vector<256x256xbf16>, vector<16x256xf32> -> vector<16x256xf32>
    %225 = vector.extract_strided_slice %0 {offsets = [6, 0], sizes = [1, 256], strides = [1, 1]} : vector<8x256xf32> to vector<1x256xf32>
    %226 = vector.broadcast %225 : vector<1x256xf32> to vector<16x256xf32>
    %227 = arith.addf %224, %226 : vector<16x256xf32>
    %228 = arith.addf %227, %17 : vector<16x256xf32>
    %229 = arith.mulf %228, %228 : vector<16x256xf32>
    %cst_88 = arith.constant dense<0.000000e+00> : vector<16xf32>
    %230 = vector.multi_reduction <add>, %229, %cst_88 [1] : vector<16x256xf32> to vector<16xf32>
    %231 = vector.shape_cast %230 : vector<16xf32> to vector<16x1xf32>
    %cst_89 = arith.constant 1.000000e-24 : f32
    %232 = vector.broadcast %cst_89 : f32 to vector<16x1xf32>
    %233 = arith.maximumf %231, %232 : vector<16x1xf32>
    %234 = math.rsqrt %233 : vector<16x1xf32>
    %235 = vector.broadcast %234 : vector<16x1xf32> to vector<16x256xf32>
    %236 = arith.mulf %228, %235 : vector<16x256xf32>
    %c0_90 = arith.constant 0 : index
    %c0_91 = arith.constant 0 : index
    %237 = vector.load %arg4[%c0_90, %c0_91] : memref<16x256xf32, #tpu.memory_space<vmem>>, vector<16x256xf32>
    tpu.vector_store %arg4[%c0_90, %c0_91], %236 {strides = array<i32>} : memref<16x256xf32, #tpu.memory_space<vmem>>, vector<16x256xf32>,
    return
  }
}

</mosaic_0001>

<llo_original>
// kernel: pretrained_gcn_knn_forward.1
$region0: #{pretrained_gcn_knn_forward.1}
  #allocation0 [shape = 'u32[]', space=smem, size = 0x4, offset = 0x4, fixed_abs, tag = 'smem constant byte address 0x4 - core index']
  #allocation1 [shape = 'u32[72,128]{1,0:T(1,128)}', space=vmem, size = 0x9000, scoped, tag = 'internal scratch']
  %s0 = inlined_call_operand.vmem [shape: f32[16,3,1024], index: 0, kind: input, shape index: {}]
  %s1 = inlined_call_operand.vmem [shape: f32[3,256], index: 1, kind: input, shape index: {}]
  %s2 = inlined_call_operand.vmem [shape: f32[8,256], index: 2, kind: input, shape index: {}]
  %s3 = inlined_call_operand.vmem [shape: bf16[6,256,256], index: 3, kind: input, shape index: {}]
  %s4 = inlined_call_operand.hbm [shape: f32[16,256], index: 4, kind: output, shape index: {}]
  %s5 = sld [smem:[#allocation0]]
  $region26: #{pretrained_gcn_knn_forward.1} parent=0
    _
  %s7 = ssub.s32 1, %s5
  %s8 = scalar_select 0, %s7, %s5
  $region1: #{pretrained_gcn_knn_forward.1} parent=0
    #allocation2 [shape = 'u8[16384]{0}', space=vmem, size = 0x4000, scoped, tag = 'output window, operand 0, single buffered']
    #allocation3 [shape = 's32[1]{0}', space=sflag, size = 0x4, scoped, tag = 'scoped memory for pretrained_gcn_knn_forward.1']
    %9 = vsyncpa [#allocation3], 0
    // Predicated region
    $region2: #{pretrained_gcn_knn_forward.1} parent=1 // pred_check
      _
    $region3: #{pretrained_gcn_knn_forward.1} parent=1 // pred_check_branch
      %11 = sbr.rel (0) target = $region5
    $region4: #{pretrained_gcn_knn_forward.1} parent=1 // pred_region
      _
    $region5: #{pretrained_gcn_knn_forward.1} parent=1 // pred_fallthru
      _
    // Predicated region
    $region6: #{pretrained_gcn_knn_forward.1} parent=1 // pred_check
      _
    $region7: #{pretrained_gcn_knn_forward.1} parent=1 // pred_check_branch
      %13 = sbr.rel (0) target = $region9
    $region8: #{pretrained_gcn_knn_forward.1} parent=1 // pred_region
      _
    $region9: #{pretrained_gcn_knn_forward.1} parent=1 // pred_fallthru
      _
    // Predicated region
    $region10: #{pretrained_gcn_knn_forward.1} parent=1 // pred_check
      _
    $region11: #{pretrained_gcn_knn_forward.1} parent=1 // pred_check_branch
      %15 = sbr.rel (0) target = $region13
    $region12: #{pretrained_gcn_knn_forward.1} parent=1 // pred_region
      _
    $region13: #{pretrained_gcn_knn_forward.1} parent=1 // pred_fallthru
      _
    // Predicated region
    $region14: #{pretrained_gcn_knn_forward.1} parent=1 // pred_check
      _
    $region15: #{pretrained_gcn_knn_forward.1} parent=1 // pred_check_branch
      %17 = sbr.rel (0) target = $region17
    $region16: #{pretrained_gcn_knn_forward.1} parent=1 // pred_region
      _
    $region17: #{pretrained_gcn_knn_forward.1} parent=1 // pred_fallthru
      _
    %v18 = vld [vmem:[%s2] sm:$0xff]
    %v19 = vld [vmem:[%s2 + $0x8] sm:$0xff]
    %v20 = vld [vmem:[%s0] sm:$0x77]
    %v21 = vld [vmem:[%s0 + $0x8] sm:$0x77]
    %v22 = vld [vmem:[%s0 + $0x10] sm:$0x77]
    %v23 = vld [vmem:[%s0 + $0x18] sm:$0x77]
    %v24 = vld [vmem:[%s0 + $0x20] sm:$0x77]
    %v25 = vld [vmem:[%s0 + $0x28] sm:$0x77]
    %v26 = vld [vmem:[%s0 + $0x30] sm:$0x77]
    %v27 = vld [vmem:[%s0 + $0x38] sm:$0x77]
    %v28 = vld [vmem:[%s0 + $0x40] sm:$0x77]
    %v29 = vld [vmem:[%s0 + $0x48] sm:$0x77]
    %v30 = vld [vmem:[%s0 + $0x50] sm:$0x77]
    %v31 = vld [vmem:[%s0 + $0x58] sm:$0x77]
    %v32 = vld [vmem:[%s0 + $0x60] sm:$0x77]
    %v33 = vld [vmem:[%s0 + $0x68] sm:$0x77]
    %v34 = vld [vmem:[%s0 + $0x70] sm:$0x77]
    %v35 = vld [vmem:[%s0 + $0x78] sm:$0x77]
    %v36 = vld [vmem:[%s0 + $0x80] sm:$0x77]
    %v37 = vld [vmem:[%s0 + $0x88] sm:$0x77]
    %v38 = vld [vmem:[%s0 + $0x90] sm:$0x77]
    %v39 = vld [vmem:[%s0 + $0x98] sm:$0x77]
    %v40 = vld [vmem:[%s0 + $0xa0] sm:$0x77]
    %v41 = vld [vmem:[%s0 + $0xa8] sm:$0x77]
    %v42 = vld [vmem:[%s0 + $0xb0] sm:$0x77]
    %v43 = vld [vmem:[%s0 + $0xb8] sm:$0x77]
    %v44 = vld [vmem:[%s0 + $0xc0] sm:$0x77]
    %v45 = vld [vmem:[%s0 + $0xc8] sm:$0x77]
    %v46 = vld [vmem:[%s0 + $0xd0] sm:$0x77]
    %v47 = vld [vmem:[%s0 + $0xd8] sm:$0x77]
    %v48 = vld [vmem:[%s0 + $0xe0] sm:$0x77]
    %v49 = vld [vmem:[%s0 + $0xe8] sm:$0x77]
    %v50 = vld [vmem:[%s0 + $0xf0] sm:$0x77]
    %v51 = vld [vmem:[%s0 + $0xf8] sm:$0x77]
    %v52 = vld [vmem:[%s0 + $0x100] sm:$0x77]
    %v53 = vld [vmem:[%s0 + $0x108] sm:$0x77]
    %v54 = vld [vmem:[%s0 + $0x110] sm:$0x77]
    %v55 = vld [vmem:[%s0 + $0x118] sm:$0x77]
    %v56 = vld [vmem:[%s0 + $0x120] sm:$0x77]
    %v57 = vld [vmem:[%s0 + $0x128] sm:$0x77]
    %v58 = vld [vmem:[%s0 + $0x130] sm:$0x77]
    %v59 = vld [vmem:[%s0 + $0x138] sm:$0x77]
    %v60 = vld [vmem:[%s0 + $0x140] sm:$0x77]
    %v61 = vld [vmem:[%s0 + $0x148] sm:$0x77]
    %v62 = vld [vmem:[%s0 + $0x150] sm:$0x77]
    %v63 = vld [vmem:[%s0 + $0x158] sm:$0x77]
    %v64 = vld [vmem:[%s0 + $0x160] sm:$0x77]
    %v65 = vld [vmem:[%s0 + $0x168] sm:$0x77]
    %v66 = vld [vmem:[%s0 + $0x170] sm:$0x77]
    %v67 = vld [vmem:[%s0 + $0x178] sm:$0x77]
    %v68 = vld [vmem:[%s0 + $0x180] sm:$0x77]
    %v69 = vld [vmem:[%s0 + $0x188] sm:$0x77]
    %v70 = vld [vmem:[%s0 + $0x190] sm:$0x77]
    %v71 = vld [vmem:[%s0 + $0x198] sm:$0x77]
    %v72 = vld [vmem:[%s0 + $0x1a0] sm:$0x77]
    %v73 = vld [vmem:[%s0 + $0x1a8] sm:$0x77]
    %v74 = vld [vmem:[%s0 + $0x1b0] sm:$0x77]
    %v75 = vld [vmem:[%s0 + $0x1b8] sm:$0x77]
    %v76 = vld [vmem:[%s0 + $0x1c0] sm:$0x77]
    %v77 = vld [vmem:[%s0 + $0x1c8] sm:$0x77]
    %v78 = vld [vmem:[%s0 + $0x1d0] sm:$0x77]
    %v79 = vld [vmem:[%s0 + $0x1d8] sm:$0x77]
    %v80 = vld [vmem:[%s0 + $0x1e0] sm:$0x77]
    %v81 = vld [vmem:[%s0 + $0x1e8] sm:$0x77]
    %v82 = vld [vmem:[%s0 + $0x1f0] sm:$0x77]
    %v83 = vld [vmem:[%s0 + $0x1f8] sm:$0x77]
    %148 = vst [vmem:[#allocation1] ss:$2 sm:$0xff] %v20
    %s149 = scalar_lea.vmem [#allocation1], 16
    %150 = vst [vmem:[%s149] ss:$2 sm:$0xff] %v21
    %s151 = scalar_lea.vmem [#allocation1], 32
    %152 = vst [vmem:[%s151] ss:$2 sm:$0xff] %v22
    %s153 = scalar_lea.vmem [#allocation1], 48
    %154 = vst [vmem:[%s153] ss:$2 sm:$0xff] %v23
    %v155 = vld.sshfl [vmem:[#allocation1] sm:$0xff pattern:$0x75316420]
    %v156 = vld.sshfl [vmem:[#allocation1 + $0x8] sm:$0xff pattern:$0x75316420]
    %v157 = vld.sshfl [vmem:[#allocation1 + $0x10] sm:$0xff pattern:$0x75316420]
    %v158 = vld.sshfl [vmem:[#allocation1 + $0x18] sm:$0xff pattern:$0x75316420]
    %v159 = vld.sshfl [vmem:[#allocation1 + $0x20] sm:$0xff pattern:$0x75316420]
    %v160 = vld.sshfl [vmem:[#allocation1 + $0x28] sm:$0xff pattern:$0x75316420]
    %v161 = vld.sshfl [vmem:[#allocation1 + $0x30] sm:$0xff pattern:$0x75316420]
    %v162 = vld.sshfl [vmem:[#allocation1 + $0x38] sm:$0xff pattern:$0x75316420]
    %163 = vst [vmem:[#allocation1] ss:$2 sm:$0xff] %v24
    %164 = vst [vmem:[%s149] ss:$2 sm:$0xff] %v25
    %165 = vst [vmem:[%s151] ss:$2 sm:$0xff] %v26
    %166 = vst [vmem:[%s153] ss:$2 sm:$0xff] %v27
    %v167 = vld.sshfl [vmem:[#allocation1] sm:$0xff pattern:$0x75316420]
    %v168 = vld.sshfl [vmem:[#allocation1 + $0x8] sm:$0xff pattern:$0x75316420]
    %v169 = vld.sshfl [vmem:[#allocation1 + $0x10] sm:$0xff pattern:$0x75316420]
    %v170 = vld.sshfl [vmem:[#allocation1 + $0x18] sm:$0xff pattern:$0x75316420]
    %v171 = vld.sshfl [vmem:[#allocation1 + $0x20] sm:$0xff pattern:$0x75316420]
    %v172 = vld.sshfl [vmem:[#allocation1 + $0x28] sm:$0xff pattern:$0x75316420]
    %v173 = vld.sshfl [vmem:[#allocation1 + $0x30] sm:$0xff pattern:$0x75316420]
    %v174 = vld.sshfl [vmem:[#allocation1 + $0x38] sm:$0xff pattern:$0x75316420]
    %175 = vst [vmem:[#allocation1] ss:$2 sm:$0xff] %v28
    %176 = vst [vmem:[%s149] ss:$2 sm:$0xff] %v29
    %177 = vst [vmem:[%s151] ss:$2 sm:$0xff] %v30
    %178 = vst [vmem:[%s153] ss:$2 sm:$0xff] %v31
    %v179 = vld.sshfl [vmem:[#allocation1] sm:$0xff pattern:$0x75316420]
    %v180 = vld.sshfl [vmem:[#allocation1 + $0x8] sm:$0xff pattern:$0x75316420]
    %v181 = vld.sshfl [vmem:[#allocation1 + $0x10] sm:$0xff pattern:$0x75316420]
    %v182 = vld.sshfl [vmem:[#allocation1 + $0x18] sm:$0xff pattern:$0x75316420]
    %v183 = vld.sshfl [vmem:[#allocation1 + $0x20] sm:$0xff pattern:$0x75316420]
    %v184 = vld.sshfl [vmem:[#allocation1 + $0x28] sm:$0xff pattern:$0x75316420]
    %v185 = vld.sshfl [vmem:[#allocation1 + $0x30] sm:$0xff pattern:$0x75316420]
    %v186 = vld.sshfl [vmem:[#allocation1 + $0x38] sm:$0xff pattern:$0x75316420]
    %187 = vst [vmem:[#allocation1] ss:$2 sm:$0xff] %v32
    %188 = vst [vmem:[%s149] ss:$2 sm:$0xff] %v33
    %189 = vst [vmem:[%s151] ss:$2 sm:$0xff] %v34
    %190 = vst [vmem:[%s153] ss:$2 sm:$0xff] %v35
    %v191 = vld.sshfl [vmem:[#allocation1] sm:$0xff pattern:$0x75316420]
    %v192 = vld.sshfl [vmem:[#allocation1 + $0x8] sm:$0xff pattern:$0x75316420]
    %v193 = vld.sshfl [vmem:[#allocation1 + $0x10] sm:$0xff pattern:$0x75316420]
    %v194 = vld.sshfl [vmem:[#allocation1 + $0x18] sm:$0xff pattern:$0x75316420]
    %v195 = vld.sshfl [vmem:[#allocation1 + $0x20] sm:$0xff pattern:$0x75316420]
    %v196 = vld.sshfl [vmem:[#allocation1 + $0x28] sm:$0xff pattern:$0x75316420]
    %v197 = vld.sshfl [vmem:[#allocation1 + $0x30] sm:$0xff pattern:$0x75316420]
    %v198 = vld.sshfl [vmem:[#allocation1 + $0x38] sm:$0xff pattern:$0x75316420]
    %199 = vst [vmem:[#allocation1] ss:$2 sm:$0xff] %v36
    %200 = vst [vmem:[%s149] ss:$2 sm:$0xff] %v37
    %201 = vst [vmem:[%s151] ss:$2 sm:$0xff] %v38
    %202 = vst [vmem:[%s153] ss:$2 sm:$0xff] %v39
    %v203 = vld.sshfl [vmem:[#allocation1] sm:$0xff pattern:$0x75316420]
    %v204 = vld.sshfl [vmem:[#allocation1 + $0x8] sm:$0xff pattern:$0x75316420]
    %v205 = vld.sshfl [vmem:[#allocation1 + $0x10] sm:$0xff pattern:$0x75316420]
    %v206 = vld.sshfl [vmem:[#allocation1 + $0x18] sm:$0xff pattern:$0x75316420]
    %v207 = vld.sshfl [vmem:[#allocation1 + $0x20] sm:$0xff pattern:$0x75316420]
    %v208 = vld.sshfl [vmem:[#allocation1 + $0x28] sm:$0xff pattern:$0x75316420]
    %v209 = vld.sshfl [vmem:[#allocation1 + $0x30] sm:$0xff pattern:$0x75316420]
    %v210 = vld.sshfl [vmem:[#allocation1 + $0x38] sm:$0xff pattern:$0x75316420]
    %211 = vst [vmem:[#allocation1] ss:$2 sm:$0xff] %v40
    %212 = vst [vmem:[%s149] ss:$2 sm:$0xff] %v41
    %213 = vst [vmem:[%s151] ss:$2 sm:$0xff] %v42
    %214 = vst [vmem:[%s153] ss:$2 sm:$0xff] %v43
    %v215 = vld.sshfl [vmem:[#allocation1] sm:$0xff pattern:$0x75316420]
    %v216 = vld.sshfl [vmem:[#allocation1 + $0x8] sm:$0xff pattern:$0x75316420]
    %v217 = vld.sshfl [vmem:[#allocation1 + $0x10] sm:$0xff pattern:$0x75316420]
    %v218 = vld.sshfl [vmem:[#allocation1 + $0x18] sm:$0xff pattern:$0x75316420]
    %v219 = vld.sshfl [vmem:[#allocation1 + $0x20] sm:$0xff pattern:$0x75316420]
    %v220 = vld.sshfl [vmem:[#allocation1 + $0x28] sm:$0xff pattern:$0x75316420]
    %v221 = vld.sshfl [vmem:[#allocation1 + $0x30] sm:$0xff pattern:$0x75316420]
    %v222 = vld.sshfl [vmem:[#allocation1 + $0x38] sm:$0xff pattern:$0x75316420]
    %223 = vst [vmem:[#allocation1] ss:$2 sm:$0xff] %v44
    %224 = vst [vmem:[%s149] ss:$2 sm:$0xff] %v45
    %225 = vst [vmem:[%s151] ss:$2 sm:$0xff] %v46
    %226 = vst [vmem:[%s153] ss:$2 sm:$0xff] %v47
    %v227 = vld.sshfl [vmem:[#allocation1] sm:$0xff pattern:$0x75316420]
    %v228 = vld.sshfl [vmem:[#allocation1 + $0x8] sm:$0xff pattern:$0x75316420]
    %v229 = vld.sshfl [vmem:[#allocation1 + $0x10] sm:$0xff pattern:$0x75316420]
    %v230 = vld.sshfl [vmem:[#allocation1 + $0x18] sm:$0xff pattern:$0x75316420]
    %v231 = vld.sshfl [vmem:[#allocation1 + $0x20] sm:$0xff pattern:$0x75316420]
    %v232 = vld.sshfl [vmem:[#allocation1 + $0x28] sm:$0xff pattern:$0x75316420]
    %v233 = vld.sshfl [vmem:[#allocation1 + $0x30] sm:$0xff pattern:$0x75316420]
    %v234 = vld.sshfl [vmem:[#allocation1 + $0x38] sm:$0xff pattern:$0x75316420]
    %235 = vst [vmem:[#allocation1] ss:$2 sm:$0xff] %v48
    %236 = vst [vmem:[%s149] ss:$2 sm:$0xff] %v49
    %237 = vst [vmem:[%s151] ss:$2 sm:$0xff] %v50
    %238 = vst [vmem:[%s153] ss:$2 sm:$0xff] %v51
    %v239 = vld.sshfl [vmem:[#allocation1] sm:$0xff pattern:$0x75316420]
    %v240 = vld.sshfl [vmem:[#allocation1 + $0x8] sm:$0xff pattern:$0x75316420]
    %v241 = vld.sshfl [vmem:[#allocation1 + $0x10] sm:$0xff pattern:$0x75316420]
    %v242 = vld.sshfl [vmem:[#allocation1 + $0x18] sm:$0xff pattern:$0x75316420]
    %v243 = vld.sshfl [vmem:[#allocation1 + $0x20] sm:$0xff pattern:$0x75316420]
    %v244 = vld.sshfl [vmem:[#allocation1 + $0x28] sm:$0xff pattern:$0x75316420]
    %v245 = vld.sshfl [vmem:[#allocation1 + $0x30] sm:$0xff pattern:$0x75316420]
    %v246 = vld.sshfl [vmem:[#allocation1 + $0x38] sm:$0xff pattern:$0x75316420]
    %247 = vst [vmem:[#allocation1] ss:$2 sm:$0xff] %v52
    %248 = vst [vmem:[%s149] ss:$2 sm:$0xff] %v53
    %249 = vst [vmem:[%s151] ss:$2 sm:$0xff] %v54
    %250 = vst [vmem:[%s153] ss:$2 sm:$0xff] %v55
    %v251 = vld.sshfl [vmem:[#allocation1] sm:$0xff pattern:$0x75316420]
    %v252 = vld.sshfl [vmem:[#allocation1 + $0x8] sm:$0xff pattern:$0x75316420]
    %v253 = vld.sshfl [vmem:[#allocation1 + $0x10] sm:$0xff pattern:$0x75316420]
    %v254 = vld.sshfl [vmem:[#allocation1 + $0x18] sm:$0xff pattern:$0x75316420]
    %v255 = vld.sshfl [vmem:[#allocation1 + $0x20] sm:$0xff pattern:$0x75316420]
    %v256 = vld.sshfl [vmem:[#allocation1 + $0x28] sm:$0xff pattern:$0x75316420]
    %v257 = vld.sshfl [vmem:[#allocation1 + $0x30] sm:$0xff pattern:$0x75316420]
    %v258 = vld.sshfl [vmem:[#allocation1 + $0x38] sm:$0xff pattern:$0x75316420]
    %259 = vst [vmem:[#allocation1] ss:$2 sm:$0xff] %v56
    %260 = vst [vmem:[%s149] ss:$2 sm:$0xff] %v57
    %261 = vst [vmem:[%s151] ss:$2 sm:$0xff] %v58
    %262 = vst [vmem:[%s153] ss:$2 sm:$0xff] %v59
    %v263 = vld.sshfl [vmem:[#allocation1] sm:$0xff pattern:$0x75316420]
    %v264 = vld.sshfl [vmem:[#allocation1 + $0x8] sm:$0xff pattern:$0x75316420]
    %v265 = vld.sshfl [vmem:[#allocation1 + $0x10] sm:$0xff pattern:$0x75316420]
    %v266 = vld.sshfl [vmem:[#allocation1 + $0x18] sm:$0xff pattern:$0x75316420]
    %v267 = vld.sshfl [vmem:[#allocation1 + $0x20] sm:$0xff pattern:$0x75316420]
    %v268 = vld.sshfl [vmem:[#allocation1 + $0x28] sm:$0xff pattern:$0x75316420]
    %v269 = vld.sshfl [vmem:[#allocation1 + $0x30] sm:$0xff pattern:$0x75316420]
    %v270 = vld.sshfl [vmem:[#allocation1 + $0x38] sm:$0xff pattern:$0x75316420]
    %271 = vst [vmem:[#allocation1] ss:$2 sm:$0xff] %v60
    %272 = vst [vmem:[%s149] ss:$2 sm:$0xff] %v61
    %273 = vst [vmem:[%s151] ss:$2 sm:$0xff] %v62
    %274 = vst [vmem:[%s153] ss:$2 sm:$0xff] %v63
    %v275 = vld.sshfl [vmem:[#allocation1] sm:$0xff pattern:$0x75316420]
    %v276 = vld.sshfl [vmem:[#allocation1 + $0x8] sm:$0xff pattern:$0x75316420]
    %v277 = vld.sshfl [vmem:[#allocation1 + $0x10] sm:$0xff pattern:$0x75316420]
    %v278 = vld.sshfl [vmem:[#allocation1 + $0x18] sm:$0xff pattern:$0x75316420]
    %v279 = vld.sshfl [vmem:[#allocation1 + $0x20] sm:$0xff pattern:$0x75316420]
    %v280 = vld.sshfl [vmem:[#allocation1 + $0x28] sm:$0xff pattern:$0x75316420]
    %v281 = vld.sshfl [vmem:[#allocation1 + $0x30] sm:$0xff pattern:$0x75316420]
    %v282 = vld.sshfl [vmem:[#allocation1 + $0x38] sm:$0xff pattern:$0x75316420]
    %283 = vst [vmem:[#allocation1] ss:$2 sm:$0xff] %v64
    %284 = vst [vmem:[%s149] ss:$2 sm:$0xff] %v65
    %285 = vst [vmem:[%s151] ss:$2 sm:$0xff] %v66
    %286 = vst [vmem:[%s153] ss:$2 sm:$0xff] %v67
    %v287 = vld.sshfl [vmem:[#allocation1] sm:$0xff pattern:$0x75316420]
    %v288 = vld.sshfl [vmem:[#allocation1 + $0x8] sm:$0xff pattern:$0x75316420]
    %v289 = vld.sshfl [vmem:[#allocation1 + $0x10] sm:$0xff pattern:$0x75316420]
    %v290 = vld.sshfl [vmem:[#allocation1 + $0x18] sm:$0xff pattern:$0x75316420]
    %v291 = vld.sshfl [vmem:[#allocation1 + $0x20] sm:$0xff pattern:$0x75316420]
    %v292 = vld.sshfl [vmem:[#allocation1 + $0x28] sm:$0xff pattern:$0x75316420]
    %v293 = vld.sshfl [vmem:[#allocation1 + $0x30] sm:$0xff pattern:$0x75316420]
    %v294 = vld.sshfl [vmem:[#allocation1 + $0x38] sm:$0xff pattern:$0x75316420]
    %295 = vst [vmem:[#allocation1] ss:$2 sm:$0xff] %v68
    %296 = vst [vmem:[%s149] ss:$2 sm:$0xff] %v69
    %297 = vst [vmem:[%s151] ss:$2 sm:$0xff] %v70
    %298 = vst [vmem:[%s153] ss:$2 sm:$0xff] %v71
    %v299 = vld.sshfl [vmem:[#allocation1] sm:$0xff pattern:$0x75316420]
    %v300 = vld.sshfl [vmem:[#allocation1 + $0x8] sm:$0xff pattern:$0x75316420]
    %v301 = vld.sshfl [vmem:[#allocation1 + $0x10] sm:$0xff pattern:$0x75316420]
    %v302 = vld.sshfl [vmem:[#allocation1 + $0x18] sm:$0xff pattern:$0x75316420]
    %v303 = vld.sshfl [vmem:[#allocation1 + $0x20] sm:$0xff pattern:$0x75316420]
    %v304 = vld.sshfl [vmem:[#allocation1 + $0x28] sm:$0xff pattern:$0x75316420]
    %v305 = vld.sshfl [vmem:[#allocation1 + $0x30] sm:$0xff pattern:$0x75316420]
    %v306 = vld.sshfl [vmem:[#allocation1 + $0x38] sm:$0xff pattern:$0x75316420]
    %307 = vst [vmem:[#allocation1] ss:$2 sm:$0xff] %v72
    %308 = vst [vmem:[%s149] ss:$2 sm:$0xff] %v73
    %309 = vst [vmem:[%s151] ss:$2 sm:$0xff] %v74
    %310 = vst [vmem:[%s153] ss:$2 sm:$0xff] %v75
    %v311 = vld.sshfl [vmem:[#allocation1] sm:$0xff pattern:$0x75316420]
    %v312 = vld.sshfl [vmem:[#allocation1 + $0x8] sm:$0xff pattern:$0x75316420]
    %v313 = vld.sshfl [vmem:[#allocation1 + $0x10] sm:$0xff pattern:$0x75316420]
    %v314 = vld.sshfl [vmem:[#allocation1 + $0x18] sm:$0xff pattern:$0x75316420]
    %v315 = vld.sshfl [vmem:[#allocation1 + $0x20] sm:$0xff pattern:$0x75316420]
    %v316 = vld.sshfl [vmem:[#allocation1 + $0x28] sm:$0xff pattern:$0x75316420]
    %v317 = vld.sshfl [vmem:[#allocation1 + $0x30] sm:$0xff pattern:$0x75316420]
    %v318 = vld.sshfl [vmem:[#allocation1 + $0x38] sm:$0xff pattern:$0x75316420]
    %319 = vst [vmem:[#allocation1] ss:$2 sm:$0xff] %v76
    %320 = vst [vmem:[%s149] ss:$2 sm:$0xff] %v77
    %321 = vst [vmem:[%s151] ss:$2 sm:$0xff] %v78
    %322 = vst [vmem:[%s153] ss:$2 sm:$0xff] %v79
    %v323 = vld.sshfl [vmem:[#allocation1] sm:$0xff pattern:$0x75316420]
    %v324 = vld.sshfl [vmem:[#allocation1 + $0x8] sm:$0xff pattern:$0x75316420]
    %v325 = vld.sshfl [vmem:[#allocation1 + $0x10] sm:$0xff pattern:$0x75316420]
    %v326 = vld.sshfl [vmem:[#allocation1 + $0x18] sm:$0xff pattern:$0x75316420]
    %v327 = vld.sshfl [vmem:[#allocation1 + $0x20] sm:$0xff pattern:$0x75316420]
    %v328 = vld.sshfl [vmem:[#allocation1 + $0x28] sm:$0xff pattern:$0x75316420]
    %v329 = vld.sshfl [vmem:[#allocation1 + $0x30] sm:$0xff pattern:$0x75316420]
    %v330 = vld.sshfl [vmem:[#allocation1 + $0x38] sm:$0xff pattern:$0x75316420]
    %331 = vst [vmem:[#allocation1] ss:$2 sm:$0xff] %v80
    %332 = vst [vmem:[%s149] ss:$2 sm:$0xff] %v81
    %333 = vst [vmem:[%s151] ss:$2 sm:$0xff] %v82
    %334 = vst [vmem:[%s153] ss:$2 sm:$0xff] %v83
    %v335 = vld.sshfl [vmem:[#allocation1] sm:$0xff pattern:$0x75316420]
    %v336 = vld.sshfl [vmem:[#allocation1 + $0x8] sm:$0xff pattern:$0x75316420]
    %v337 = vld.sshfl [vmem:[#allocation1 + $0x10] sm:$0xff pattern:$0x75316420]
    %v338 = vld.sshfl [vmem:[#allocation1 + $0x18] sm:$0xff pattern:$0x75316420]
    %v339 = vld.sshfl [vmem:[#allocation1 + $0x20] sm:$0xff pattern:$0x75316420]
    %v340 = vld.sshfl [vmem:[#allocation1 + $0x28] sm:$0xff pattern:$0x75316420]
    %v341 = vld.sshfl [vmem:[#allocation1 + $0x30] sm:$0xff pattern:$0x75316420]
    %v342 = vld.sshfl [vmem:[#allocation1 + $0x38] sm:$0xff pattern:$0x75316420]
    %vm471 = vcmask 1042432
    %v472 = vsel %vm471, %v155, 0.0
    %v473 = vsel %vm471, %v156, 0.0
    %v474 = vadd.f32 %v472, %v473
    %v475 = vsel %vm471, %v157, 0.0
    %v476 = vadd.f32 %v474, %v475
    %v477 = vsel %vm471, %v158, 0.0
    %v478 = vadd.f32 %v476, %v477
    %v479 = vsel %vm471, %v159, 0.0
    %v480 = vadd.f32 %v478, %v479
    %v481 = vsel %vm471, %v160, 0.0
    %v482 = vadd.f32 %v480, %v481
    %v483 = vsel %vm471, %v161, 0.0
    %v484 = vadd.f32 %v482, %v483
    %v485 = vsel %vm471, %v162, 0.0
    %v486 = vadd.f32 %v484, %v485
    %487 = vadd.xlane.f32.xlu0 %v486
    %v488 = vpop.xlane.xlu0 %487
    %v489 = vsel %vm471, %v167, 0.0
    %v490 = vsel %vm471, %v168, 0.0
    %v491 = vadd.f32 %v489, %v490
    %v492 = vsel %vm471, %v169, 0.0
    %v493 = vadd.f32 %v491, %v492
    %v494 = vsel %vm471, %v170, 0.0
    %v495 = vadd.f32 %v493, %v494
    %v496 = vsel %vm471, %v171, 0.0
    %v497 = vadd.f32 %v495, %v496
    %v498 = vsel %vm471, %v172, 0.0
    %v499 = vadd.f32 %v497, %v498
    %v500 = vsel %vm471, %v173, 0.0
    %v501 = vadd.f32 %v499, %v500
    %v502 = vsel %vm471, %v174, 0.0
    %v503 = vadd.f32 %v501, %v502
    %504 = vadd.xlane.f32.xlu0 %v503
    %v505 = vpop.xlane.xlu0 %504
    %v506 = vsel %vm471, %v179, 0.0
    %v507 = vsel %vm471, %v180, 0.0
    %v508 = vadd.f32 %v506, %v507
    %v509 = vsel %vm471, %v181, 0.0
    %v510 = vadd.f32 %v508, %v509
    %v511 = vsel %vm471, %v182, 0.0
    %v512 = vadd.f32 %v510, %v511
    %v513 = vsel %vm471, %v183, 0.0
    %v514 = vadd.f32 %v512, %v513
    %v515 = vsel %vm471, %v184, 0.0
    %v516 = vadd.f32 %v514, %v515
    %v517 = vsel %vm471, %v185, 0.0
    %v518 = vadd.f32 %v516, %v517
    %v519 = vsel %vm471, %v186, 0.0
    %v520 = vadd.f32 %v518, %v519
    %521 = vadd.xlane.f32.xlu0 %v520
    %v522 = vpop.xlane.xlu0 %521
    %v523 = vsel %vm471, %v191, 0.0
    %v524 = vsel %vm471, %v192, 0.0
    %v525 = vadd.f32 %v523, %v524
    %v526 = vsel %vm471, %v193, 0.0
    %v527 = vadd.f32 %v525, %v526
    %v528 = vsel %vm471, %v194, 0.0
    %v529 = vadd.f32 %v527, %v528
    %v530 = vsel %vm471, %v195, 0.0
    %v531 = vadd.f32 %v529, %v530
    %v532 = vsel %vm471, %v196, 0.0
    %v533 = vadd.f32 %v531, %v532
    %v534 = vsel %vm471, %v197, 0.0
    %v535 = vadd.f32 %v533, %v534
    %v536 = vsel %vm471, %v198, 0.0
    %v537 = vadd.f32 %v535, %v536
    %538 = vadd.xlane.f32.xlu0 %v537
    %v539 = vpop.xlane.xlu0 %538
    %v540 = vsel %vm471, %v203, 0.0
    %v541 = vsel %vm471, %v204, 0.0
    %v542 = vadd.f32 %v540, %v541
    %v543 = vsel %vm471, %v205, 0.0
    %v544 = vadd.f32 %v542, %v543
    %v545 = vsel %vm471, %v206, 0.0
    %v546 = vadd.f32 %v544, %v545
    %v547 = vsel %vm471, %v207, 0.0
    %v548 = vadd.f32 %v546, %v547
    %v549 = vsel %vm471, %v208, 0.0
    %v550 = vadd.f32 %v548, %v549
    %v551 = vsel %vm471, %v209, 0.0
    %v552 = vadd.f32 %v550, %v551
    %v553 = vsel %vm471, %v210, 0.0
    %v554 = vadd.f32 %v552, %v553
    %555 = vadd.xlane.f32.xlu0 %v554
    %v556 = vpop.xlane.xlu0 %555
    %v557 = vsel %vm471, %v215, 0.0
    %v558 = vsel %vm471, %v216, 0.0
    %v559 = vadd.f32 %v557, %v558
    %v560 = vsel %vm471, %v217, 0.0
    %v561 = vadd.f32 %v559, %v560
    %v562 = vsel %vm471, %v218, 0.0
    %v563 = vadd.f32 %v561, %v562
    %v564 = vsel %vm471, %v219, 0.0
    %v565 = vadd.f32 %v563, %v564
    %v566 = vsel %vm471, %v220, 0.0
    %v567 = vadd.f32 %v565, %v566
    %v568 = vsel %vm471, %v221, 0.0
    %v569 = vadd.f32 %v567, %v568
    %v570 = vsel %vm471, %v222, 0.0
    %v571 = vadd.f32 %v569, %v570
    %572 = vadd.xlane.f32.xlu0 %v571
    %v573 = vpop.xlane.xlu0 %572
    %v574 = vsel %vm471, %v227, 0.0
    %v575 = vsel %vm471, %v228, 0.0
    %v576 = vadd.f32 %v574, %v575
    %v577 = vsel %vm471, %v229, 0.0
    %v578 = vadd.f32 %v576, %v577
    %v579 = vsel %vm471, %v230, 0.0
    %v580 = vadd.f32 %v578, %v579
    %v581 = vsel %vm471, %v231, 0.0
    %v582 = vadd.f32 %v580, %v581
    %v583 = vsel %vm471, %v232, 0.0
    %v584 = vadd.f32 %v582, %v583
    %v585 = vsel %vm471, %v233, 0.0
    %v586 = vadd.f32 %v584, %v585
    %v587 = vsel %vm471, %v234, 0.0
    %v588 = vadd.f32 %v586, %v587
    %589 = vadd.xlane.f32.xlu0 %v588
    %v590 = vpop.xlane.xlu0 %589
    %v591 = vsel %vm471, %v239, 0.0
    %v592 = vsel %vm471, %v240, 0.0
    %v593 = vadd.f32 %v591, %v592
    %v594 = vsel %vm471, %v241, 0.0
    %v595 = vadd.f32 %v593, %v594
    %v596 = vsel %vm471, %v242, 0.0
    %v597 = vadd.f32 %v595, %v596
    %v598 = vsel %vm471, %v243, 0.0
    %v599 = vadd.f32 %v597, %v598
    %v600 = vsel %vm471, %v244, 0.0
    %v601 = vadd.f32 %v599, %v600
    %v602 = vsel %vm471, %v245, 0.0
    %v603 = vadd.f32 %v601, %v602
    %v604 = vsel %vm471, %v246, 0.0
    %v605 = vadd.f32 %v603, %v604
    %606 = vadd.xlane.f32.xlu0 %v605
    %v607 = vpop.xlane.xlu0 %606
    %v608 = vsel %vm471, %v251, 0.0
    %v609 = vsel %vm471, %v252, 0.0
    %v610 = vadd.f32 %v608, %v609
    %v611 = vsel %vm471, %v253, 0.0
    %v612 = vadd.f32 %v610, %v611
    %v613 = vsel %vm471, %v254, 0.0
    %v614 = vadd.f32 %v612, %v613
    %v615 = vsel %vm471, %v255, 0.0
    %v616 = vadd.f32 %v614, %v615
    %v617 = vsel %vm471, %v256, 0.0
    %v618 = vadd.f32 %v616, %v617
    %v619 = vsel %vm471, %v257, 0.0
    %v620 = vadd.f32 %v618, %v619
    %v621 = vsel %vm471, %v258, 0.0
    %v622 = vadd.f32 %v620, %v621
    %623 = vadd.xlane.f32.xlu0 %v622
    %v624 = vpop.xlane.xlu0 %623
    %v625 = vsel %vm471, %v263, 0.0
    %v626 = vsel %vm471, %v264, 0.0
    %v627 = vadd.f32 %v625, %v626
    %v628 = vsel %vm471, %v265, 0.0
    %v629 = vadd.f32 %v627, %v628
    %v630 = vsel %vm471, %v266, 0.0
    %v631 = vadd.f32 %v629, %v630
    %v632 = vsel %vm471, %v267, 0.0
    %v633 = vadd.f32 %v631, %v632
    %v634 = vsel %vm471, %v268, 0.0
    %v635 = vadd.f32 %v633, %v634
    %v636 = vsel %vm471, %v269, 0.0
    %v637 = vadd.f32 %v635, %v636
    %v638 = vsel %vm471, %v270, 0.0
    %v639 = vadd.f32 %v637, %v638
    %640 = vadd.xlane.f32.xlu0 %v639
    %v641 = vpop.xlane.xlu0 %640
    %v642 = vsel %vm471, %v275, 0.0
    %v643 = vsel %vm471, %v276, 0.0
    %v644 = vadd.f32 %v642, %v643
    %v645 = vsel %vm471, %v277, 0.0
    %v646 = vadd.f32 %v644, %v645
    %v647 = vsel %vm471, %v278, 0.0
    %v648 = vadd.f32 %v646, %v647
    %v649 = vsel %vm471, %v279, 0.0
    %v650 = vadd.f32 %v648, %v649
    %v651 = vsel %vm471, %v280, 0.0
    %v652 = vadd.f32 %v650, %v651
    %v653 = vsel %vm471, %v281, 0.0
    %v654 = vadd.f32 %v652, %v653
    %v655 = vsel %vm471, %v282, 0.0
    %v656 = vadd.f32 %v654, %v655
    %657 = vadd.xlane.f32.xlu0 %v656
    %v658 = vpop.xlane.xlu0 %657
    %v659 = vsel %vm471, %v287, 0.0
    %v660 = vsel %vm471, %v288, 0.0
    %v661 = vadd.f32 %v659, %v660
    %v662 = vsel %vm471, %v289, 0.0
    %v663 = vadd.f32 %v661, %v662
    %v664 = vsel %vm471, %v290, 0.0
    %v665 = vadd.f32 %v663, %v664
    %v666 = vsel %vm471, %v291, 0.0
    %v667 = vadd.f32 %v665, %v666
    %v668 = vsel %vm471, %v292, 0.0
    %v669 = vadd.f32 %v667, %v668
    %v670 = vsel %vm471, %v293, 0.0
    %v671 = vadd.f32 %v669, %v670
    %v672 = vsel %vm471, %v294, 0.0
    %v673 = vadd.f32 %v671, %v672
    %674 = vadd.xlane.f32.xlu0 %v673
    %v675 = vpop.xlane.xlu0 %674
    %v676 = vsel %vm471, %v299, 0.0
    %v677 = vsel %vm471, %v300, 0.0
    %v678 = vadd.f32 %v676, %v677
    %v679 = vsel %vm471, %v301, 0.0
    %v680 = vadd.f32 %v678, %v679
    %v681 = vsel %vm471, %v302, 0.0
    %v682 = vadd.f32 %v680, %v681
    %v683 = vsel %vm471, %v303, 0.0
    %v684 = vadd.f32 %v682, %v683
    %v685 = vsel %vm471, %v304, 0.0
    %v686 = vadd.f32 %v684, %v685
    %v687 = vsel %vm471, %v305, 0.0
    %v688 = vadd.f32 %v686, %v687
    %v689 = vsel %vm471, %v306, 0.0
    %v690 = vadd.f32 %v688, %v689
    %691 = vadd.xlane.f32.xlu0 %v690
    %v692 = vpop.xlane.xlu0 %691
    %v693 = vsel %vm471, %v311, 0.0
    %v694 = vsel %vm471, %v312, 0.0
    %v695 = vadd.f32 %v693, %v694
    %v696 = vsel %vm471, %v313, 0.0
    %v697 = vadd.f32 %v695, %v696
    %v698 = vsel %vm471, %v314, 0.0
    %v699 = vadd.f32 %v697, %v698
    %v700 = vsel %vm471, %v315, 0.0
    %v701 = vadd.f32 %v699, %v700
    %v702 = vsel %vm471, %v316, 0.0
    %v703 = vadd.f32 %v701, %v702
    %v704 = vsel %vm471, %v317, 0.0
    %v705 = vadd.f32 %v703, %v704
    %v706 = vsel %vm471, %v318, 0.0
    %v707 = vadd.f32 %v705, %v706
    %708 = vadd.xlane.f32.xlu0 %v707
    %v709 = vpop.xlane.xlu0 %708
    %v710 = vsel %vm471, %v323, 0.0
    %v711 = vsel %vm471, %v324, 0.0
    %v712 = vadd.f32 %v710, %v711
    %v713 = vsel %vm471, %v325, 0.0
    %v714 = vadd.f32 %v712, %v713
    %v715 = vsel %vm471, %v326, 0.0
    %v716 = vadd.f32 %v714, %v715
    %v717 = vsel %vm471, %v327, 0.0
    %v718 = vadd.f32 %v716, %v717
    %v719 = vsel %vm471, %v328, 0.0
    %v720 = vadd.f32 %v718, %v719
    %v721 = vsel %vm471, %v329, 0.0
    %v722 = vadd.f32 %v720, %v721
    %v723 = vsel %vm471, %v330, 0.0
    %v724 = vadd.f32 %v722, %v723
    %725 = vadd.xlane.f32.xlu0 %v724
    %v726 = vpop.xlane.xlu0 %725
    %v727 = vsel %vm471, %v335, 0.0
    %v728 = vsel %vm471, %v336, 0.0
    %v729 = vadd.f32 %v727, %v728
    %v730 = vsel %vm471, %v337, 0.0
    %v731 = vadd.f32 %v729, %v730
    %v732 = vsel %vm471, %v338, 0.0
    %v733 = vadd.f32 %v731, %v732
    %v734 = vsel %vm471, %v339, 0.0
    %v735 = vadd.f32 %v733, %v734
    %v736 = vsel %vm471, %v340, 0.0
    %v737 = vadd.f32 %v735, %v736
    %v738 = vsel %vm471, %v341, 0.0
    %v739 = vadd.f32 %v737, %v738
    %v740 = vsel %vm471, %v342, 0.0
    %v741 = vadd.f32 %v739, %v740
    %742 = vadd.xlane.f32.xlu0 %v741
    %v743 = vpop.xlane.xlu0 %742
    %v744 = vrcp.pop 1024.0
    %v745 = vmul.f32 1024.0, %v744
    %v746 = vsub.f32 1.0, %v745
    %v747 = vmul.f32 %v744, %v746
    %v748 = vadd.f32 %v744, %v747
    %vm749 = vweird.f32 %v744
    %v750 = vsel %vm749, %v744, %v748
    %v751 = vmul.f32 %v488, %v750
    %v752 = vmul.f32 %v505, %v750
    %v753 = vmul.f32 %v522, %v750
    %v754 = vmul.f32 %v539, %v750
    %v755 = vmul.f32 %v556, %v750
    %v756 = vmul.f32 %v573, %v750
    %v757 = vmul.f32 %v590, %v750
    %v758 = vmul.f32 %v607, %v750
    %v759 = vmul.f32 %v624, %v750
    %v760 = vmul.f32 %v641, %v750
    %v761 = vmul.f32 %v658, %v750
    %v762 = vmul.f32 %v675, %v750
    %v763 = vmul.f32 %v692, %v750
    %v764 = vmul.f32 %v709, %v750
    %v765 = vmul.f32 %v726, %v750
    %v766 = vmul.f32 %v743, %v750
    %v767 = vld [vmem:[%s1] sm:$0x77]
    %v768 = vperm.slane %v18, 0
    %v769 = vperm.slane %v19, 0
    %v786 = vlaneseq
    %v787 = vand.u32 %v786, 127
    %v788 = vperm.slane %v751, %v787
    %v789 = vperm.slane %v752, %v787
    %v790 = vperm.slane %v753, %v787
    %v791 = vperm.slane %v754, %v787
    %v792 = vperm.slane %v755, %v787
    %v793 = vperm.slane %v756, %v787
    %v794 = vperm.slane %v757, %v787
    %v795 = vperm.slane %v758, %v787
    %v796 = vperm.slane %v759, %v787
    %v797 = vperm.slane %v760, %v787
    %v798 = vperm.slane %v761, %v787
    %v799 = vperm.slane %v762, %v787
    %v800 = vperm.slane %v763, %v787
    %v801 = vperm.slane %v764, %v787
    %v802 = vperm.slane %v765, %v787
    %v803 = vperm.slane %v766, %v787
    %vm804 = vcmask 1041409
    %v805 = vsel %vm804, %v789, %v788
    %vm806 = vcmask 1042434
    %v807 = vsel %vm806, %v790, %v805
    %vm808 = vcmask 1043459
    %v809 = vsel %vm808, %v791, %v807
    %vm810 = vcmask 1044484
    %v811 = vsel %vm810, %v792, %v809
    %vm812 = vcmask 1045509
    %v813 = vsel %vm812, %v793, %v811
    %vm814 = vcmask 1046534
    %v815 = vsel %vm814, %v794, %v813
    %vm816 = vcmask 1047559
    %v817 = vsel %vm816, %v795, %v815
    %v818 = vsel %vm804, %v797, %v796
    %v819 = vsel %vm806, %v798, %v818
    %v820 = vsel %vm808, %v799, %v819
    %v821 = vsel %vm810, %v800, %v820
    %v822 = vsel %vm812, %v801, %v821
    %v823 = vsel %vm814, %v802, %v822
    %v824 = vsel %vm816, %v803, %v823
    %826 = vst [vmem:[#allocation1] ss:$2 sm:$0xff] %v767
    %v827 = vld.sshfl [vmem:[#allocation1] sm:$0xff pattern:$0x75316420]
    %v828 = vld.sshfl [vmem:[#allocation1 + $0x8] sm:$0xff pattern:$0x75316420]
    %vm829 = vcmask 23552
    %v830 = vsel %vm829, %v817, 0
    %v832 = vsel %vm829, %v824, 0
    %v834 = vsel %vm471, %v827, 0
    %v836 = vsel %vm471, %v828, 0
    %838 = vmatpush.msra.mxu0 0.0
    %839 = vmatpush.msra.mxu0 0.0
    %840 = vmatpush.msra.mxu0 0.0
    %841 = vmatpush.msra.mxu0 0.0
    %842 = vmatpush.msra.mxu0 0.0
    %843 = vmatpush.msra.mxu0 0.0
    %844 = vmatpush.msra.mxu0 0.0
    %845 = vmatpush.msra.mxu0 0.0
    %846 = vmatpush.msra.mxu0 0.0
    %847 = vmatpush.msra.mxu0 0.0
    %848 = vmatpush.msra.mxu0 0.0
    %849 = vmatpush.msra.mxu0 0.0
    %850 = vmatpush.msra.mxu0 0.0
    %851 = vmatpush.msra.mxu0 0.0
    %852 = vmatpush.msra.mxu0 0.0
    %853 = vmatpush.msra.mxu0 %v834
    %854 = vmatmul.f32.gmra.mxu0 %v830
    %v855 = vpop.f32.mrf.mxu0
    %v856 = vadd.f32 %v768, %v855
    %857 = vmatmul.f32.gmra.mxu0 %v832
    %v858 = vpop.f32.mrf.mxu0
    %v859 = vadd.f32 %v768, %v858
    %860 = vdwg.mxu0
    %861 = vmatpush.msra.mxu0 0.0
    %862 = vmatpush.msra.mxu0 0.0
    %863 = vmatpush.msra.mxu0 0.0
    %864 = vmatpush.msra.mxu0 0.0
    %865 = vmatpush.msra.mxu0 0.0
    %866 = vmatpush.msra.mxu0 0.0
    %867 = vmatpush.msra.mxu0 0.0
    %868 = vmatpush.msra.mxu0 0.0
    %869 = vmatpush.msra.mxu0 0.0
    %870 = vmatpush.msra.mxu0 0.0
    %871 = vmatpush.msra.mxu0 0.0
    %872 = vmatpush.msra.mxu0 0.0
    %873 = vmatpush.msra.mxu0 0.0
    %874 = vmatpush.msra.mxu0 0.0
    %875 = vmatpush.msra.mxu0 0.0
    %876 = vmatpush.msra.mxu0 %v836
    %877 = vmatmul.f32.gmra.mxu0 %v830
    %v878 = vpop.f32.mrf.mxu0
    %v879 = vadd.f32 %v769, %v878
    %880 = vmatmul.f32.gmra.mxu0 %v832
    %v881 = vpop.f32.mrf.mxu0
    %v882 = vadd.f32 %v769, %v881
    %883 = vdwg.mxu0
    %v884 = vmul.f32 %v856, %v856
    %v885 = vmul.f32 %v879, %v879
    %v886 = vmul.f32 %v859, %v859
    %v887 = vmul.f32 %v882, %v882
    %v888 = vadd.f32 %v884, %v885
    %889 = vadd.xlane.f32.xlu0 %v888
    %v890 = vpop.xlane.xlu0 %889
    %v891 = vadd.f32 %v886, %v887
    %892 = vadd.xlane.f32.xlu0 %v891
    %v893 = vpop.xlane.xlu0 %892
    %v894 = vmax.f32 %v890, 1e-24
    %v895 = vmax.f32 %v893, 1e-24
    %v896 = vrsqrt.pop %v894
    %v897 = vmul.f32 %v896, %v894
    %v898 = vmul.f32 %v897, %v896
    %v899 = vmul.f32 0.5, %v898
    %v900 = vsub.f32 1.5, %v899
    %v901 = vmul.f32 %v896, %v900
    %vm902 = vweird.f32 %v894
    %vm903 = vweird.f32 %v896
    %vm904 = vmor %vm902, %vm903
    %v905 = vsel %vm904, %v896, %v901
    %v906 = vrsqrt.pop %v895
    %v907 = vmul.f32 %v906, %v895
    %v908 = vmul.f32 %v907, %v906
    %v909 = vmul.f32 0.5, %v908
    %v910 = vsub.f32 1.5, %v909
    %v911 = vmul.f32 %v906, %v910
    %vm912 = vweird.f32 %v895
    %vm913 = vweird.f32 %v906
    %vm914 = vmor %vm912, %vm913
    %v915 = vsel %vm914, %v906, %v911
    %v916 = vmul.f32 %v856, %v905
    %v917 = vmul.f32 %v879, %v905
    %v918 = vmul.f32 %v859, %v915
    %v919 = vmul.f32 %v882, %v915
    %920 = vmatpush.xpose.msra.mxu0 0.0
    %921 = vmatpush.xpose.msra.mxu0 0.0
    %922 = vmatpush.xpose.msra.mxu0 0.0
    %923 = vmatpush.xpose.msra.mxu0 0.0
    %924 = vmatpush.xpose.msra.mxu0 0.0
    %925 = vmatpush.xpose.msra.mxu0 0.0
    %926 = vmatpush.xpose.msra.mxu0 0.0
    %927 = vmatpush.xpose.msra.mxu0 0.0
    %928 = vmatpush.xpose.msra.mxu0 0.0
    %929 = vmatpush.xpose.msra.mxu0 0.0
    %930 = vmatpush.xpose.msra.mxu0 0.0
    %931 = vmatpush.xpose.msra.mxu0 0.0
    %932 = vmatpush.xpose.msra.mxu0 0.0
    %933 = vmatpush.xpose.msra.mxu0 0.0
    %934 = vmatpush.xpose.msra.mxu0 %v918
    %935 = vmatpush.xpose.msra.mxu0 %v916
    %936 = vmatmul.f32.gmra.mxu0 %v916
    %v937 = vpop.f32.mrf.mxu0
    %v938 = vadd.f32 0.0, %v937
    %939 = vmatmul.f32.gmra.mxu0 %v918
    %v940 = vpop.f32.mrf.mxu0
    %v941 = vadd.f32 0.0, %v940
    %942 = vdwg.mxu0
    %943 = vmatpush.xpose.msra.mxu0 0.0
    %944 = vmatpush.xpose.msra.mxu0 0.0
    %945 = vmatpush.xpose.msra.mxu0 0.0
    %946 = vmatpush.xpose.msra.mxu0 0.0
    %947 = vmatpush.xpose.msra.mxu0 0.0
    %948 = vmatpush.xpose.msra.mxu0 0.0
    %949 = vmatpush.xpose.msra.mxu0 0.0
    %950 = vmatpush.xpose.msra.mxu0 0.0
    %951 = vmatpush.xpose.msra.mxu0 0.0
    %952 = vmatpush.xpose.msra.mxu0 0.0
    %953 = vmatpush.xpose.msra.mxu0 0.0
    %954 = vmatpush.xpose.msra.mxu0 0.0
    %955 = vmatpush.xpose.msra.mxu0 0.0
    %956 = vmatpush.xpose.msra.mxu0 0.0
    %957 = vmatpush.xpose.msra.mxu0 %v919
    %958 = vmatpush.xpose.msra.mxu0 %v917
    %959 = vmatmul.f32.gmra.mxu0 %v917
    %v960 = vpop.f32.mrf.mxu0
    %v961 = vadd.f32 %v938, %v960
    %962 = vmatmul.f32.gmra.mxu0 %v919
    %v963 = vpop.f32.mrf.mxu0
    %v964 = vadd.f32 %v941, %v963
    %965 = vdwg.mxu0
    %v966 = vlaneseq
    %v967 = vshrl.u32 %v966, 7
    %v968 = vadd.s32 %v967, 8
    %vm969 = vcmp.eq.s32.totalorder %v967, %v787
    %vm970 = vcmp.eq.s32.totalorder %v968, %v787
    %v971 = vcvt.s32.f32 %v967
    %v972 = vcvt.s32.f32 %v968
    %v973 = vsel %vm969, -2.0, %v961
    %v974 = vsel %vm970, -2.0, %v964
    %vm975 = vcmask 130048
    %v976 = vsel %vm975, %v973, -inf
    %v977 = vsel %vm975, %v974, -inf
    %v978 = vmax.f32 %v976, %v977
    %v979 = vrot.slane %v978, 4
    %v980 = vmax.f32 %v978, %v979
    %v981 = vrot.slane %v980, 2
    %v982 = vmax.f32 %v980, %v981
    %v983 = vrot.slane %v982, 1
    %v984 = vmax.f32 %v982, %v983
    %vm985 = vcmp.ge.f32.partialorder %v973, %v984
    %vm986 = vcmp.ge.f32.partialorder %v974, %v984
    %v987 = vsel %vm985, %v971, 16.0
    %v988 = vsel %vm986, %v972, 16.0
    %v989 = vsel %vm975, %v987, inf
    %v990 = vsel %vm975, %v988, inf
    %v991 = vmin.f32 %v989, %v990
    %v992 = vrot.slane %v991, 4
    %v993 = vmin.f32 %v991, %v992
    %v994 = vrot.slane %v993, 2
    %v995 = vmin.f32 %v993, %v994
    %v996 = vrot.slane %v995, 1
    %v997 = vmin.f32 %v995, %v996
    %vm998 = vcmp.eq.f32.partialorder %v971, %v997
    %vm999 = vcmp.eq.f32.partialorder %v972, %v997
    %v1000 = vsel %vm998, 1.0, 0.0
    %v1001 = vsel %vm999, 1.0, 0.0
    %v1002 = vsel %vm998, -3.0, %v973
    %v1003 = vsel %vm999, -3.0, %v974
    %v1004 = vsel %vm975, %v1002, -inf
    %v1005 = vsel %vm975, %v1003, -inf
    %v1006 = vmax.f32 %v1004, %v1005
    %v1007 = vrot.slane %v1006, 4
    %v1008 = vmax.f32 %v1006, %v1007
    %v1009 = vrot.slane %v1008, 2
    %v1010 = vmax.f32 %v1008, %v1009
    %v1011 = vrot.slane %v1010, 1
    %v1012 = vmax.f32 %v1010, %v1011
    %vm1013 = vcmp.ge.f32.partialorder %v1002, %v1012
    %vm1014 = vcmp.ge.f32.partialorder %v1003, %v1012
    %v1015 = vsel %vm1013, %v971, 16.0
    %v1016 = vsel %vm1014, %v972, 16.0
    %v1017 = vsel %vm975, %v1015, inf
    %v1018 = vsel %vm975, %v1016, inf
    %v1019 = vmin.f32 %v1017, %v1018
    %v1020 = vrot.slane %v1019, 4
    %v1021 = vmin.f32 %v1019, %v1020
    %v1022 = vrot.slane %v1021, 2
    %v1023 = vmin.f32 %v1021, %v1022
    %v1024 = vrot.slane %v1023, 1
    %v1025 = vmin.f32 %v1023, %v1024
    %vm1026 = vcmp.eq.f32.partialorder %v971, %v1025
    %vm1027 = vcmp.eq.f32.partialorder %v972, %v1025
    %v1028 = vsel %vm1026, 1.0, %v1000
    %v1029 = vsel %vm1027, 1.0, %v1001
    %v1030 = vsel %vm1026, -3.0, %v1002
    %v1031 = vsel %vm1027, -3.0, %v1003
    %v1032 = vsel %vm975, %v1030, -inf
    %v1033 = vsel %vm975, %v1031, -inf
    %v1034 = vmax.f32 %v1032, %v1033
    %v1035 = vrot.slane %v1034, 4
    %v1036 = vmax.f32 %v1034, %v1035
    %v1037 = vrot.slane %v1036, 2
    %v1038 = vmax.f32 %v1036, %v1037
    %v1039 = vrot.slane %v1038, 1
    %v1040 = vmax.f32 %v1038, %v1039
    %vm1041 = vcmp.ge.f32.partialorder %v1030, %v1040
    %vm1042 = vcmp.ge.f32.partialorder %v1031, %v1040
    %v1043 = vsel %vm1041, %v971, 16.0
    %v1044 = vsel %vm1042, %v972, 16.0
    %v1045 = vsel %vm975, %v1043, inf
    %v1046 = vsel %vm975, %v1044, inf
    %v1047 = vmin.f32 %v1045, %v1046
    %v1048 = vrot.slane %v1047, 4
    %v1049 = vmin.f32 %v1047, %v1048
    %v1050 = vrot.slane %v1049, 2
    %v1051 = vmin.f32 %v1049, %v1050
    %v1052 = vrot.slane %v1051, 1
    %v1053 = vmin.f32 %v1051, %v1052
    %vm1054 = vcmp.eq.f32.partialorder %v971, %v1053
    %vm1055 = vcmp.eq.f32.partialorder %v972, %v1053
    %v1056 = vsel %vm1054, 1.0, %v1028
    %v1057 = vsel %vm1055, 1.0, %v1029
    %v1058 = vsel %vm1054, -3.0, %v1030
    %v1059 = vsel %vm1055, -3.0, %v1031
    %v1060 = vsel %vm975, %v1058, -inf
    %v1061 = vsel %vm975, %v1059, -inf
    %v1062 = vmax.f32 %v1060, %v1061
    %v1063 = vrot.slane %v1062, 4
    %v1064 = vmax.f32 %v1062, %v1063
    %v1065 = vrot.slane %v1064, 2
    %v1066 = vmax.f32 %v1064, %v1065
    %v1067 = vrot.slane %v1066, 1
    %v1068 = vmax.f32 %v1066, %v1067
    %vm1069 = vcmp.ge.f32.partialorder %v1058, %v1068
    %vm1070 = vcmp.ge.f32.partialorder %v1059, %v1068
    %v1071 = vsel %vm1069, %v971, 16.0
    %v1072 = vsel %vm1070, %v972, 16.0
    %v1073 = vsel %vm975, %v1071, inf
    %v1074 = vsel %vm975, %v1072, inf
    %v1075 = vmin.f32 %v1073, %v1074
    %v1076 = vrot.slane %v1075, 4
    %v1077 = vmin.f32 %v1075, %v1076
    %v1078 = vrot.slane %v1077, 2
    %v1079 = vmin.f32 %v1077, %v1078
    %v1080 = vrot.slane %v1079, 1
    %v1081 = vmin.f32 %v1079, %v1080
    %vm1082 = vcmp.eq.f32.partialorder %v971, %v1081
    %vm1083 = vcmp.eq.f32.partialorder %v972, %v1081
    %v1084 = vsel %vm1082, 1.0, %v1056
    %v1085 = vsel %vm1083, 1.0, %v1057
    %v1086 = vsel %vm1082, -3.0, %v1058
    %v1087 = vsel %vm1083, -3.0, %v1059
    %v1088 = vsel %vm975, %v1086, -inf
    %v1089 = vsel %vm975, %v1087, -inf
    %v1090 = vmax.f32 %v1088, %v1089
    %v1091 = vrot.slane %v1090, 4
    %v1092 = vmax.f32 %v1090, %v1091
    %v1093 = vrot.slane %v1092, 2
    %v1094 = vmax.f32 %v1092, %v1093
    %v1095 = vrot.slane %v1094, 1
    %v1096 = vmax.f32 %v1094, %v1095
    %vm1097 = vcmp.ge.f32.partialorder %v1086, %v1096
    %vm1098 = vcmp.ge.f32.partialorder %v1087, %v1096
    %v1099 = vsel %vm1097, %v971, 16.0
    %v1100 = vsel %vm1098, %v972, 16.0
    %v1101 = vsel %vm975, %v1099, inf
    %v1102 = vsel %vm975, %v1100, inf
    %v1103 = vmin.f32 %v1101, %v1102
    %v1104 = vrot.slane %v1103, 4
    %v1105 = vmin.f32 %v1103, %v1104
    %v1106 = vrot.slane %v1105, 2
    %v1107 = vmin.f32 %v1105, %v1106
    %v1108 = vrot.slane %v1107, 1
    %v1109 = vmin.f32 %v1107, %v1108
    %vm1110 = vcmp.eq.f32.partialorder %v971, %v1109
    %vm1111 = vcmp.eq.f32.partialorder %v972, %v1109
    %v1112 = vsel %vm1110, 1.0, %v1084
    %v1113 = vsel %vm1111, 1.0, %v1085
    %v1114 = vsel %vm1110, -3.0, %v1086
    %v1115 = vsel %vm1111, -3.0, %v1087
    %v1116 = vsel %vm975, %v1114, -inf
    %v1117 = vsel %vm975, %v1115, -inf
    %v1118 = vmax.f32 %v1116, %v1117
    %v1119 = vrot.slane %v1118, 4
    %v1120 = vmax.f32 %v1118, %v1119
    %v1121 = vrot.slane %v1120, 2
    %v1122 = vmax.f32 %v1120, %v1121
    %v1123 = vrot.slane %v1122, 1
    %v1124 = vmax.f32 %v1122, %v1123
    %vm1125 = vcmp.ge.f32.partialorder %v1114, %v1124
    %vm1126 = vcmp.ge.f32.partialorder %v1115, %v1124
    %v1127 = vsel %vm1125, %v971, 16.0
    %v1128 = vsel %vm1126, %v972, 16.0
    %v1129 = vsel %vm975, %v1127, inf
    %v1130 = vsel %vm975, %v1128, inf
    %v1131 = vmin.f32 %v1129, %v1130
    %v1132 = vrot.slane %v1131, 4
    %v1133 = vmin.f32 %v1131, %v1132
    %v1134 = vrot.slane %v1133, 2
    %v1135 = vmin.f32 %v1133, %v1134
    %v1136 = vrot.slane %v1135, 1
    %v1137 = vmin.f32 %v1135, %v1136
    %vm1138 = vcmp.eq.f32.partialorder %v971, %v1137
    %vm1139 = vcmp.eq.f32.partialorder %v972, %v1137
    %v1140 = vsel %vm1138, 1.0, %v1112
    %v1141 = vsel %vm1139, 1.0, %v1113
    %v1142 = vsel %vm1138, -3.0, %v1114
    %v1143 = vsel %vm1139, -3.0, %v1115
    %v1144 = vsel %vm975, %v1142, -inf
    %v1145 = vsel %vm975, %v1143, -inf
    %v1146 = vmax.f32 %v1144, %v1145
    %v1147 = vrot.slane %v1146, 4
    %v1148 = vmax.f32 %v1146, %v1147
    %v1149 = vrot.slane %v1148, 2
    %v1150 = vmax.f32 %v1148, %v1149
    %v1151 = vrot.slane %v1150, 1
    %v1152 = vmax.f32 %v1150, %v1151
    %vm1153 = vcmp.ge.f32.partialorder %v1142, %v1152
    %vm1154 = vcmp.ge.f32.partialorder %v1143, %v1152
    %v1155 = vsel %vm1153, %v971, 16.0
    %v1156 = vsel %vm1154, %v972, 16.0
    %v1157 = vsel %vm975, %v1155, inf
    %v1158 = vsel %vm975, %v1156, inf
    %v1159 = vmin.f32 %v1157, %v1158
    %v1160 = vrot.slane %v1159, 4
    %v1161 = vmin.f32 %v1159, %v1160
    %v1162 = vrot.slane %v1161, 2
    %v1163 = vmin.f32 %v1161, %v1162
    %v1164 = vrot.slane %v1163, 1
    %v1165 = vmin.f32 %v1163, %v1164
    %vm1166 = vcmp.eq.f32.partialorder %v971, %v1165
    %vm1167 = vcmp.eq.f32.partialorder %v972, %v1165
    %v1168 = vsel %vm1166, 1.0, %v1140
    %v1169 = vsel %vm1167, 1.0, %v1141
    %v1170 = vsel %vm1166, -3.0, %v1142
    %v1171 = vsel %vm1167, -3.0, %v1143
    %v1172 = vsel %vm975, %v1170, -inf
    %v1173 = vsel %vm975, %v1171, -inf
    %v1174 = vmax.f32 %v1172, %v1173
    %v1175 = vrot.slane %v1174, 4
    %v1176 = vmax.f32 %v1174, %v1175
    %v1177 = vrot.slane %v1176, 2
    %v1178 = vmax.f32 %v1176, %v1177
    %v1179 = vrot.slane %v1178, 1
    %v1180 = vmax.f32 %v1178, %v1179
    %vm1181 = vcmp.ge.f32.partialorder %v1170, %v1180
    %vm1182 = vcmp.ge.f32.partialorder %v1171, %v1180
    %v1183 = vsel %vm1181, %v971, 16.0
    %v1184 = vsel %vm1182, %v972, 16.0
    %v1185 = vsel %vm975, %v1183, inf
    %v1186 = vsel %vm975, %v1184, inf
    %v1187 = vmin.f32 %v1185, %v1186
    %v1188 = vrot.slane %v1187, 4
    %v1189 = vmin.f32 %v1187, %v1188
    %v1190 = vrot.slane %v1189, 2
    %v1191 = vmin.f32 %v1189, %v1190
    %v1192 = vrot.slane %v1191, 1
    %v1193 = vmin.f32 %v1191, %v1192
    %vm1194 = vcmp.eq.f32.partialorder %v971, %v1193
    %vm1195 = vcmp.eq.f32.partialorder %v972, %v1193
    %v1196 = vsel %vm1194, 1.0, %v1168
    %v1197 = vsel %vm1195, 1.0, %v1169
    %v1198 = vsel %vm1194, -3.0, %v1170
    %v1199 = vsel %vm1195, -3.0, %v1171
    %v1200 = vsel %vm975, %v1198, -inf
    %v1201 = vsel %vm975, %v1199, -inf
    %v1202 = vmax.f32 %v1200, %v1201
    %v1203 = vrot.slane %v1202, 4
    %v1204 = vmax.f32 %v1202, %v1203
    %v1205 = vrot.slane %v1204, 2
    %v1206 = vmax.f32 %v1204, %v1205
    %v1207 = vrot.slane %v1206, 1
    %v1208 = vmax.f32 %v1206, %v1207
    %vm1209 = vcmp.ge.f32.partialorder %v1198, %v1208
    %vm1210 = vcmp.ge.f32.partialorder %v1199, %v1208
    %v1211 = vsel %vm1209, %v971, 16.0
    %v1212 = vsel %vm1210, %v972, 16.0
    %v1213 = vsel %vm975, %v1211, inf
    %v1214 = vsel %vm975, %v1212, inf
    %v1215 = vmin.f32 %v1213, %v1214
    %v1216 = vrot.slane %v1215, 4
    %v1217 = vmin.f32 %v1215, %v1216
    %v1218 = vrot.slane %v1217, 2
    %v1219 = vmin.f32 %v1217, %v1218
    %v1220 = vrot.slane %v1219, 1
    %v1221 = vmin.f32 %v1219, %v1220
    %vm1222 = vcmp.eq.f32.partialorder %v971, %v1221
    %vm1223 = vcmp.eq.f32.partialorder %v972, %v1221
    %v1224 = vsel %vm1222, 1.0, %v1196
    %v1225 = vsel %vm1223, 1.0, %v1197
    %v1226 = vsel %vm1222, -3.0, %v1198
    %v1227 = vsel %vm1223, -3.0, %v1199
    %v1228 = vsel %vm975, %v1226, -inf
    %v1229 = vsel %vm975, %v1227, -inf
    %v1230 = vmax.f32 %v1228, %v1229
    %v1231 = vrot.slane %v1230, 4
    %v1232 = vmax.f32 %v1230, %v1231
    %v1233 = vrot.slane %v1232, 2
    %v1234 = vmax.f32 %v1232, %v1233
    %v1235 = vrot.slane %v1234, 1
    %v1236 = vmax.f32 %v1234, %v1235
    %vm1237 = vcmp.ge.f32.partialorder %v1226, %v1236
    %vm1238 = vcmp.ge.f32.partialorder %v1227, %v1236
    %v1239 = vsel %vm1237, %v971, 16.0
    %v1240 = vsel %vm1238, %v972, 16.0
    %v1241 = vsel %vm975, %v1239, inf
    %v1242 = vsel %vm975, %v1240, inf
    %v1243 = vmin.f32 %v1241, %v1242
    %v1244 = vrot.slane %v1243, 4
    %v1245 = vmin.f32 %v1243, %v1244
    %v1246 = vrot.slane %v1245, 2
    %v1247 = vmin.f32 %v1245, %v1246
    %v1248 = vrot.slane %v1247, 1
    %v1249 = vmin.f32 %v1247, %v1248
    %vm1250 = vcmp.eq.f32.partialorder %v971, %v1249
    %vm1251 = vcmp.eq.f32.partialorder %v972, %v1249
    %v1252 = vsel %vm1250, 1.0, %v1224
    %v1253 = vsel %vm1251, 1.0, %v1225
    %v1254 = vsel %vm969, 1.0, %v1252
    %v1255 = vsel %vm970, 1.0, %v1253
    %v1256 = vsel %vm975, %v1254, 0.0
    %1257 = vadd.xlane.f32.xlu0 %v1256
    %v1258 = vpop.xlane.xlu0 %1257
    %v1259 = vsel %vm975, %v1255, 0.0
    %1260 = vadd.xlane.f32.xlu0 %v1259
    %v1261 = vpop.xlane.xlu0 %1260
    %v1262 = vrsqrt.pop %v1258
    %v1263 = vmul.f32 %v1262, %v1258
    %v1264 = vmul.f32 %v1263, %v1262
    %v1265 = vmul.f32 0.5, %v1264
    %v1266 = vsub.f32 1.5, %v1265
    %v1267 = vmul.f32 %v1262, %v1266
    %vm1268 = vweird.f32 %v1258
    %vm1269 = vweird.f32 %v1262
    %vm1270 = vmor %vm1268, %vm1269
    %v1271 = vsel %vm1270, %v1262, %v1267
    %v1272 = vrsqrt.pop %v1261
    %v1273 = vmul.f32 %v1272, %v1261
    %v1274 = vmul.f32 %v1273, %v1272
    %v1275 = vmul.f32 0.5, %v1274
    %v1276 = vsub.f32 1.5, %v1275
    %v1277 = vmul.f32 %v1272, %v1276
    %vm1278 = vweird.f32 %v1261
    %vm1279 = vweird.f32 %v1272
    %vm1280 = vmor %vm1278, %vm1279
    %v1281 = vsel %vm1280, %v1272, %v1277
    %v1282 = vmul.f32 %v1254, %v1271
    %v1283 = vmul.f32 %v1255, %v1281
    %v1284 = vpack.c.bf16 %v918, %v916
    %v1285 = vpack.c.bf16 %v919, %v917
    %v1286 = vld [vmem:[%s3] sm:$0xff]
    %v1287 = vld [vmem:[%s3 + $0x8] sm:$0xff]
    %v1288 = vld [vmem:[%s3 + $0x10] sm:$0xff]
    %v1289 = vld [vmem:[%s3 + $0x18] sm:$0xff]
    %v1290 = vld [vmem:[%s3 + $0x20] sm:$0xff]
    %v1291 = vld [vmem:[%s3 + $0x28] sm:$0xff]
    %v1292 = vld [vmem:[%s3 + $0x30] sm:$0xff]
    %v1293 = vld [vmem:[%s3 + $0x38] sm:$0xff]
    %v1294 = vld [vmem:[%s3 + $0x40] sm:$0xff]
    %v1295 = vld [vmem:[%s3 + $0x48] sm:$0xff]
    %v1296 = vld [vmem:[%s3 + $0x50] sm:$0xff]
    %v1297 = vld [vmem:[%s3 + $0x58] sm:$0xff]
    %v1298 = vld [vmem:[%s3 + $0x60] sm:$0xff]
    %v1299 = vld [vmem:[%s3 + $0x68] sm:$0xff]
    %v1300 = vld [vmem:[%s3 + $0x70] sm:$0xff]
    %v1301 = vld [vmem:[%s3 + $0x78] sm:$0xff]
    %v1302 = vld [vmem:[%s3 + $0x80] sm:$0xff]
    %v1303 = vld [vmem:[%s3 + $0x88] sm:$0xff]
    %v1304 = vld [vmem:[%s3 + $0x90] sm:$0xff]
    %v1305 = vld [vmem:[%s3 + $0x98] sm:$0xff]
    %v1306 = vld [vmem:[%s3 + $0xa0] sm:$0xff]
    %v1307 = vld [vmem:[%s3 + $0xa8] sm:$0xff]
    %v1308 = vld [vmem:[%s3 + $0xb0] sm:$0xff]
    %v1309 = vld [vmem:[%s3 + $0xb8] sm:$0xff]
    %v1310 = vld [vmem:[%s3 + $0xc0] sm:$0xff]
    %v1311 = vld [vmem:[%s3 + $0xc8] sm:$0xff]
    %v1312 = vld [vmem:[%s3 + $0xd0] sm:$0xff]
    %v1313 = vld [vmem:[%s3 + $0xd8] sm:$0xff]
    %v1314 = vld [vmem:[%s3 + $0xe0] sm:$0xff]
    %v1315 = vld [vmem:[%s3 + $0xe8] sm:$0xff]
    %v1316 = vld [vmem:[%s3 + $0xf0] sm:$0xff]
    %v1317 = vld [vmem:[%s3 + $0xf8] sm:$0xff]
    %v1350 = vunpack.c.l.b16 %v1286
    %v1351 = vunpack.c.h.b16 %v1286
    %v1352 = vunpack.c.l.b16 %v1287
    %v1353 = vunpack.c.h.b16 %v1287
    %v1354 = vunpack.c.l.b16 %v1288
    %v1355 = vunpack.c.h.b16 %v1288
    %v1356 = vunpack.c.l.b16 %v1289
    %v1357 = vunpack.c.h.b16 %v1289
    %v1358 = vunpack.c.l.b16 %v1290
    %v1359 = vunpack.c.h.b16 %v1290
    %v1360 = vunpack.c.l.b16 %v1291
    %v1361 = vunpack.c.h.b16 %v1291
    %v1362 = vunpack.c.l.b16 %v1292
    %v1363 = vunpack.c.h.b16 %v1292
    %v1364 = vunpack.c.l.b16 %v1293
    %v1365 = vunpack.c.h.b16 %v1293
    %v1366 = vunpack.c.l.b16 %v1294
    %v1367 = vunpack.c.h.b16 %v1294
    %v1368 = vunpack.c.l.b16 %v1295
    %v1369 = vunpack.c.h.b16 %v1295
    %v1370 = vunpack.c.l.b16 %v1296
    %v1371 = vunpack.c.h.b16 %v1296
    %v1372 = vunpack.c.l.b16 %v1297
    %v1373 = vunpack.c.h.b16 %v1297
    %v1374 = vunpack.c.l.b16 %v1298
    %v1375 = vunpack.c.h.b16 %v1298
    %v1376 = vunpack.c.l.b16 %v1299
    %v1377 = vunpack.c.h.b16 %v1299
    %v1378 = vunpack.c.l.b16 %v1300
    %v1379 = vunpack.c.h.b16 %v1300
    %v1380 = vunpack.c.l.b16 %v1301
    %v1381 = vunpack.c.h.b16 %v1301
    %v1382 = vunpack.c.l.b16 %v1302
    %v1383 = vunpack.c.h.b16 %v1302
    %v1384 = vunpack.c.l.b16 %v1303
    %v1385 = vunpack.c.h.b16 %v1303
    %v1386 = vunpack.c.l.b16 %v1304
    %v1387 = vunpack.c.h.b16 %v1304
    %v1388 = vunpack.c.l.b16 %v1305
    %v1389 = vunpack.c.h.b16 %v1305
    %v1390 = vunpack.c.l.b16 %v1306
    %v1391 = vunpack.c.h.b16 %v1306
    %v1392 = vunpack.c.l.b16 %v1307
    %v1393 = vunpack.c.h.b16 %v1307
    %v1394 = vunpack.c.l.b16 %v1308
    %v1395 = vunpack.c.h.b16 %v1308
    %v1396 = vunpack.c.l.b16 %v1309
    %v1397 = vunpack.c.h.b16 %v1309
    %v1398 = vunpack.c.l.b16 %v1310
    %v1399 = vunpack.c.h.b16 %v1310
    %v1400 = vunpack.c.l.b16 %v1311
    %v1401 = vunpack.c.h.b16 %v1311
    %v1402 = vunpack.c.l.b16 %v1312
    %v1403 = vunpack.c.h.b16 %v1312
    %v1404 = vunpack.c.l.b16 %v1313
    %v1405 = vunpack.c.h.b16 %v1313
    %v1406 = vunpack.c.l.b16 %v1314
    %v1407 = vunpack.c.h.b16 %v1314
    %v1408 = vunpack.c.l.b16 %v1315
    %v1409 = vunpack.c.h.b16 %v1315
    %v1410 = vunpack.c.l.b16 %v1316
    %v1411 = vunpack.c.h.b16 %v1316
    %v1412 = vunpack.c.l.b16 %v1317
    %v1413 = vunpack.c.h.b16 %v1317
    %v1414 = vpack.c.b16 %v1352, %v1350
    %v1415 = vpack.c.b16 %v1353, %v1351
    %v1416 = vpack.c.b16 %v1356, %v1354
    %v1417 = vpack.c.b16 %v1357, %v1355
    %v1418 = vpack.c.b16 %v1360, %v1358
    %v1419 = vpack.c.b16 %v1361, %v1359
    %v1420 = vpack.c.b16 %v1364, %v1362
    %v1421 = vpack.c.b16 %v1365, %v1363
    %v1422 = vpack.c.b16 %v1368, %v1366
    %v1423 = vpack.c.b16 %v1369, %v1367
    %v1424 = vpack.c.b16 %v1372, %v1370
    %v1425 = vpack.c.b16 %v1373, %v1371
    %v1426 = vpack.c.b16 %v1376, %v1374
    %v1427 = vpack.c.b16 %v1377, %v1375
    %v1428 = vpack.c.b16 %v1380, %v1378
    %v1429 = vpack.c.b16 %v1381, %v1379
    %v1430 = vpack.c.b16 %v1384, %v1382
    %v1431 = vpack.c.b16 %v1385, %v1383
    %v1432 = vpack.c.b16 %v1388, %v1386
    %v1433 = vpack.c.b16 %v1389, %v1387
    %v1434 = vpack.c.b16 %v1392, %v1390
    %v1435 = vpack.c.b16 %v1393, %v1391
    %v1436 = vpack.c.b16 %v1396, %v1394
    %v1437 = vpack.c.b16 %v1397, %v1395
    %v1438 = vpack.c.b16 %v1400, %v1398
    %v1439 = vpack.c.b16 %v1401, %v1399
    %v1440 = vpack.c.b16 %v1404, %v1402
    %v1441 = vpack.c.b16 %v1405, %v1403
    %v1442 = vpack.c.b16 %v1408, %v1406
    %v1443 = vpack.c.b16 %v1409, %v1407
    %v1444 = vpack.c.b16 %v1412, %v1410
    %v1445 = vpack.c.b16 %v1413, %v1411
    %1478 = vmatpush.bf16.msra.mxu0 %v1428
    %1479 = vmatpush.bf16.msra.mxu0 %v1426
    %1480 = vmatpush.bf16.msra.mxu0 %v1424
    %1481 = vmatpush.bf16.msra.mxu0 %v1422
    %1482 = vmatpush.bf16.msra.mxu0 %v1420
    %1483 = vmatpush.bf16.msra.mxu0 %v1418
    %1484 = vmatpush.bf16.msra.mxu0 %v1416
    %1485 = vmatpush.bf16.msra.mxu0 %v1414
    %1486 = vmatmul.bf16.gmra.mxu0 %v1284
    %v1487 = vpop.f32.mrf.mxu0
    %v1488 = vadd.f32 0.0, %v1487
    %v1489 = vpop.f32.mrf.mxu0
    %v1490 = vadd.f32 0.0, %v1489
    %1491 = vdwg.mxu0
    %1492 = vmatpush.bf16.msra.mxu0 %v1444
    %1493 = vmatpush.bf16.msra.mxu0 %v1442
    %1494 = vmatpush.bf16.msra.mxu0 %v1440
    %1495 = vmatpush.bf16.msra.mxu0 %v1438
    %1496 = vmatpush.bf16.msra.mxu0 %v1436
    %1497 = vmatpush.bf16.msra.mxu0 %v1434
    %1498 = vmatpush.bf16.msra.mxu0 %v1432
    %1499 = vmatpush.bf16.msra.mxu0 %v1430
    %1500 = vmatmul.bf16.gmra.mxu0 %v1285
    %v1501 = vpop.f32.mrf.mxu0
    %v1502 = vadd.f32 %v1488, %v1501
    %v1503 = vpop.f32.mrf.mxu0
    %v1504 = vadd.f32 %v1490, %v1503
    %1505 = vdwg.mxu0
    %1506 = vmatpush.bf16.msra.mxu0 %v1429
    %1507 = vmatpush.bf16.msra.mxu0 %v1427
    %1508 = vmatpush.bf16.msra.mxu0 %v1425
    %1509 = vmatpush.bf16.msra.mxu0 %v1423
    %1510 = vmatpush.bf16.msra.mxu0 %v1421
    %1511 = vmatpush.bf16.msra.mxu0 %v1419
    %1512 = vmatpush.bf16.msra.mxu0 %v1417
    %1513 = vmatpush.bf16.msra.mxu0 %v1415
    %1514 = vmatmul.bf16.gmra.mxu0 %v1284
    %v1515 = vpop.f32.mrf.mxu0
    %v1516 = vadd.f32 0.0, %v1515
    %v1517 = vpop.f32.mrf.mxu0
    %v1518 = vadd.f32 0.0, %v1517
    %1519 = vdwg.mxu0
    %1520 = vmatpush.bf16.msra.mxu0 %v1445
    %1521 = vmatpush.bf16.msra.mxu0 %v1443
    %1522 = vmatpush.bf16.msra.mxu0 %v1441
    %1523 = vmatpush.bf16.msra.mxu0 %v1439
    %1524 = vmatpush.bf16.msra.mxu0 %v1437
    %1525 = vmatpush.bf16.msra.mxu0 %v1435
    %1526 = vmatpush.bf16.msra.mxu0 %v1433
    %1527 = vmatpush.bf16.msra.mxu0 %v1431
    %1528 = vmatmul.bf16.gmra.mxu0 %v1285
    %v1529 = vpop.f32.mrf.mxu0
    %v1530 = vadd.f32 %v1516, %v1529
    %v1531 = vpop.f32.mrf.mxu0
    %v1532 = vadd.f32 %v1518, %v1531
    %1533 = vdwg.mxu0
    %v1534 = vmul.f32 %v1271, %v1502
    %v1535 = vmul.f32 %v1271, %v1530
    %v1536 = vmul.f32 %v1281, %v1504
    %v1537 = vmul.f32 %v1281, %v1532
    %v1538 = vperm.slane %v18, 1
    %v1539 = vperm.slane %v19, 1
    %v1541 = vsel %vm975, %v1282, 0
    %v1544 = vsel %vm975, %v1283, 0
    %1546 = vmatpush.msra.mxu0 0.0
    %1547 = vmatpush.msra.mxu0 0.0
    %1548 = vmatpush.msra.mxu0 0.0
    %1549 = vmatpush.msra.mxu0 0.0
    %1550 = vmatpush.msra.mxu0 0.0
    %1551 = vmatpush.msra.mxu0 0.0
    %1552 = vmatpush.msra.mxu0 0.0
    %1553 = vmatpush.msra.mxu0 0.0
    %1554 = vmatpush.msra.mxu0 0.0
    %1555 = vmatpush.msra.mxu0 0.0
    %1556 = vmatpush.msra.mxu0 0.0
    %1557 = vmatpush.msra.mxu0 0.0
    %1558 = vmatpush.msra.mxu0 0.0
    %1559 = vmatpush.msra.mxu0 0.0
    %1560 = vmatpush.msra.mxu0 %v1536
    %1561 = vmatpush.msra.mxu0 %v1534
    %1562 = vmatmul.f32.gmra.mxu0 %v1541
    %v1563 = vpop.f32.mrf.mxu0
    %v1564 = vadd.f32 %v1538, %v1563
    %1565 = vmatmul.f32.gmra.mxu0 %v1544
    %v1566 = vpop.f32.mrf.mxu0
    %v1567 = vadd.f32 %v1538, %v1566
    %1568 = vdwg.mxu0
    %1569 = vmatpush.msra.mxu0 0.0
    %1570 = vmatpush.msra.mxu0 0.0
    %1571 = vmatpush.msra.mxu0 0.0
    %1572 = vmatpush.msra.mxu0 0.0
    %1573 = vmatpush.msra.mxu0 0.0
    %1574 = vmatpush.msra.mxu0 0.0
    %1575 = vmatpush.msra.mxu0 0.0
    %1576 = vmatpush.msra.mxu0 0.0
    %1577 = vmatpush.msra.mxu0 0.0
    %1578 = vmatpush.msra.mxu0 0.0
    %1579 = vmatpush.msra.mxu0 0.0
    %1580 = vmatpush.msra.mxu0 0.0
    %1581 = vmatpush.msra.mxu0 0.0
    %1582 = vmatpush.msra.mxu0 0.0
    %1583 = vmatpush.msra.mxu0 %v1537
    %1584 = vmatpush.msra.mxu0 %v1535
    %1585 = vmatmul.f32.gmra.mxu0 %v1541
    %v1586 = vpop.f32.mrf.mxu0
    %v1587 = vadd.f32 %v1539, %v1586
    %1588 = vmatmul.f32.gmra.mxu0 %v1544
    %v1589 = vpop.f32.mrf.mxu0
    %v1590 = vadd.f32 %v1539, %v1589
    %1591 = vdwg.mxu0
    %v1592 = vmax.f32 %v1564, 0.0
    %v1593 = vmax.f32 %v1587, 0.0
    %v1594 = vmax.f32 %v1567, 0.0
    %v1595 = vmax.f32 %v1590, 0.0
    %v1596 = vpack.c.bf16 %v1594, %v1592
    %v1597 = vpack.c.bf16 %v1595, %v1593
    %s1598 = scalar_lea.vmem %s3, 768
    %v1599 = vld [vmem:[%s1598] sm:$0xff]
    %v1600 = vld [vmem:[%s1598 + $0x8] sm:$0xff]
    %v1601 = vld [vmem:[%s1598 + $0x10] sm:$0xff]
    %v1602 = vld [vmem:[%s1598 + $0x18] sm:$0xff]
    %v1603 = vld [vmem:[%s1598 + $0x20] sm:$0xff]
    %v1604 = vld [vmem:[%s1598 + $0x28] sm:$0xff]
    %v1605 = vld [vmem:[%s1598 + $0x30] sm:$0xff]
    %v1606 = vld [vmem:[%s1598 + $0x38] sm:$0xff]
    %v1607 = vld [vmem:[%s1598 + $0x40] sm:$0xff]
    %v1608 = vld [vmem:[%s1598 + $0x48] sm:$0xff]
    %v1609 = vld [vmem:[%s1598 + $0x50] sm:$0xff]
    %v1610 = vld [vmem:[%s1598 + $0x58] sm:$0xff]
    %v1611 = vld [vmem:[%s1598 + $0x60] sm:$0xff]
    %v1612 = vld [vmem:[%s1598 + $0x68] sm:$0xff]
    %v1613 = vld [vmem:[%s1598 + $0x70] sm:$0xff]
    %v1614 = vld [vmem:[%s1598 + $0x78] sm:$0xff]
    %v1615 = vld [vmem:[%s1598 + $0x80] sm:$0xff]
    %v1616 = vld [vmem:[%s1598 + $0x88] sm:$0xff]
    %v1617 = vld [vmem:[%s1598 + $0x90] sm:$0xff]
    %v1618 = vld [vmem:[%s1598 + $0x98] sm:$0xff]
    %v1619 = vld [vmem:[%s1598 + $0xa0] sm:$0xff]
    %v1620 = vld [vmem:[%s1598 + $0xa8] sm:$0xff]
    %v1621 = vld [vmem:[%s1598 + $0xb0] sm:$0xff]
    %v1622 = vld [vmem:[%s1598 + $0xb8] sm:$0xff]
    %v1623 = vld [vmem:[%s1598 + $0xc0] sm:$0xff]
    %v1624 = vld [vmem:[%s1598 + $0xc8] sm:$0xff]
    %v1625 = vld [vmem:[%s1598 + $0xd0] sm:$0xff]
    %v1626 = vld [vmem:[%s1598 + $0xd8] sm:$0xff]
    %v1627 = vld [vmem:[%s1598 + $0xe0] sm:$0xff]
    %v1628 = vld [vmem:[%s1598 + $0xe8] sm:$0xff]
    %v1629 = vld [vmem:[%s1598 + $0xf0] sm:$0xff]
    %v1630 = vld [vmem:[%s1598 + $0xf8] sm:$0xff]
    %v1631 = vperm.slane %v18, 4
    %v1632 = vperm.slane %v19, 4
    %v1665 = vunpack.c.l.b16 %v1599
    %v1666 = vunpack.c.h.b16 %v1599
    %v1667 = vunpack.c.l.b16 %v1600
    %v1668 = vunpack.c.h.b16 %v1600
    %v1669 = vunpack.c.l.b16 %v1601
    %v1670 = vunpack.c.h.b16 %v1601
    %v1671 = vunpack.c.l.b16 %v1602
    %v1672 = vunpack.c.h.b16 %v1602
    %v1673 = vunpack.c.l.b16 %v1603
    %v1674 = vunpack.c.h.b16 %v1603
    %v1675 = vunpack.c.l.b16 %v1604
    %v1676 = vunpack.c.h.b16 %v1604
    %v1677 = vunpack.c.l.b16 %v1605
    %v1678 = vunpack.c.h.b16 %v1605
    %v1679 = vunpack.c.l.b16 %v1606
    %v1680 = vunpack.c.h.b16 %v1606
    %v1681 = vunpack.c.l.b16 %v1607
    %v1682 = vunpack.c.h.b16 %v1607
    %v1683 = vunpack.c.l.b16 %v1608
    %v1684 = vunpack.c.h.b16 %v1608
    %v1685 = vunpack.c.l.b16 %v1609
    %v1686 = vunpack.c.h.b16 %v1609
    %v1687 = vunpack.c.l.b16 %v1610
    %v1688 = vunpack.c.h.b16 %v1610
    %v1689 = vunpack.c.l.b16 %v1611
    %v1690 = vunpack.c.h.b16 %v1611
    %v1691 = vunpack.c.l.b16 %v1612
    %v1692 = vunpack.c.h.b16 %v1612
    %v1693 = vunpack.c.l.b16 %v1613
    %v1694 = vunpack.c.h.b16 %v1613
    %v1695 = vunpack.c.l.b16 %v1614
    %v1696 = vunpack.c.h.b16 %v1614
    %v1697 = vunpack.c.l.b16 %v1615
    %v1698 = vunpack.c.h.b16 %v1615
    %v1699 = vunpack.c.l.b16 %v1616
    %v1700 = vunpack.c.h.b16 %v1616
    %v1701 = vunpack.c.l.b16 %v1617
    %v1702 = vunpack.c.h.b16 %v1617
    %v1703 = vunpack.c.l.b16 %v1618
    %v1704 = vunpack.c.h.b16 %v1618
    %v1705 = vunpack.c.l.b16 %v1619
    %v1706 = vunpack.c.h.b16 %v1619
    %v1707 = vunpack.c.l.b16 %v1620
    %v1708 = vunpack.c.h.b16 %v1620
    %v1709 = vunpack.c.l.b16 %v1621
    %v1710 = vunpack.c.h.b16 %v1621
    %v1711 = vunpack.c.l.b16 %v1622
    %v1712 = vunpack.c.h.b16 %v1622
    %v1713 = vunpack.c.l.b16 %v1623
    %v1714 = vunpack.c.h.b16 %v1623
    %v1715 = vunpack.c.l.b16 %v1624
    %v1716 = vunpack.c.h.b16 %v1624
    %v1717 = vunpack.c.l.b16 %v1625
    %v1718 = vunpack.c.h.b16 %v1625
    %v1719 = vunpack.c.l.b16 %v1626
    %v1720 = vunpack.c.h.b16 %v1626
    %v1721 = vunpack.c.l.b16 %v1627
    %v1722 = vunpack.c.h.b16 %v1627
    %v1723 = vunpack.c.l.b16 %v1628
    %v1724 = vunpack.c.h.b16 %v1628
    %v1725 = vunpack.c.l.b16 %v1629
    %v1726 = vunpack.c.h.b16 %v1629
    %v1727 = vunpack.c.l.b16 %v1630
    %v1728 = vunpack.c.h.b16 %v1630
    %v1729 = vpack.c.b16 %v1667, %v1665
    %v1730 = vpack.c.b16 %v1668, %v1666
    %v1731 = vpack.c.b16 %v1671, %v1669
    %v1732 = vpack.c.b16 %v1672, %v1670
    %v1733 = vpack.c.b16 %v1675, %v1673
    %v1734 = vpack.c.b16 %v1676, %v1674
    %v1735 = vpack.c.b16 %v1679, %v1677
    %v1736 = vpack.c.b16 %v1680, %v1678
    %v1737 = vpack.c.b16 %v1683, %v1681
    %v1738 = vpack.c.b16 %v1684, %v1682
    %v1739 = vpack.c.b16 %v1687, %v1685
    %v1740 = vpack.c.b16 %v1688, %v1686
    %v1741 = vpack.c.b16 %v1691, %v1689
    %v1742 = vpack.c.b16 %v1692, %v1690
    %v1743 = vpack.c.b16 %v1695, %v1693
    %v1744 = vpack.c.b16 %v1696, %v1694
    %v1745 = vpack.c.b16 %v1699, %v1697
    %v1746 = vpack.c.b16 %v1700, %v1698
    %v1747 = vpack.c.b16 %v1703, %v1701
    %v1748 = vpack.c.b16 %v1704, %v1702
    %v1749 = vpack.c.b16 %v1707, %v1705
    %v1750 = vpack.c.b16 %v1708, %v1706
    %v1751 = vpack.c.b16 %v1711, %v1709
    %v1752 = vpack.c.b16 %v1712, %v1710
    %v1753 = vpack.c.b16 %v1715, %v1713
    %v1754 = vpack.c.b16 %v1716, %v1714
    %v1755 = vpack.c.b16 %v1719, %v1717
    %v1756 = vpack.c.b16 %v1720, %v1718
    %v1757 = vpack.c.b16 %v1723, %v1721
    %v1758 = vpack.c.b16 %v1724, %v1722
    %v1759 = vpack.c.b16 %v1727, %v1725
    %v1760 = vpack.c.b16 %v1728, %v1726
    %1793 = vmatpush.bf16.msra.mxu0 %v1743
    %1794 = vmatpush.bf16.msra.mxu0 %v1741
    %1795 = vmatpush.bf16.msra.mxu0 %v1739
    %1796 = vmatpush.bf16.msra.mxu0 %v1737
    %1797 = vmatpush.bf16.msra.mxu0 %v1735
    %1798 = vmatpush.bf16.msra.mxu0 %v1733
    %1799 = vmatpush.bf16.msra.mxu0 %v1731
    %1800 = vmatpush.bf16.msra.mxu0 %v1729
    %1801 = vmatmul.bf16.gmra.mxu0 %v1596
    %v1802 = vpop.f32.mrf.mxu0
    %v1803 = vadd.f32 %v1631, %v1802
    %v1804 = vpop.f32.mrf.mxu0
    %v1805 = vadd.f32 %v1631, %v1804
    %1806 = vdwg.mxu0
    %1807 = vmatpush.bf16.msra.mxu0 %v1759
    %1808 = vmatpush.bf16.msra.mxu0 %v1757
    %1809 = vmatpush.bf16.msra.mxu0 %v1755
    %1810 = vmatpush.bf16.msra.mxu0 %v1753
    %1811 = vmatpush.bf16.msra.mxu0 %v1751
    %1812 = vmatpush.bf16.msra.mxu0 %v1749
    %1813 = vmatpush.bf16.msra.mxu0 %v1747
    %1814 = vmatpush.bf16.msra.mxu0 %v1745
    %1815 = vmatmul.bf16.gmra.mxu0 %v1597
    %v1816 = vpop.f32.mrf.mxu0
    %v1817 = vadd.f32 %v1803, %v1816
    %v1818 = vpop.f32.mrf.mxu0
    %v1819 = vadd.f32 %v1805, %v1818
    %1820 = vdwg.mxu0
    %1821 = vmatpush.bf16.msra.mxu0 %v1744
    %1822 = vmatpush.bf16.msra.mxu0 %v1742
    %1823 = vmatpush.bf16.msra.mxu0 %v1740
    %1824 = vmatpush.bf16.msra.mxu0 %v1738
    %1825 = vmatpush.bf16.msra.mxu0 %v1736
    %1826 = vmatpush.bf16.msra.mxu0 %v1734
    %1827 = vmatpush.bf16.msra.mxu0 %v1732
    %1828 = vmatpush.bf16.msra.mxu0 %v1730
    %1829 = vmatmul.bf16.gmra.mxu0 %v1596
    %v1830 = vpop.f32.mrf.mxu0
    %v1831 = vadd.f32 %v1632, %v1830
    %v1832 = vpop.f32.mrf.mxu0
    %v1833 = vadd.f32 %v1632, %v1832
    %1834 = vdwg.mxu0
    %1835 = vmatpush.bf16.msra.mxu0 %v1760
    %1836 = vmatpush.bf16.msra.mxu0 %v1758
    %1837 = vmatpush.bf16.msra.mxu0 %v1756
    %1838 = vmatpush.bf16.msra.mxu0 %v1754
    %1839 = vmatpush.bf16.msra.mxu0 %v1752
    %1840 = vmatpush.bf16.msra.mxu0 %v1750
    %1841 = vmatpush.bf16.msra.mxu0 %v1748
    %1842 = vmatpush.bf16.msra.mxu0 %v1746
    %1843 = vmatmul.bf16.gmra.mxu0 %v1597
    %v1844 = vpop.f32.mrf.mxu0
    %v1845 = vadd.f32 %v1831, %v1844
    %v1846 = vpop.f32.mrf.mxu0
    %v1847 = vadd.f32 %v1833, %v1846
    %1848 = vdwg.mxu0
    %v1849 = vadd.f32 %v1817, %v916
    %v1850 = vadd.f32 %v1845, %v917
    %v1851 = vadd.f32 %v1819, %v918
    %v1852 = vadd.f32 %v1847, %v919
    %v1853 = vpack.c.bf16 %v1851, %v1849
    %v1854 = vpack.c.bf16 %v1852, %v1850
    %s1855 = scalar_lea.vmem %s3, 256
    %v1856 = vld [vmem:[%s1855] sm:$0xff]
    %v1857 = vld [vmem:[%s1855 + $0x8] sm:$0xff]
    %v1858 = vld [vmem:[%s1855 + $0x10] sm:$0xff]
    %v1859 = vld [vmem:[%s1855 + $0x18] sm:$0xff]
    %v1860 = vld [vmem:[%s1855 + $0x20] sm:$0xff]
    %v1861 = vld [vmem:[%s1855 + $0x28] sm:$0xff]
    %v1862 = vld [vmem:[%s1855 + $0x30] sm:$0xff]
    %v1863 = vld [vmem:[%s1855 + $0x38] sm:$0xff]
    %v1864 = vld [vmem:[%s1855 + $0x40] sm:$0xff]
    %v1865 = vld [vmem:[%s1855 + $0x48] sm:$0xff]
    %v1866 = vld [vmem:[%s1855 + $0x50] sm:$0xff]
    %v1867 = vld [vmem:[%s1855 + $0x58] sm:$0xff]
    %v1868 = vld [vmem:[%s1855 + $0x60] sm:$0xff]
    %v1869 = vld [vmem:[%s1855 + $0x68] sm:$0xff]
    %v1870 = vld [vmem:[%s1855 + $0x70] sm:$0xff]
    %v1871 = vld [vmem:[%s1855 + $0x78] sm:$0xff]
    %v1872 = vld [vmem:[%s1855 + $0x80] sm:$0xff]
    %v1873 = vld [vmem:[%s1855 + $0x88] sm:$0xff]
    %v1874 = vld [vmem:[%s1855 + $0x90] sm:$0xff]
    %v1875 = vld [vmem:[%s1855 + $0x98] sm:$0xff]
    %v1876 = vld [vmem:[%s1855 + $0xa0] sm:$0xff]
    %v1877 = vld [vmem:[%s1855 + $0xa8] sm:$0xff]
    %v1878 = vld [vmem:[%s1855 + $0xb0] sm:$0xff]
    %v1879 = vld [vmem:[%s1855 + $0xb8] sm:$0xff]
    %v1880 = vld [vmem:[%s1855 + $0xc0] sm:$0xff]
    %v1881 = vld [vmem:[%s1855 + $0xc8] sm:$0xff]
    %v1882 = vld [vmem:[%s1855 + $0xd0] sm:$0xff]
    %v1883 = vld [vmem:[%s1855 + $0xd8] sm:$0xff]
    %v1884 = vld [vmem:[%s1855 + $0xe0] sm:$0xff]
    %v1885 = vld [vmem:[%s1855 + $0xe8] sm:$0xff]
    %v1886 = vld [vmem:[%s1855 + $0xf0] sm:$0xff]
    %v1887 = vld [vmem:[%s1855 + $0xf8] sm:$0xff]
    %v1920 = vunpack.c.l.b16 %v1856
    %v1921 = vunpack.c.h.b16 %v1856
    %v1922 = vunpack.c.l.b16 %v1857
    %v1923 = vunpack.c.h.b16 %v1857
    %v1924 = vunpack.c.l.b16 %v1858
    %v1925 = vunpack.c.h.b16 %v1858
    %v1926 = vunpack.c.l.b16 %v1859
    %v1927 = vunpack.c.h.b16 %v1859
    %v1928 = vunpack.c.l.b16 %v1860
    %v1929 = vunpack.c.h.b16 %v1860
    %v1930 = vunpack.c.l.b16 %v1861
    %v1931 = vunpack.c.h.b16 %v1861
    %v1932 = vunpack.c.l.b16 %v1862
    %v1933 = vunpack.c.h.b16 %v1862
    %v1934 = vunpack.c.l.b16 %v1863
    %v1935 = vunpack.c.h.b16 %v1863
    %v1936 = vunpack.c.l.b16 %v1864
    %v1937 = vunpack.c.h.b16 %v1864
    %v1938 = vunpack.c.l.b16 %v1865
    %v1939 = vunpack.c.h.b16 %v1865
    %v1940 = vunpack.c.l.b16 %v1866
    %v1941 = vunpack.c.h.b16 %v1866
    %v1942 = vunpack.c.l.b16 %v1867
    %v1943 = vunpack.c.h.b16 %v1867
    %v1944 = vunpack.c.l.b16 %v1868
    %v1945 = vunpack.c.h.b16 %v1868
    %v1946 = vunpack.c.l.b16 %v1869
    %v1947 = vunpack.c.h.b16 %v1869
    %v1948 = vunpack.c.l.b16 %v1870
    %v1949 = vunpack.c.h.b16 %v1870
    %v1950 = vunpack.c.l.b16 %v1871
    %v1951 = vunpack.c.h.b16 %v1871
    %v1952 = vunpack.c.l.b16 %v1872
    %v1953 = vunpack.c.h.b16 %v1872
    %v1954 = vunpack.c.l.b16 %v1873
    %v1955 = vunpack.c.h.b16 %v1873
    %v1956 = vunpack.c.l.b16 %v1874
    %v1957 = vunpack.c.h.b16 %v1874
    %v1958 = vunpack.c.l.b16 %v1875
    %v1959 = vunpack.c.h.b16 %v1875
    %v1960 = vunpack.c.l.b16 %v1876
    %v1961 = vunpack.c.h.b16 %v1876
    %v1962 = vunpack.c.l.b16 %v1877
    %v1963 = vunpack.c.h.b16 %v1877
    %v1964 = vunpack.c.l.b16 %v1878
    %v1965 = vunpack.c.h.b16 %v1878
    %v1966 = vunpack.c.l.b16 %v1879
    %v1967 = vunpack.c.h.b16 %v1879
    %v1968 = vunpack.c.l.b16 %v1880
    %v1969 = vunpack.c.h.b16 %v1880
    %v1970 = vunpack.c.l.b16 %v1881
    %v1971 = vunpack.c.h.b16 %v1881
    %v1972 = vunpack.c.l.b16 %v1882
    %v1973 = vunpack.c.h.b16 %v1882
    %v1974 = vunpack.c.l.b16 %v1883
    %v1975 = vunpack.c.h.b16 %v1883
    %v1976 = vunpack.c.l.b16 %v1884
    %v1977 = vunpack.c.h.b16 %v1884
    %v1978 = vunpack.c.l.b16 %v1885
    %v1979 = vunpack.c.h.b16 %v1885
    %v1980 = vunpack.c.l.b16 %v1886
    %v1981 = vunpack.c.h.b16 %v1886
    %v1982 = vunpack.c.l.b16 %v1887
    %v1983 = vunpack.c.h.b16 %v1887
    %v1984 = vpack.c.b16 %v1922, %v1920
    %v1985 = vpack.c.b16 %v1923, %v1921
    %v1986 = vpack.c.b16 %v1926, %v1924
    %v1987 = vpack.c.b16 %v1927, %v1925
    %v1988 = vpack.c.b16 %v1930, %v1928
    %v1989 = vpack.c.b16 %v1931, %v1929
    %v1990 = vpack.c.b16 %v1934, %v1932
    %v1991 = vpack.c.b16 %v1935, %v1933
    %v1992 = vpack.c.b16 %v1938, %v1936
    %v1993 = vpack.c.b16 %v1939, %v1937
    %v1994 = vpack.c.b16 %v1942, %v1940
    %v1995 = vpack.c.b16 %v1943, %v1941
    %v1996 = vpack.c.b16 %v1946, %v1944
    %v1997 = vpack.c.b16 %v1947, %v1945
    %v1998 = vpack.c.b16 %v1950, %v1948
    %v1999 = vpack.c.b16 %v1951, %v1949
    %v2000 = vpack.c.b16 %v1954, %v1952
    %v2001 = vpack.c.b16 %v1955, %v1953
    %v2002 = vpack.c.b16 %v1958, %v1956
    %v2003 = vpack.c.b16 %v1959, %v1957
    %v2004 = vpack.c.b16 %v1962, %v1960
    %v2005 = vpack.c.b16 %v1963, %v1961
    %v2006 = vpack.c.b16 %v1966, %v1964
    %v2007 = vpack.c.b16 %v1967, %v1965
    %v2008 = vpack.c.b16 %v1970, %v1968
    %v2009 = vpack.c.b16 %v1971, %v1969
    %v2010 = vpack.c.b16 %v1974, %v1972
    %v2011 = vpack.c.b16 %v1975, %v1973
    %v2012 = vpack.c.b16 %v1978, %v1976
    %v2013 = vpack.c.b16 %v1979, %v1977
    %v2014 = vpack.c.b16 %v1982, %v1980
    %v2015 = vpack.c.b16 %v1983, %v1981
    %2048 = vmatpush.bf16.msra.mxu0 %v1998
    %2049 = vmatpush.bf16.msra.mxu0 %v1996
    %2050 = vmatpush.bf16.msra.mxu0 %v1994
    %2051 = vmatpush.bf16.msra.mxu0 %v1992
    %2052 = vmatpush.bf16.msra.mxu0 %v1990
    %2053 = vmatpush.bf16.msra.mxu0 %v1988
    %2054 = vmatpush.bf16.msra.mxu0 %v1986
    %2055 = vmatpush.bf16.msra.mxu0 %v1984
    %2056 = vmatmul.bf16.gmra.mxu0 %v1853
    %v2057 = vpop.f32.mrf.mxu0
    %v2058 = vadd.f32 0.0, %v2057
    %v2059 = vpop.f32.mrf.mxu0
    %v2060 = vadd.f32 0.0, %v2059
    %2061 = vdwg.mxu0
    %2062 = vmatpush.bf16.msra.mxu0 %v2014
    %2063 = vmatpush.bf16.msra.mxu0 %v2012
    %2064 = vmatpush.bf16.msra.mxu0 %v2010
    %2065 = vmatpush.bf16.msra.mxu0 %v2008
    %2066 = vmatpush.bf16.msra.mxu0 %v2006
    %2067 = vmatpush.bf16.msra.mxu0 %v2004
    %2068 = vmatpush.bf16.msra.mxu0 %v2002
    %2069 = vmatpush.bf16.msra.mxu0 %v2000
    %2070 = vmatmul.bf16.gmra.mxu0 %v1854
    %v2071 = vpop.f32.mrf.mxu0
    %v2072 = vadd.f32 %v2058, %v2071
    %v2073 = vpop.f32.mrf.mxu0
    %v2074 = vadd.f32 %v2060, %v2073
    %2075 = vdwg.mxu0
    %2076 = vmatpush.bf16.msra.mxu0 %v1999
    %2077 = vmatpush.bf16.msra.mxu0 %v1997
    %2078 = vmatpush.bf16.msra.mxu0 %v1995
    %2079 = vmatpush.bf16.msra.mxu0 %v1993
    %2080 = vmatpush.bf16.msra.mxu0 %v1991
    %2081 = vmatpush.bf16.msra.mxu0 %v1989
    %2082 = vmatpush.bf16.msra.mxu0 %v1987
    %2083 = vmatpush.bf16.msra.mxu0 %v1985
    %2084 = vmatmul.bf16.gmra.mxu0 %v1853
    %v2085 = vpop.f32.mrf.mxu0
    %v2086 = vadd.f32 0.0, %v2085
    %v2087 = vpop.f32.mrf.mxu0
    %v2088 = vadd.f32 0.0, %v2087
    %2089 = vdwg.mxu0
    %2090 = vmatpush.bf16.msra.mxu0 %v2015
    %2091 = vmatpush.bf16.msra.mxu0 %v2013
    %2092 = vmatpush.bf16.msra.mxu0 %v2011
    %2093 = vmatpush.bf16.msra.mxu0 %v2009
    %2094 = vmatpush.bf16.msra.mxu0 %v2007
    %2095 = vmatpush.bf16.msra.mxu0 %v2005
    %2096 = vmatpush.bf16.msra.mxu0 %v2003
    %2097 = vmatpush.bf16.msra.mxu0 %v2001
    %2098 = vmatmul.bf16.gmra.mxu0 %v1854
    %v2099 = vpop.f32.mrf.mxu0
    %v2100 = vadd.f32 %v2086, %v2099
    %v2101 = vpop.f32.mrf.mxu0
    %v2102 = vadd.f32 %v2088, %v2101
    %2103 = vdwg.mxu0
    %v2104 = vmul.f32 %v1271, %v2072
    %v2105 = vmul.f32 %v1271, %v2100
    %v2106 = vmul.f32 %v1281, %v2074
    %v2107 = vmul.f32 %v1281, %v2102
    %v2108 = vperm.slane %v18, 2
    %v2109 = vperm.slane %v19, 2
    %2110 = vmatpush.msra.mxu0 0.0
    %2111 = vmatpush.msra.mxu0 0.0
    %2112 = vmatpush.msra.mxu0 0.0
    %2113 = vmatpush.msra.mxu0 0.0
    %2114 = vmatpush.msra.mxu0 0.0
    %2115 = vmatpush.msra.mxu0 0.0
    %2116 = vmatpush.msra.mxu0 0.0
    %2117 = vmatpush.msra.mxu0 0.0
    %2118 = vmatpush.msra.mxu0 0.0
    %2119 = vmatpush.msra.mxu0 0.0
    %2120 = vmatpush.msra.mxu0 0.0
    %2121 = vmatpush.msra.mxu0 0.0
    %2122 = vmatpush.msra.mxu0 0.0
    %2123 = vmatpush.msra.mxu0 0.0
    %2124 = vmatpush.msra.mxu0 %v2106
    %2125 = vmatpush.msra.mxu0 %v2104
    %2126 = vmatmul.f32.gmra.mxu0 %v1541
    %v2127 = vpop.f32.mrf.mxu0
    %v2128 = vadd.f32 %v2108, %v2127
    %2129 = vmatmul.f32.gmra.mxu0 %v1544
    %v2130 = vpop.f32.mrf.mxu0
    %v2131 = vadd.f32 %v2108, %v2130
    %2132 = vdwg.mxu0
    %2133 = vmatpush.msra.mxu0 0.0
    %2134 = vmatpush.msra.mxu0 0.0
    %2135 = vmatpush.msra.mxu0 0.0
    %2136 = vmatpush.msra.mxu0 0.0
    %2137 = vmatpush.msra.mxu0 0.0
    %2138 = vmatpush.msra.mxu0 0.0
    %2139 = vmatpush.msra.mxu0 0.0
    %2140 = vmatpush.msra.mxu0 0.0
    %2141 = vmatpush.msra.mxu0 0.0
    %2142 = vmatpush.msra.mxu0 0.0
    %2143 = vmatpush.msra.mxu0 0.0
    %2144 = vmatpush.msra.mxu0 0.0
    %2145 = vmatpush.msra.mxu0 0.0
    %2146 = vmatpush.msra.mxu0 0.0
    %2147 = vmatpush.msra.mxu0 %v2107
    %2148 = vmatpush.msra.mxu0 %v2105
    %2149 = vmatmul.f32.gmra.mxu0 %v1541
    %v2150 = vpop.f32.mrf.mxu0
    %v2151 = vadd.f32 %v2109, %v2150
    %2152 = vmatmul.f32.gmra.mxu0 %v1544
    %v2153 = vpop.f32.mrf.mxu0
    %v2154 = vadd.f32 %v2109, %v2153
    %2155 = vdwg.mxu0
    %v2156 = vmax.f32 %v2128, 0.0
    %v2157 = vmax.f32 %v2151, 0.0
    %v2158 = vmax.f32 %v2131, 0.0
    %v2159 = vmax.f32 %v2154, 0.0
    %v2160 = vpack.c.bf16 %v2158, %v2156
    %v2161 = vpack.c.bf16 %v2159, %v2157
    %s2162 = scalar_lea.vmem %s3, 1024
    %v2163 = vld [vmem:[%s2162] sm:$0xff]
    %v2164 = vld [vmem:[%s2162 + $0x8] sm:$0xff]
    %v2165 = vld [vmem:[%s2162 + $0x10] sm:$0xff]
    %v2166 = vld [vmem:[%s2162 + $0x18] sm:$0xff]
    %v2167 = vld [vmem:[%s2162 + $0x20] sm:$0xff]
    %v2168 = vld [vmem:[%s2162 + $0x28] sm:$0xff]
    %v2169 = vld [vmem:[%s2162 + $0x30] sm:$0xff]
    %v2170 = vld [vmem:[%s2162 + $0x38] sm:$0xff]
    %v2171 = vld [vmem:[%s2162 + $0x40] sm:$0xff]
    %v2172 = vld [vmem:[%s2162 + $0x48] sm:$0xff]
    %v2173 = vld [vmem:[%s2162 + $0x50] sm:$0xff]
    %v2174 = vld [vmem:[%s2162 + $0x58] sm:$0xff]
    %v2175 = vld [vmem:[%s2162 + $0x60] sm:$0xff]
    %v2176 = vld [vmem:[%s2162 + $0x68] sm:$0xff]
    %v2177 = vld [vmem:[%s2162 + $0x70] sm:$0xff]
    %v2178 = vld [vmem:[%s2162 + $0x78] sm:$0xff]
    %v2179 = vld [vmem:[%s2162 + $0x80] sm:$0xff]
    %v2180 = vld [vmem:[%s2162 + $0x88] sm:$0xff]
    %v2181 = vld [vmem:[%s2162 + $0x90] sm:$0xff]
    %v2182 = vld [vmem:[%s2162 + $0x98] sm:$0xff]
    %v2183 = vld [vmem:[%s2162 + $0xa0] sm:$0xff]
    %v2184 = vld [vmem:[%s2162 + $0xa8] sm:$0xff]
    %v2185 = vld [vmem:[%s2162 + $0xb0] sm:$0xff]
    %v2186 = vld [vmem:[%s2162 + $0xb8] sm:$0xff]
    %v2187 = vld [vmem:[%s2162 + $0xc0] sm:$0xff]
    %v2188 = vld [vmem:[%s2162 + $0xc8] sm:$0xff]
    %v2189 = vld [vmem:[%s2162 + $0xd0] sm:$0xff]
    %v2190 = vld [vmem:[%s2162 + $0xd8] sm:$0xff]
    %v2191 = vld [vmem:[%s2162 + $0xe0] sm:$0xff]
    %v2192 = vld [vmem:[%s2162 + $0xe8] sm:$0xff]
    %v2193 = vld [vmem:[%s2162 + $0xf0] sm:$0xff]
    %v2194 = vld [vmem:[%s2162 + $0xf8] sm:$0xff]
    %v2195 = vperm.slane %v18, 5
    %v2196 = vperm.slane %v19, 5
    %v2229 = vunpack.c.l.b16 %v2163
    %v2230 = vunpack.c.h.b16 %v2163
    %v2231 = vunpack.c.l.b16 %v2164
    %v2232 = vunpack.c.h.b16 %v2164
    %v2233 = vunpack.c.l.b16 %v2165
    %v2234 = vunpack.c.h.b16 %v2165
    %v2235 = vunpack.c.l.b16 %v2166
    %v2236 = vunpack.c.h.b16 %v2166
    %v2237 = vunpack.c.l.b16 %v2167
    %v2238 = vunpack.c.h.b16 %v2167
    %v2239 = vunpack.c.l.b16 %v2168
    %v2240 = vunpack.c.h.b16 %v2168
    %v2241 = vunpack.c.l.b16 %v2169
    %v2242 = vunpack.c.h.b16 %v2169
    %v2243 = vunpack.c.l.b16 %v2170
    %v2244 = vunpack.c.h.b16 %v2170
    %v2245 = vunpack.c.l.b16 %v2171
    %v2246 = vunpack.c.h.b16 %v2171
    %v2247 = vunpack.c.l.b16 %v2172
    %v2248 = vunpack.c.h.b16 %v2172
    %v2249 = vunpack.c.l.b16 %v2173
    %v2250 = vunpack.c.h.b16 %v2173
    %v2251 = vunpack.c.l.b16 %v2174
    %v2252 = vunpack.c.h.b16 %v2174
    %v2253 = vunpack.c.l.b16 %v2175
    %v2254 = vunpack.c.h.b16 %v2175
    %v2255 = vunpack.c.l.b16 %v2176
    %v2256 = vunpack.c.h.b16 %v2176
    %v2257 = vunpack.c.l.b16 %v2177
    %v2258 = vunpack.c.h.b16 %v2177
    %v2259 = vunpack.c.l.b16 %v2178
    %v2260 = vunpack.c.h.b16 %v2178
    %v2261 = vunpack.c.l.b16 %v2179
    %v2262 = vunpack.c.h.b16 %v2179
    %v2263 = vunpack.c.l.b16 %v2180
    %v2264 = vunpack.c.h.b16 %v2180
    %v2265 = vunpack.c.l.b16 %v2181
    %v2266 = vunpack.c.h.b16 %v2181
    %v2267 = vunpack.c.l.b16 %v2182
    %v2268 = vunpack.c.h.b16 %v2182
    %v2269 = vunpack.c.l.b16 %v2183
    %v2270 = vunpack.c.h.b16 %v2183
    %v2271 = vunpack.c.l.b16 %v2184
    %v2272 = vunpack.c.h.b16 %v2184
    %v2273 = vunpack.c.l.b16 %v2185
    %v2274 = vunpack.c.h.b16 %v2185
    %v2275 = vunpack.c.l.b16 %v2186
    %v2276 = vunpack.c.h.b16 %v2186
    %v2277 = vunpack.c.l.b16 %v2187
    %v2278 = vunpack.c.h.b16 %v2187
    %v2279 = vunpack.c.l.b16 %v2188
    %v2280 = vunpack.c.h.b16 %v2188
    %v2281 = vunpack.c.l.b16 %v2189
    %v2282 = vunpack.c.h.b16 %v2189
    %v2283 = vunpack.c.l.b16 %v2190
    %v2284 = vunpack.c.h.b16 %v2190
    %v2285 = vunpack.c.l.b16 %v2191
    %v2286 = vunpack.c.h.b16 %v2191
    %v2287 = vunpack.c.l.b16 %v2192
    %v2288 = vunpack.c.h.b16 %v2192
    %v2289 = vunpack.c.l.b16 %v2193
    %v2290 = vunpack.c.h.b16 %v2193
    %v2291 = vunpack.c.l.b16 %v2194
    %v2292 = vunpack.c.h.b16 %v2194
    %v2293 = vpack.c.b16 %v2231, %v2229
    %v2294 = vpack.c.b16 %v2232, %v2230
    %v2295 = vpack.c.b16 %v2235, %v2233
    %v2296 = vpack.c.b16 %v2236, %v2234
    %v2297 = vpack.c.b16 %v2239, %v2237
    %v2298 = vpack.c.b16 %v2240, %v2238
    %v2299 = vpack.c.b16 %v2243, %v2241
    %v2300 = vpack.c.b16 %v2244, %v2242
    %v2301 = vpack.c.b16 %v2247, %v2245
    %v2302 = vpack.c.b16 %v2248, %v2246
    %v2303 = vpack.c.b16 %v2251, %v2249
    %v2304 = vpack.c.b16 %v2252, %v2250
    %v2305 = vpack.c.b16 %v2255, %v2253
    %v2306 = vpack.c.b16 %v2256, %v2254
    %v2307 = vpack.c.b16 %v2259, %v2257
    %v2308 = vpack.c.b16 %v2260, %v2258
    %v2309 = vpack.c.b16 %v2263, %v2261
    %v2310 = vpack.c.b16 %v2264, %v2262
    %v2311 = vpack.c.b16 %v2267, %v2265
    %v2312 = vpack.c.b16 %v2268, %v2266
    %v2313 = vpack.c.b16 %v2271, %v2269
    %v2314 = vpack.c.b16 %v2272, %v2270
    %v2315 = vpack.c.b16 %v2275, %v2273
    %v2316 = vpack.c.b16 %v2276, %v2274
    %v2317 = vpack.c.b16 %v2279, %v2277
    %v2318 = vpack.c.b16 %v2280, %v2278
    %v2319 = vpack.c.b16 %v2283, %v2281
    %v2320 = vpack.c.b16 %v2284, %v2282
    %v2321 = vpack.c.b16 %v2287, %v2285
    %v2322 = vpack.c.b16 %v2288, %v2286
    %v2323 = vpack.c.b16 %v2291, %v2289
    %v2324 = vpack.c.b16 %v2292, %v2290
    %2357 = vmatpush.bf16.msra.mxu0 %v2307
    %2358 = vmatpush.bf16.msra.mxu0 %v2305
    %2359 = vmatpush.bf16.msra.mxu0 %v2303
    %2360 = vmatpush.bf16.msra.mxu0 %v2301
    %2361 = vmatpush.bf16.msra.mxu0 %v2299
    %2362 = vmatpush.bf16.msra.mxu0 %v2297
    %2363 = vmatpush.bf16.msra.mxu0 %v2295
    %2364 = vmatpush.bf16.msra.mxu0 %v2293
    %2365 = vmatmul.bf16.gmra.mxu0 %v2160
    %v2366 = vpop.f32.mrf.mxu0
    %v2367 = vadd.f32 %v2195, %v2366
    %v2368 = vpop.f32.mrf.mxu0
    %v2369 = vadd.f32 %v2195, %v2368
    %2370 = vdwg.mxu0
    %2371 = vmatpush.bf16.msra.mxu0 %v2323
    %2372 = vmatpush.bf16.msra.mxu0 %v2321
    %2373 = vmatpush.bf16.msra.mxu0 %v2319
    %2374 = vmatpush.bf16.msra.mxu0 %v2317
    %2375 = vmatpush.bf16.msra.mxu0 %v2315
    %2376 = vmatpush.bf16.msra.mxu0 %v2313
    %2377 = vmatpush.bf16.msra.mxu0 %v2311
    %2378 = vmatpush.bf16.msra.mxu0 %v2309
    %2379 = vmatmul.bf16.gmra.mxu0 %v2161
    %v2380 = vpop.f32.mrf.mxu0
    %v2381 = vadd.f32 %v2367, %v2380
    %v2382 = vpop.f32.mrf.mxu0
    %v2383 = vadd.f32 %v2369, %v2382
    %2384 = vdwg.mxu0
    %2385 = vmatpush.bf16.msra.mxu0 %v2308
    %2386 = vmatpush.bf16.msra.mxu0 %v2306
    %2387 = vmatpush.bf16.msra.mxu0 %v2304
    %2388 = vmatpush.bf16.msra.mxu0 %v2302
    %2389 = vmatpush.bf16.msra.mxu0 %v2300
    %2390 = vmatpush.bf16.msra.mxu0 %v2298
    %2391 = vmatpush.bf16.msra.mxu0 %v2296
    %2392 = vmatpush.bf16.msra.mxu0 %v2294
    %2393 = vmatmul.bf16.gmra.mxu0 %v2160
    %v2394 = vpop.f32.mrf.mxu0
    %v2395 = vadd.f32 %v2196, %v2394
    %v2396 = vpop.f32.mrf.mxu0
    %v2397 = vadd.f32 %v2196, %v2396
    %2398 = vdwg.mxu0
    %2399 = vmatpush.bf16.msra.mxu0 %v2324
    %2400 = vmatpush.bf16.msra.mxu0 %v2322
    %2401 = vmatpush.bf16.msra.mxu0 %v2320
    %2402 = vmatpush.bf16.msra.mxu0 %v2318
    %2403 = vmatpush.bf16.msra.mxu0 %v2316
    %2404 = vmatpush.bf16.msra.mxu0 %v2314
    %2405 = vmatpush.bf16.msra.mxu0 %v2312
    %2406 = vmatpush.bf16.msra.mxu0 %v2310
    %2407 = vmatmul.bf16.gmra.mxu0 %v2161
    %v2408 = vpop.f32.mrf.mxu0
    %v2409 = vadd.f32 %v2395, %v2408
    %v2410 = vpop.f32.mrf.mxu0
    %v2411 = vadd.f32 %v2397, %v2410
    %2412 = vdwg.mxu0
    %v2413 = vadd.f32 %v2381, %v916
    %v2414 = vadd.f32 %v2409, %v917
    %v2415 = vadd.f32 %v2383, %v918
    %v2416 = vadd.f32 %v2411, %v919
    %v2417 = vpack.c.bf16 %v2415, %v2413
    %v2418 = vpack.c.bf16 %v2416, %v2414
    %s2419 = scalar_lea.vmem %s3, 512
    %v2420 = vld [vmem:[%s2419] sm:$0xff]
    %v2421 = vld [vmem:[%s2419 + $0x8] sm:$0xff]
    %v2422 = vld [vmem:[%s2419 + $0x10] sm:$0xff]
    %v2423 = vld [vmem:[%s2419 + $0x18] sm:$0xff]
    %v2424 = vld [vmem:[%s2419 + $0x20] sm:$0xff]
    %v2425 = vld [vmem:[%s2419 + $0x28] sm:$0xff]
    %v2426 = vld [vmem:[%s2419 + $0x30] sm:$0xff]
    %v2427 = vld [vmem:[%s2419 + $0x38] sm:$0xff]
    %v2428 = vld [vmem:[%s2419 + $0x40] sm:$0xff]
    %v2429 = vld [vmem:[%s2419 + $0x48] sm:$0xff]
    %v2430 = vld [vmem:[%s2419 + $0x50] sm:$0xff]
    %v2431 = vld [vmem:[%s2419 + $0x58] sm:$0xff]
    %v2432 = vld [vmem:[%s2419 + $0x60] sm:$0xff]
    %v2433 = vld [vmem:[%s2419 + $0x68] sm:$0xff]
    %v2434 = vld [vmem:[%s2419 + $0x70] sm:$0xff]
    %v2435 = vld [vmem:[%s2419 + $0x78] sm:$0xff]
    %v2436 = vld [vmem:[%s2419 + $0x80] sm:$0xff]
    %v2437 = vld [vmem:[%s2419 + $0x88] sm:$0xff]
    %v2438 = vld [vmem:[%s2419 + $0x90] sm:$0xff]
    %v2439 = vld [vmem:[%s2419 + $0x98] sm:$0xff]
    %v2440 = vld [vmem:[%s2419 + $0xa0] sm:$0xff]
    %v2441 = vld [vmem:[%s2419 + $0xa8] sm:$0xff]
    %v2442 = vld [vmem:[%s2419 + $0xb0] sm:$0xff]
    %v2443 = vld [vmem:[%s2419 + $0xb8] sm:$0xff]
    %v2444 = vld [vmem:[%s2419 + $0xc0] sm:$0xff]
    %v2445 = vld [vmem:[%s2419 + $0xc8] sm:$0xff]
    %v2446 = vld [vmem:[%s2419 + $0xd0] sm:$0xff]
    %v2447 = vld [vmem:[%s2419 + $0xd8] sm:$0xff]
    %v2448 = vld [vmem:[%s2419 + $0xe0] sm:$0xff]
    %v2449 = vld [vmem:[%s2419 + $0xe8] sm:$0xff]
    %v2450 = vld [vmem:[%s2419 + $0xf0] sm:$0xff]
    %v2451 = vld [vmem:[%s2419 + $0xf8] sm:$0xff]
    %v2484 = vunpack.c.l.b16 %v2420
    %v2485 = vunpack.c.h.b16 %v2420
    %v2486 = vunpack.c.l.b16 %v2421
    %v2487 = vunpack.c.h.b16 %v2421
    %v2488 = vunpack.c.l.b16 %v2422
    %v2489 = vunpack.c.h.b16 %v2422
    %v2490 = vunpack.c.l.b16 %v2423
    %v2491 = vunpack.c.h.b16 %v2423
    %v2492 = vunpack.c.l.b16 %v2424
    %v2493 = vunpack.c.h.b16 %v2424
    %v2494 = vunpack.c.l.b16 %v2425
    %v2495 = vunpack.c.h.b16 %v2425
    %v2496 = vunpack.c.l.b16 %v2426
    %v2497 = vunpack.c.h.b16 %v2426
    %v2498 = vunpack.c.l.b16 %v2427
    %v2499 = vunpack.c.h.b16 %v2427
    %v2500 = vunpack.c.l.b16 %v2428
    %v2501 = vunpack.c.h.b16 %v2428
    %v2502 = vunpack.c.l.b16 %v2429
    %v2503 = vunpack.c.h.b16 %v2429
    %v2504 = vunpack.c.l.b16 %v2430
    %v2505 = vunpack.c.h.b16 %v2430
    %v2506 = vunpack.c.l.b16 %v2431
    %v2507 = vunpack.c.h.b16 %v2431
    %v2508 = vunpack.c.l.b16 %v2432
    %v2509 = vunpack.c.h.b16 %v2432
    %v2510 = vunpack.c.l.b16 %v2433
    %v2511 = vunpack.c.h.b16 %v2433
    %v2512 = vunpack.c.l.b16 %v2434
    %v2513 = vunpack.c.h.b16 %v2434
    %v2514 = vunpack.c.l.b16 %v2435
    %v2515 = vunpack.c.h.b16 %v2435
    %v2516 = vunpack.c.l.b16 %v2436
    %v2517 = vunpack.c.h.b16 %v2436
    %v2518 = vunpack.c.l.b16 %v2437
    %v2519 = vunpack.c.h.b16 %v2437
    %v2520 = vunpack.c.l.b16 %v2438
    %v2521 = vunpack.c.h.b16 %v2438
    %v2522 = vunpack.c.l.b16 %v2439
    %v2523 = vunpack.c.h.b16 %v2439
    %v2524 = vunpack.c.l.b16 %v2440
    %v2525 = vunpack.c.h.b16 %v2440
    %v2526 = vunpack.c.l.b16 %v2441
    %v2527 = vunpack.c.h.b16 %v2441
    %v2528 = vunpack.c.l.b16 %v2442
    %v2529 = vunpack.c.h.b16 %v2442
    %v2530 = vunpack.c.l.b16 %v2443
    %v2531 = vunpack.c.h.b16 %v2443
    %v2532 = vunpack.c.l.b16 %v2444
    %v2533 = vunpack.c.h.b16 %v2444
    %v2534 = vunpack.c.l.b16 %v2445
    %v2535 = vunpack.c.h.b16 %v2445
    %v2536 = vunpack.c.l.b16 %v2446
    %v2537 = vunpack.c.h.b16 %v2446
    %v2538 = vunpack.c.l.b16 %v2447
    %v2539 = vunpack.c.h.b16 %v2447
    %v2540 = vunpack.c.l.b16 %v2448
    %v2541 = vunpack.c.h.b16 %v2448
    %v2542 = vunpack.c.l.b16 %v2449
    %v2543 = vunpack.c.h.b16 %v2449
    %v2544 = vunpack.c.l.b16 %v2450
    %v2545 = vunpack.c.h.b16 %v2450
    %v2546 = vunpack.c.l.b16 %v2451
    %v2547 = vunpack.c.h.b16 %v2451
    %v2548 = vpack.c.b16 %v2486, %v2484
    %v2549 = vpack.c.b16 %v2487, %v2485
    %v2550 = vpack.c.b16 %v2490, %v2488
    %v2551 = vpack.c.b16 %v2491, %v2489
    %v2552 = vpack.c.b16 %v2494, %v2492
    %v2553 = vpack.c.b16 %v2495, %v2493
    %v2554 = vpack.c.b16 %v2498, %v2496
    %v2555 = vpack.c.b16 %v2499, %v2497
    %v2556 = vpack.c.b16 %v2502, %v2500
    %v2557 = vpack.c.b16 %v2503, %v2501
    %v2558 = vpack.c.b16 %v2506, %v2504
    %v2559 = vpack.c.b16 %v2507, %v2505
    %v2560 = vpack.c.b16 %v2510, %v2508
    %v2561 = vpack.c.b16 %v2511, %v2509
    %v2562 = vpack.c.b16 %v2514, %v2512
    %v2563 = vpack.c.b16 %v2515, %v2513
    %v2564 = vpack.c.b16 %v2518, %v2516
    %v2565 = vpack.c.b16 %v2519, %v2517
    %v2566 = vpack.c.b16 %v2522, %v2520
    %v2567 = vpack.c.b16 %v2523, %v2521
    %v2568 = vpack.c.b16 %v2526, %v2524
    %v2569 = vpack.c.b16 %v2527, %v2525
    %v2570 = vpack.c.b16 %v2530, %v2528
    %v2571 = vpack.c.b16 %v2531, %v2529
    %v2572 = vpack.c.b16 %v2534, %v2532
    %v2573 = vpack.c.b16 %v2535, %v2533
    %v2574 = vpack.c.b16 %v2538, %v2536
    %v2575 = vpack.c.b16 %v2539, %v2537
    %v2576 = vpack.c.b16 %v2542, %v2540
    %v2577 = vpack.c.b16 %v2543, %v2541
    %v2578 = vpack.c.b16 %v2546, %v2544
    %v2579 = vpack.c.b16 %v2547, %v2545
    %2612 = vmatpush.bf16.msra.mxu0 %v2562
    %2613 = vmatpush.bf16.msra.mxu0 %v2560
    %2614 = vmatpush.bf16.msra.mxu0 %v2558
    %2615 = vmatpush.bf16.msra.mxu0 %v2556
    %2616 = vmatpush.bf16.msra.mxu0 %v2554
    %2617 = vmatpush.bf16.msra.mxu0 %v2552
    %2618 = vmatpush.bf16.msra.mxu0 %v2550
    %2619 = vmatpush.bf16.msra.mxu0 %v2548
    %2620 = vmatmul.bf16.gmra.mxu0 %v2417
    %v2621 = vpop.f32.mrf.mxu0
    %v2622 = vadd.f32 0.0, %v2621
    %v2623 = vpop.f32.mrf.mxu0
    %v2624 = vadd.f32 0.0, %v2623
    %2625 = vdwg.mxu0
    %2626 = vmatpush.bf16.msra.mxu0 %v2578
    %2627 = vmatpush.bf16.msra.mxu0 %v2576
    %2628 = vmatpush.bf16.msra.mxu0 %v2574
    %2629 = vmatpush.bf16.msra.mxu0 %v2572
    %2630 = vmatpush.bf16.msra.mxu0 %v2570
    %2631 = vmatpush.bf16.msra.mxu0 %v2568
    %2632 = vmatpush.bf16.msra.mxu0 %v2566
    %2633 = vmatpush.bf16.msra.mxu0 %v2564
    %2634 = vmatmul.bf16.gmra.mxu0 %v2418
    %v2635 = vpop.f32.mrf.mxu0
    %v2636 = vadd.f32 %v2622, %v2635
    %v2637 = vpop.f32.mrf.mxu0
    %v2638 = vadd.f32 %v2624, %v2637
    %2639 = vdwg.mxu0
    %2640 = vmatpush.bf16.msra.mxu0 %v2563
    %2641 = vmatpush.bf16.msra.mxu0 %v2561
    %2642 = vmatpush.bf16.msra.mxu0 %v2559
    %2643 = vmatpush.bf16.msra.mxu0 %v2557
    %2644 = vmatpush.bf16.msra.mxu0 %v2555
    %2645 = vmatpush.bf16.msra.mxu0 %v2553
    %2646 = vmatpush.bf16.msra.mxu0 %v2551
    %2647 = vmatpush.bf16.msra.mxu0 %v2549
    %2648 = vmatmul.bf16.gmra.mxu0 %v2417
    %v2649 = vpop.f32.mrf.mxu0
    %v2650 = vadd.f32 0.0, %v2649
    %v2651 = vpop.f32.mrf.mxu0
    %v2652 = vadd.f32 0.0, %v2651
    %2653 = vdwg.mxu0
    %2654 = vmatpush.bf16.msra.mxu0 %v2579
    %2655 = vmatpush.bf16.msra.mxu0 %v2577
    %2656 = vmatpush.bf16.msra.mxu0 %v2575
    %2657 = vmatpush.bf16.msra.mxu0 %v2573
    %2658 = vmatpush.bf16.msra.mxu0 %v2571
    %2659 = vmatpush.bf16.msra.mxu0 %v2569
    %2660 = vmatpush.bf16.msra.mxu0 %v2567
    %2661 = vmatpush.bf16.msra.mxu0 %v2565
    %2662 = vmatmul.bf16.gmra.mxu0 %v2418
    %v2663 = vpop.f32.mrf.mxu0
    %v2664 = vadd.f32 %v2650, %v2663
    %v2665 = vpop.f32.mrf.mxu0
    %v2666 = vadd.f32 %v2652, %v2665
    %2667 = vdwg.mxu0
    %v2668 = vmul.f32 %v1271, %v2636
    %v2669 = vmul.f32 %v1271, %v2664
    %v2670 = vmul.f32 %v1281, %v2638
    %v2671 = vmul.f32 %v1281, %v2666
    %v2672 = vperm.slane %v18, 3
    %v2673 = vperm.slane %v19, 3
    %2674 = vmatpush.msra.mxu0 0.0
    %2675 = vmatpush.msra.mxu0 0.0
    %2676 = vmatpush.msra.mxu0 0.0
    %2677 = vmatpush.msra.mxu0 0.0
    %2678 = vmatpush.msra.mxu0 0.0
    %2679 = vmatpush.msra.mxu0 0.0
    %2680 = vmatpush.msra.mxu0 0.0
    %2681 = vmatpush.msra.mxu0 0.0
    %2682 = vmatpush.msra.mxu0 0.0
    %2683 = vmatpush.msra.mxu0 0.0
    %2684 = vmatpush.msra.mxu0 0.0
    %2685 = vmatpush.msra.mxu0 0.0
    %2686 = vmatpush.msra.mxu0 0.0
    %2687 = vmatpush.msra.mxu0 0.0
    %2688 = vmatpush.msra.mxu0 %v2670
    %2689 = vmatpush.msra.mxu0 %v2668
    %2690 = vmatmul.f32.gmra.mxu0 %v1541
    %v2691 = vpop.f32.mrf.mxu0
    %v2692 = vadd.f32 %v2672, %v2691
    %2693 = vmatmul.f32.gmra.mxu0 %v1544
    %v2694 = vpop.f32.mrf.mxu0
    %v2695 = vadd.f32 %v2672, %v2694
    %2696 = vdwg.mxu0
    %2697 = vmatpush.msra.mxu0 0.0
    %2698 = vmatpush.msra.mxu0 0.0
    %2699 = vmatpush.msra.mxu0 0.0
    %2700 = vmatpush.msra.mxu0 0.0
    %2701 = vmatpush.msra.mxu0 0.0
    %2702 = vmatpush.msra.mxu0 0.0
    %2703 = vmatpush.msra.mxu0 0.0
    %2704 = vmatpush.msra.mxu0 0.0
    %2705 = vmatpush.msra.mxu0 0.0
    %2706 = vmatpush.msra.mxu0 0.0
    %2707 = vmatpush.msra.mxu0 0.0
    %2708 = vmatpush.msra.mxu0 0.0
    %2709 = vmatpush.msra.mxu0 0.0
    %2710 = vmatpush.msra.mxu0 0.0
    %2711 = vmatpush.msra.mxu0 %v2671
    %2712 = vmatpush.msra.mxu0 %v2669
    %2713 = vmatmul.f32.gmra.mxu0 %v1541
    %v2714 = vpop.f32.mrf.mxu0
    %v2715 = vadd.f32 %v2673, %v2714
    %2716 = vmatmul.f32.gmra.mxu0 %v1544
    %v2717 = vpop.f32.mrf.mxu0
    %v2718 = vadd.f32 %v2673, %v2717
    %2719 = vdwg.mxu0
    %v2720 = vpack.c.bf16 %v2695, %v2692
    %v2721 = vpack.c.bf16 %v2718, %v2715
    %s2722 = scalar_lea.vmem %s3, 1280
    %v2723 = vld [vmem:[%s2722] sm:$0xff]
    %v2724 = vld [vmem:[%s2722 + $0x8] sm:$0xff]
    %v2725 = vld [vmem:[%s2722 + $0x10] sm:$0xff]
    %v2726 = vld [vmem:[%s2722 + $0x18] sm:$0xff]
    %v2727 = vld [vmem:[%s2722 + $0x20] sm:$0xff]
    %v2728 = vld [vmem:[%s2722 + $0x28] sm:$0xff]
    %v2729 = vld [vmem:[%s2722 + $0x30] sm:$0xff]
    %v2730 = vld [vmem:[%s2722 + $0x38] sm:$0xff]
    %v2731 = vld [vmem:[%s2722 + $0x40] sm:$0xff]
    %v2732 = vld [vmem:[%s2722 + $0x48] sm:$0xff]
    %v2733 = vld [vmem:[%s2722 + $0x50] sm:$0xff]
    %v2734 = vld [vmem:[%s2722 + $0x58] sm:$0xff]
    %v2735 = vld [vmem:[%s2722 + $0x60] sm:$0xff]
    %v2736 = vld [vmem:[%s2722 + $0x68] sm:$0xff]
    %v2737 = vld [vmem:[%s2722 + $0x70] sm:$0xff]
    %v2738 = vld [vmem:[%s2722 + $0x78] sm:$0xff]
    %v2739 = vld [vmem:[%s2722 + $0x80] sm:$0xff]
    %v2740 = vld [vmem:[%s2722 + $0x88] sm:$0xff]
    %v2741 = vld [vmem:[%s2722 + $0x90] sm:$0xff]
    %v2742 = vld [vmem:[%s2722 + $0x98] sm:$0xff]
    %v2743 = vld [vmem:[%s2722 + $0xa0] sm:$0xff]
    %v2744 = vld [vmem:[%s2722 + $0xa8] sm:$0xff]
    %v2745 = vld [vmem:[%s2722 + $0xb0] sm:$0xff]
    %v2746 = vld [vmem:[%s2722 + $0xb8] sm:$0xff]
    %v2747 = vld [vmem:[%s2722 + $0xc0] sm:$0xff]
    %v2748 = vld [vmem:[%s2722 + $0xc8] sm:$0xff]
    %v2749 = vld [vmem:[%s2722 + $0xd0] sm:$0xff]
    %v2750 = vld [vmem:[%s2722 + $0xd8] sm:$0xff]
    %v2751 = vld [vmem:[%s2722 + $0xe0] sm:$0xff]
    %v2752 = vld [vmem:[%s2722 + $0xe8] sm:$0xff]
    %v2753 = vld [vmem:[%s2722 + $0xf0] sm:$0xff]
    %v2754 = vld [vmem:[%s2722 + $0xf8] sm:$0xff]
    %v2755 = vperm.slane %v18, 6
    %v2756 = vperm.slane %v19, 6
    %v2789 = vunpack.c.l.b16 %v2723
    %v2790 = vunpack.c.h.b16 %v2723
    %v2791 = vunpack.c.l.b16 %v2724
    %v2792 = vunpack.c.h.b16 %v2724
    %v2793 = vunpack.c.l.b16 %v2725
    %v2794 = vunpack.c.h.b16 %v2725
    %v2795 = vunpack.c.l.b16 %v2726
    %v2796 = vunpack.c.h.b16 %v2726
    %v2797 = vunpack.c.l.b16 %v2727
    %v2798 = vunpack.c.h.b16 %v2727
    %v2799 = vunpack.c.l.b16 %v2728
    %v2800 = vunpack.c.h.b16 %v2728
    %v2801 = vunpack.c.l.b16 %v2729
    %v2802 = vunpack.c.h.b16 %v2729
    %v2803 = vunpack.c.l.b16 %v2730
    %v2804 = vunpack.c.h.b16 %v2730
    %v2805 = vunpack.c.l.b16 %v2731
    %v2806 = vunpack.c.h.b16 %v2731
    %v2807 = vunpack.c.l.b16 %v2732
    %v2808 = vunpack.c.h.b16 %v2732
    %v2809 = vunpack.c.l.b16 %v2733
    %v2810 = vunpack.c.h.b16 %v2733
    %v2811 = vunpack.c.l.b16 %v2734
    %v2812 = vunpack.c.h.b16 %v2734
    %v2813 = vunpack.c.l.b16 %v2735
    %v2814 = vunpack.c.h.b16 %v2735
    %v2815 = vunpack.c.l.b16 %v2736
    %v2816 = vunpack.c.h.b16 %v2736
    %v2817 = vunpack.c.l.b16 %v2737
    %v2818 = vunpack.c.h.b16 %v2737
    %v2819 = vunpack.c.l.b16 %v2738
    %v2820 = vunpack.c.h.b16 %v2738
    %v2821 = vunpack.c.l.b16 %v2739
    %v2822 = vunpack.c.h.b16 %v2739
    %v2823 = vunpack.c.l.b16 %v2740
    %v2824 = vunpack.c.h.b16 %v2740
    %v2825 = vunpack.c.l.b16 %v2741
    %v2826 = vunpack.c.h.b16 %v2741
    %v2827 = vunpack.c.l.b16 %v2742
    %v2828 = vunpack.c.h.b16 %v2742
    %v2829 = vunpack.c.l.b16 %v2743
    %v2830 = vunpack.c.h.b16 %v2743
    %v2831 = vunpack.c.l.b16 %v2744
    %v2832 = vunpack.c.h.b16 %v2744
    %v2833 = vunpack.c.l.b16 %v2745
    %v2834 = vunpack.c.h.b16 %v2745
    %v2835 = vunpack.c.l.b16 %v2746
    %v2836 = vunpack.c.h.b16 %v2746
    %v2837 = vunpack.c.l.b16 %v2747
    %v2838 = vunpack.c.h.b16 %v2747
    %v2839 = vunpack.c.l.b16 %v2748
    %v2840 = vunpack.c.h.b16 %v2748
    %v2841 = vunpack.c.l.b16 %v2749
    %v2842 = vunpack.c.h.b16 %v2749
    %v2843 = vunpack.c.l.b16 %v2750
    %v2844 = vunpack.c.h.b16 %v2750
    %v2845 = vunpack.c.l.b16 %v2751
    %v2846 = vunpack.c.h.b16 %v2751
    %v2847 = vunpack.c.l.b16 %v2752
    %v2848 = vunpack.c.h.b16 %v2752
    %v2849 = vunpack.c.l.b16 %v2753
    %v2850 = vunpack.c.h.b16 %v2753
    %v2851 = vunpack.c.l.b16 %v2754
    %v2852 = vunpack.c.h.b16 %v2754
    %v2853 = vpack.c.b16 %v2791, %v2789
    %v2854 = vpack.c.b16 %v2792, %v2790
    %v2855 = vpack.c.b16 %v2795, %v2793
    %v2856 = vpack.c.b16 %v2796, %v2794
    %v2857 = vpack.c.b16 %v2799, %v2797
    %v2858 = vpack.c.b16 %v2800, %v2798
    %v2859 = vpack.c.b16 %v2803, %v2801
    %v2860 = vpack.c.b16 %v2804, %v2802
    %v2861 = vpack.c.b16 %v2807, %v2805
    %v2862 = vpack.c.b16 %v2808, %v2806
    %v2863 = vpack.c.b16 %v2811, %v2809
    %v2864 = vpack.c.b16 %v2812, %v2810
    %v2865 = vpack.c.b16 %v2815, %v2813
    %v2866 = vpack.c.b16 %v2816, %v2814
    %v2867 = vpack.c.b16 %v2819, %v2817
    %v2868 = vpack.c.b16 %v2820, %v2818
    %v2869 = vpack.c.b16 %v2823, %v2821
    %v2870 = vpack.c.b16 %v2824, %v2822
    %v2871 = vpack.c.b16 %v2827, %v2825
    %v2872 = vpack.c.b16 %v2828, %v2826
    %v2873 = vpack.c.b16 %v2831, %v2829
    %v2874 = vpack.c.b16 %v2832, %v2830
    %v2875 = vpack.c.b16 %v2835, %v2833
    %v2876 = vpack.c.b16 %v2836, %v2834
    %v2877 = vpack.c.b16 %v2839, %v2837
    %v2878 = vpack.c.b16 %v2840, %v2838
    %v2879 = vpack.c.b16 %v2843, %v2841
    %v2880 = vpack.c.b16 %v2844, %v2842
    %v2881 = vpack.c.b16 %v2847, %v2845
    %v2882 = vpack.c.b16 %v2848, %v2846
    %v2883 = vpack.c.b16 %v2851, %v2849
    %v2884 = vpack.c.b16 %v2852, %v2850
    %2917 = vmatpush.bf16.msra.mxu0 %v2867
    %2918 = vmatpush.bf16.msra.mxu0 %v2865
    %2919 = vmatpush.bf16.msra.mxu0 %v2863
    %2920 = vmatpush.bf16.msra.mxu0 %v2861
    %2921 = vmatpush.bf16.msra.mxu0 %v2859
    %2922 = vmatpush.bf16.msra.mxu0 %v2857
    %2923 = vmatpush.bf16.msra.mxu0 %v2855
    %2924 = vmatpush.bf16.msra.mxu0 %v2853
    %2925 = vmatmul.bf16.gmra.mxu0 %v2720
    %v2926 = vpop.f32.mrf.mxu0
    %v2927 = vadd.f32 %v2755, %v2926
    %v2928 = vpop.f32.mrf.mxu0
    %v2929 = vadd.f32 %v2755, %v2928
    %2930 = vdwg.mxu0
    %2931 = vmatpush.bf16.msra.mxu0 %v2883
    %2932 = vmatpush.bf16.msra.mxu0 %v2881
    %2933 = vmatpush.bf16.msra.mxu0 %v2879
    %2934 = vmatpush.bf16.msra.mxu0 %v2877
    %2935 = vmatpush.bf16.msra.mxu0 %v2875
    %2936 = vmatpush.bf16.msra.mxu0 %v2873
    %2937 = vmatpush.bf16.msra.mxu0 %v2871
    %2938 = vmatpush.bf16.msra.mxu0 %v2869
    %2939 = vmatmul.bf16.gmra.mxu0 %v2721
    %v2940 = vpop.f32.mrf.mxu0
    %v2941 = vadd.f32 %v2927, %v2940
    %v2942 = vpop.f32.mrf.mxu0
    %v2943 = vadd.f32 %v2929, %v2942
    %2944 = vdwg.mxu0
    %2945 = vmatpush.bf16.msra.mxu0 %v2868
    %2946 = vmatpush.bf16.msra.mxu0 %v2866
    %2947 = vmatpush.bf16.msra.mxu0 %v2864
    %2948 = vmatpush.bf16.msra.mxu0 %v2862
    %2949 = vmatpush.bf16.msra.mxu0 %v2860
    %2950 = vmatpush.bf16.msra.mxu0 %v2858
    %2951 = vmatpush.bf16.msra.mxu0 %v2856
    %2952 = vmatpush.bf16.msra.mxu0 %v2854
    %2953 = vmatmul.bf16.gmra.mxu0 %v2720
    %v2954 = vpop.f32.mrf.mxu0
    %v2955 = vadd.f32 %v2756, %v2954
    %v2956 = vpop.f32.mrf.mxu0
    %v2957 = vadd.f32 %v2756, %v2956
    %2958 = vdwg.mxu0
    %2959 = vmatpush.bf16.msra.mxu0 %v2884
    %2960 = vmatpush.bf16.msra.mxu0 %v2882
    %2961 = vmatpush.bf16.msra.mxu0 %v2880
    %2962 = vmatpush.bf16.msra.mxu0 %v2878
    %2963 = vmatpush.bf16.msra.mxu0 %v2876
    %2964 = vmatpush.bf16.msra.mxu0 %v2874
    %2965 = vmatpush.bf16.msra.mxu0 %v2872
    %2966 = vmatpush.bf16.msra.mxu0 %v2870
    %2967 = vmatmul.bf16.gmra.mxu0 %v2721
    %v2968 = vpop.f32.mrf.mxu0
    %v2969 = vadd.f32 %v2955, %v2968
    %v2970 = vpop.f32.mrf.mxu0
    %v2971 = vadd.f32 %v2957, %v2970
    %2972 = vdwg.mxu0
    %v2973 = vadd.f32 %v2941, %v916
    %v2974 = vadd.f32 %v2969, %v917
    %v2975 = vadd.f32 %v2943, %v918
    %v2976 = vadd.f32 %v2971, %v919
    %v2977 = vmul.f32 %v2973, %v2973
    %v2978 = vmul.f32 %v2974, %v2974
    %v2979 = vmul.f32 %v2975, %v2975
    %v2980 = vmul.f32 %v2976, %v2976
    %v2981 = vadd.f32 %v2977, %v2978
    %2982 = vadd.xlane.f32.xlu0 %v2981
    %v2983 = vpop.xlane.xlu0 %2982
    %v2984 = vadd.f32 %v2979, %v2980
    %2985 = vadd.xlane.f32.xlu0 %v2984
    %v2986 = vpop.xlane.xlu0 %2985
    %v2987 = vmax.f32 %v2983, 1e-24
    %v2988 = vmax.f32 %v2986, 1e-24
    %v2989 = vrsqrt.pop %v2987
    %v2990 = vmul.f32 %v2989, %v2987
    %v2991 = vmul.f32 %v2990, %v2989
    %v2992 = vmul.f32 0.5, %v2991
    %v2993 = vsub.f32 1.5, %v2992
    %v2994 = vmul.f32 %v2989, %v2993
    %vm2995 = vweird.f32 %v2987
    %vm2996 = vweird.f32 %v2989
    %vm2997 = vmor %vm2995, %vm2996
    %v2998 = vsel %vm2997, %v2989, %v2994
    %v2999 = vrsqrt.pop %v2988
    %v3000 = vmul.f32 %v2999, %v2988
    %v3001 = vmul.f32 %v3000, %v2999
    %v3002 = vmul.f32 0.5, %v3001
    %v3003 = vsub.f32 1.5, %v3002
    %v3004 = vmul.f32 %v2999, %v3003
    %vm3005 = vweird.f32 %v2988
    %vm3006 = vweird.f32 %v2999
    %vm3007 = vmor %vm3005, %vm3006
    %v3008 = vsel %vm3007, %v2999, %v3004
    %v3009 = vmul.f32 %v2973, %v2998
    %v3010 = vmul.f32 %v2974, %v2998
    %v3011 = vmul.f32 %v2975, %v3008
    %v3012 = vmul.f32 %v2976, %v3008
    %3013 = vst [vmem:[#allocation2] sm:$0xff] %v3009
    %3014 = vst [vmem:[#allocation2 + $0x8] sm:$0xff] %v3010
    %3015 = vst [vmem:[#allocation2 + $0x10] sm:$0xff] %v3011
    %3016 = vst [vmem:[#allocation2 + $0x18] sm:$0xff] %v3012
    // Predicated region
    $region18: #{pretrained_gcn_knn_forward.1} parent=1 // pred_check
      _
    $region19: #{pretrained_gcn_knn_forward.1} parent=1 // pred_check_branch
      %3018 = sbr.rel (0) target = $region21
    $region20: #{pretrained_gcn_knn_forward.1} parent=1 // pred_region
      %3020 = vsyncadd [#allocation3], 0
      %s3021 = sshll.u32 [#allocation2], 4
      %s3022 = int_to_ptr.vmem [resolvable:$true] %s3021
      %s3023 = sshll.u32 %s4, 4
      %s3024 = int_to_ptr.hbm [resolvable:$true] %s3023
      %3029 = dma.vmem_to_hbm [thread:$0]  %s3022, 512, %s3024, [#allocation3], 256, 256, 16
    $region21: #{pretrained_gcn_knn_forward.1} parent=1 // pred_fallthru
      _
    // Predicated region
    $region22: #{pretrained_gcn_knn_forward.1} parent=1 // pred_check
      _
    $region23: #{pretrained_gcn_knn_forward.1} parent=1 // pred_check_branch
      %3031 = sbr.rel (0) target = $region25
    $region24: #{pretrained_gcn_knn_forward.1} parent=1 // pred_region
      %3033 = dma.done [#allocation3], 512
    $region25: #{pretrained_gcn_knn_forward.1} parent=1 // pred_fallthru
      _
    %3034 = vsyncpa [#allocation3], 1

</llo_original>
